<compile_context>
chip_gen: v7x
topology: tpu7x:2x2x1
jax: 0.10.0
libtpu: 0.0.40
codegen_flags: <defaults>
</compile_context>

<pallas_src>
import functools

import jax
import jax.numpy as jnp
from jax.experimental import pallas as pl
from jax.experimental.pallas import tpu as pltpu


def _wmsa_kernel(x_ref, wqkv_ref, bqkv_ref, wo_ref, bo_ref, bm_ref, o_ref, *,
                 num_heads, head_dim, has_mask):
    """One grid step = a (TBb, TBw) block of windows.

    x_ref   : (TBb, TBw, N, C) f32 activations
    wqkv_ref: (C, 3C)  bf16  (Q columns pre-scaled by head_dim**-0.5)
    bqkv_ref: (1, 3C)  f32
    wo_ref  : (C, C)   bf16
    bo_ref  : (1, C)   f32
    bm_ref  : (TBw, H, N, N) f32 fused rel-pos-bias + mask   (has_mask)
              (H, N, N)      f32 rel-pos-bias only           (otherwise)
    o_ref   : (TBb, TBw, N, C) f32
    """
    tbb, tbw, n, c = x_ref.shape
    w = tbb * tbw          # windows handled this step
    m = w * n              # projection rows
    d = head_dim

    # Fused QKV projection: one MXU matmul, bf16 in / f32 accumulate.
    x2d = x_ref[...].reshape(m, c).astype(jnp.bfloat16)
    qkv = jnp.dot(x2d, wqkv_ref[...], preferred_element_type=jnp.float32)
    qkv = qkv + bqkv_ref[...]                           # (m, 3C) f32

    bm = bm_ref[...]                                    # resident this step

    head_outs = []
    for h in range(num_heads):                          # small static unroll
        qh = qkv[:, h * d:(h + 1) * d].astype(jnp.bfloat16).reshape(w, n, d)
        kh = qkv[:, c + h * d:c + (h + 1) * d].astype(jnp.bfloat16).reshape(w, n, d)
        vh = qkv[:, 2 * c + h * d:2 * c + (h + 1) * d].astype(jnp.bfloat16).reshape(w, n, d)

        # scores (W, N, N) f32; attention scale already folded into Wq.
        s = jnp.einsum("wnd,wmd->wnm", qh, kh, preferred_element_type=jnp.float32)
        if has_mask:
            s = (s.reshape(tbb, tbw, n, n) + bm[:, h][None]).reshape(w, n, n)
        else:
            s = s + bm[h][None]

        # f32 softmax; normalization deferred to the (N, D) head output.
        s = s - jnp.max(s, axis=-1, keepdims=True)
        p = jnp.exp(s)
        l = jnp.sum(p, axis=-1, keepdims=True)          # (W, N, 1)

        oh = jnp.einsum("wnm,wmd->wnd", p.astype(jnp.bfloat16), vh,
                        preferred_element_type=jnp.float32)
        oh = oh * pl.reciprocal(l, approx=True)         # W*N*D mults, EUP divide
        head_outs.append(oh.reshape(m, d))

    # Lane-contiguous head assembly + ONE output projection with K = C.
    o_all = jnp.concatenate(head_outs, axis=-1).astype(jnp.bfloat16)   # (m, C)
    y = jnp.dot(o_all, wo_ref[...], preferred_element_type=jnp.float32)
    y = y + bo_ref[...]
    o_ref[...] = y.reshape(tbb, tbw, n, c).astype(o_ref.dtype)


def _relative_position_bias(table, window_size, num_heads):
    """Gather the (H, N, N) relative-position bias from the (L, H) table (plain-JAX glue)."""
    wh, ww = window_size
    coords = jnp.stack(jnp.meshgrid(jnp.arange(wh), jnp.arange(ww), indexing="ij"))
    coords_flat = coords.reshape(2, -1)                       # (2, N)
    rel = coords_flat[:, :, None] - coords_flat[:, None, :]   # (2, N, N)
    rel = rel.transpose(1, 2, 0)
    rel = rel.at[:, :, 0].add(wh - 1)
    rel = rel.at[:, :, 1].add(ww - 1)
    rel = rel.at[:, :, 0].multiply(2 * ww - 1)
    idx = rel.sum(-1)                                         # (N, N)
    bias = table[idx.reshape(-1)].reshape(wh * ww, wh * ww, num_heads)
    return bias.transpose(2, 0, 1).astype(jnp.float32)        # (H, N, N)


def _divisors(n):
    return [d for d in range(1, n + 1) if n % d == 0]


def _choose_tiles(B, nW, N, row_target, min_steps):
    """Pick (tbb, tbw): maximize m = tbb*tbw*N under `row_target` rows while
    keeping >= `min_steps` grid steps (pipelining + megacore sharding)."""
    best_key, best = None, (1, 1)
    for tbw in _divisors(nW):
        for tbb in _divisors(B):
            m = tbb * tbw * N
            steps = (B // tbb) * (nW // tbw)
            key = (m <= row_target, steps >= min_steps,
                   m if m <= row_target else -m, tbw)
            if best_key is None or key > best_key:
                best_key, best = key, (tbb, tbw)
    return best


def window_attention(x, params, *, window_size, num_heads, nW, mask=None,
                     row_target=1024, min_steps=4):
    """Pallas forward.  x: (B_, N, C);  mask: (nW, N, N) additive or None."""
    B_, N, C = x.shape
    wh, ww = window_size
    assert N == wh * ww, "ind_gx (global-token) path not implemented in the Pallas kernel"
    assert B_ % nW == 0
    B = B_ // nW
    H = num_heads
    D = C // H
    scale = D ** (-0.5)

    # Fused QKV weights (attention scale folded into Q), bf16 MXU operands.
    wqkv = jnp.concatenate([params["wq"] * scale, params["wk"], params["wv"]],
                           axis=1).astype(jnp.bfloat16)            # (C, 3C)
    bqkv = jnp.concatenate([params["bq"] * scale, params["bk"], params["bv"]],
                           axis=1).astype(jnp.float32)             # (1, 3C)
    wo = params["wo"].astype(jnp.bfloat16)                         # (C, C)
    bo = params["bo"].astype(jnp.float32)                          # (1, C)
    bias = _relative_position_bias(params["rpb_table"], window_size, num_heads)

    tbb, tbw = _choose_tiles(B, nW, N, row_target, min_steps)
    grid = (B // tbb, nW // tbw)
    x4 = x.reshape(B, nW, N, C)

    has_mask = mask is not None
    if has_mask:
        # Fuse bias + mask once in the wrapper: (nW, H, N, N); indexed only by
        # the nW grid coordinate, so it is resident per window block.
        bm = bias[None] + mask[:, None].astype(jnp.float32)
        bm_spec = pl.BlockSpec((tbw, H, N, N), lambda i, j: (j, 0, 0, 0))
    else:
        bm = bias                                                  # (H, N, N)
        bm_spec = pl.BlockSpec((H, N, N), lambda i, j: (0, 0, 0))

    kernel = functools.partial(_wmsa_kernel, num_heads=H, head_dim=D,
                               has_mask=has_mask)

    out = pl.pallas_call(
        kernel,
        out_shape=jax.ShapeDtypeStruct((B, nW, N, C), x.dtype),
        grid=grid,
        in_specs=[
            pl.BlockSpec((tbb, tbw, N, C), lambda i, j: (i, j, 0, 0)),   # x block
            pl.BlockSpec((C, 3 * C), lambda i, j: (0, 0)),               # fused Wqkv (bf16)
            pl.BlockSpec((1, 3 * C), lambda i, j: (0, 0)),               # fused bqkv
            pl.BlockSpec((C, C), lambda i, j: (0, 0)),                   # Wo (bf16)
            pl.BlockSpec((1, C), lambda i, j: (0, 0)),                   # bo
            bm_spec,                                                     # bias(+mask)
        ],
        out_specs=pl.BlockSpec((tbb, tbw, N, C), lambda i, j: (i, j, 0, 0)),
        compiler_params=pltpu.CompilerParams(
            dimension_semantics=("parallel", "parallel"),
            # Safe under v7x's 64 MiB/TC physical VMEM; generous for the small
            # f32 row_target used here.  Raise together with row_target on
            # v5e/v6e (128 MiB VMEM) for larger blocks.
            vmem_limit_bytes=48 * 1024 * 1024,
        ),
    )(x4, wqkv, bqkv, wo, bo, bm)
    return out.reshape(B_, N, C)


def reference_forward(x, params, *, window_size, num_heads, nW, mask=None):
    """Pure-JAX f32 reference (mirrors the PyTorch forward for N == Wh*Ww)."""
    B_, N, C = x.shape
    H, D = num_heads, C // num_heads
    scale = D ** (-0.5)
    q = (x @ params["wq"] + params["bq"]).reshape(B_, N, H, D).transpose(0, 2, 1, 3)
    k = (x @ params["wk"] + params["bk"]).reshape(B_, N, H, D).transpose(0, 2, 1, 3)
    v = (x @ params["wv"] + params["bv"]).reshape(B_, N, H, D).transpose(0, 2, 1, 3)
    attn = jnp.einsum("bhnd,bhmd->bhnm", q, k) * scale
    attn = attn + _relative_position_bias(params["rpb_table"], window_size, num_heads)[None]
    if mask is not None:
        attn = attn.reshape(B_ // nW, nW, H, N, N) + mask[None, :, None]
        attn = attn.reshape(B_, H, N, N)
    attn = jax.nn.softmax(attn, axis=-1)
    out = jnp.einsum("bhnm,bhmd->bhnd", attn, v).transpose(0, 2, 1, 3).reshape(B_, N, C)
    return out @ params["wo"] + params["bo"]


if __name__ == "__main__":
    # Small, module-consistent shapes (scaled-down embed_dim / window vs. the
    # 512-dim, (12,12)-window defaults; lane-friendly C=128, head_dim=32).
    embed_dim = 128
    window_size = (8, 8)
    num_heads = 4
    nW = 4
    B = 2
    N = window_size[0] * window_size[1]
    B_ = B * nW

    key = jax.random.PRNGKey(0)
    k_x, k_tab, k_q, k_k, k_v, k_o, k_m = jax.random.split(key, 7)

    def linear_params(k, d):
        kw, kb = jax.random.split(k)
        bound = 1.0 / (d ** 0.5)
        w = jax.random.uniform(kw, (d, d), jnp.float32, -bound, bound)   # stored as (in, out)
        b = jax.random.uniform(kb, (1, d), jnp.float32, -bound, bound)
        return w, b

    wq, bq = linear_params(k_q, embed_dim)
    wk, bk = linear_params(k_k, embed_dim)
    wv, bv = linear_params(k_v, embed_dim)
    wo, bo = linear_params(k_o, embed_dim)
    n_rel = (2 * window_size[0] - 1) * (2 * window_size[1] - 1)
    rpb_table = 0.02 * jax.random.truncated_normal(
        k_tab, -2.0, 2.0, (n_rel, num_heads), jnp.float32)

    params = dict(wq=wq, bq=bq, wk=wk, bk=bk, wv=wv, bv=bv, wo=wo, bo=bo,
                  rpb_table=rpb_table)

    x = jax.random.normal(k_x, (B_, N, embed_dim), jnp.float32)
    # Shifted-window-style additive mask: 0 where allowed, large negative elsewhere.
    mask = jnp.where(jax.random.uniform(k_m, (nW, N, N)) > 0.85, -100.0, 0.0
                     ).astype(jnp.float32)

    # Maskless variant (bias-only resident add).
    out0 = jax.block_until_ready(
        window_attention(x, params, window_size=window_size,
                         num_heads=num_heads, nW=nW, mask=None))
    ref0 = reference_forward(x, params, window_size=window_size,
                             num_heads=num_heads, nW=nW, mask=None)

    # Masked variant (fused bias+mask indexed purely by the nW grid coordinate).
    out1 = jax.block_until_ready(
        window_attention(x, params, window_size=window_size,
                         num_heads=num_heads, nW=nW, mask=mask))
    ref1 = reference_forward(x, params, window_size=window_size,
                             num_heads=num_heads, nW=nW, mask=mask)

    # bf16 MXU feeds -> looser tolerance than a pure-f32 kernel.
    for o, r in ((out0, ref0), (out1, ref1)):
        assert o.shape == (B_, N, embed_dim)
        max_err = float(jnp.max(jnp.abs(o - r)))
        assert jnp.allclose(o, r, atol=2e-2, rtol=2e-2), f"max_err={max_err}"
    print("KERNEL_OK")
</pallas_src>

<mosaic_0001>
module attributes {stable_mosaic.version = 11 : i64} {
  func.func @_wmsa_kernel(%arg0: i32, %arg1: i32, %arg2: memref<1x2x64x128xf32, #tpu.memory_space<vmem>>, %arg3: memref<128x384xbf16, #tpu.memory_space<vmem>>, %arg4: memref<1x384xf32, #tpu.memory_space<vmem>>, %arg5: memref<128x128xbf16, #tpu.memory_space<vmem>>, %arg6: memref<1x128xf32, #tpu.memory_space<vmem>>, %arg7: memref<4x64x64xf32, #tpu.memory_space<vmem>>, %arg8: memref<1x2x64x128xf32, #tpu.memory_space<vmem>>) attributes {dimension_semantics = [#tpu.dimension_semantics<parallel>, #tpu.dimension_semantics<parallel>], iteration_bounds = array<i64: 2, 2>, scalar_prefetch = 0 : i64, scratch_operands = 0 : i64, tpu.core_type = #tpu.core_type<tc>, window_params = [{transform_indices = @transform_0, window_bounds = array<i64: 1, 2, 64, 128>}, {pipeline_mode = #tpu.pipeline_mode<synchronous>, transform_indices = @transform_1, window_bounds = array<i64: 128, 384>}, {pipeline_mode = #tpu.pipeline_mode<synchronous>, transform_indices = @transform_2, window_bounds = array<i64: 1, 384>}, {pipeline_mode = #tpu.pipeline_mode<synchronous>, transform_indices = @transform_3, window_bounds = array<i64: 128, 128>}, {pipeline_mode = #tpu.pipeline_mode<synchronous>, transform_indices = @transform_4, window_bounds = array<i64: 1, 128>}, {pipeline_mode = #tpu.pipeline_mode<synchronous>, transform_indices = @transform_5, window_bounds = array<i64: 4, 64, 64>}, {transform_indices = @transform_6, window_bounds = array<i64: 1, 2, 64, 128>}]} {
    %c0 = arith.constant 0 : index
    %c0_0 = arith.constant 0 : index
    %c0_1 = arith.constant 0 : index
    %c0_2 = arith.constant 0 : index
    %0 = vector.load %arg2[%c0, %c0_0, %c0_1, %c0_2] : memref<1x2x64x128xf32, #tpu.memory_space<vmem>>, vector<1x2x64x128xf32>
    %1 = vector.shape_cast %0 : vector<1x2x64x128xf32> to vector<128x128xf32>
    %2 = arith.truncf %1 : vector<128x128xf32> to vector<128x128xbf16>
    %c0_3 = arith.constant 0 : index
    %c0_4 = arith.constant 0 : index
    %3 = vector.load %arg3[%c0_3, %c0_4] : memref<128x384xbf16, #tpu.memory_space<vmem>>, vector<128x384xbf16>
    %cst = arith.constant dense<0.000000e+00> : vector<128x384xf32>
    %4 = tpu.matmul %2, %3, %cst {dimension_numbers = #tpu.dot_dimension_numbers<[1], [0], [0], [1], [0, 0, 1, 1], [], []>} : vector<128x128xbf16>, vector<128x384xbf16>, vector<128x384xf32> -> vector<128x384xf32>
    %c0_5 = arith.constant 0 : index
    %c0_6 = arith.constant 0 : index
    %5 = vector.load %arg4[%c0_5, %c0_6] : memref<1x384xf32, #tpu.memory_space<vmem>>, vector<1x384xf32>
    %6 = vector.broadcast %5 : vector<1x384xf32> to vector<128x384xf32>
    %7 = arith.addf %4, %6 : vector<128x384xf32>
    %c0_7 = arith.constant 0 : index
    %c0_8 = arith.constant 0 : index
    %c0_9 = arith.constant 0 : index
    %8 = vector.load %arg7[%c0_7, %c0_8, %c0_9] : memref<4x64x64xf32, #tpu.memory_space<vmem>>, vector<4x64x64xf32>
    %9 = vector.extract_strided_slice %7 {offsets = [0, 0], sizes = [128, 32], strides = [1, 1]} : vector<128x384xf32> to vector<128x32xf32>
    %10 = arith.truncf %9 : vector<128x32xf32> to vector<128x32xbf16>
    %11 = vector.shape_cast %10 : vector<128x32xbf16> to vector<2x64x32xbf16>
    %12 = vector.extract_strided_slice %7 {offsets = [0, 128], sizes = [128, 32], strides = [1, 1]} : vector<128x384xf32> to vector<128x32xf32>
    %13 = arith.truncf %12 : vector<128x32xf32> to vector<128x32xbf16>
    %14 = vector.shape_cast %13 : vector<128x32xbf16> to vector<2x64x32xbf16>
    %15 = vector.extract_strided_slice %7 {offsets = [0, 256], sizes = [128, 32], strides = [1, 1]} : vector<128x384xf32> to vector<128x32xf32>
    %16 = arith.truncf %15 : vector<128x32xf32> to vector<128x32xbf16>
    %17 = vector.shape_cast %16 : vector<128x32xbf16> to vector<2x64x32xbf16>
    "tpu.trace_start"() <{level = 10 : i32, message = "wnd,wmd->wnm"}> : () -> ()
    %cst_10 = arith.constant dense<0.000000e+00> : vector<2x64x64xf32>
    %18 = tpu.matmul %11, %14, %cst_10 {dimension_numbers = #tpu.dot_dimension_numbers<[2], [2], [1], [1], [0, 0, 0, 1, 1, 1], [0], [0]>} : vector<2x64x32xbf16>, vector<2x64x32xbf16>, vector<2x64x64xf32> -> vector<2x64x64xf32>
    "tpu.trace_stop"() : () -> ()
    %19 = vector.extract_strided_slice %8 {offsets = [0, 0, 0], sizes = [1, 64, 64], strides = [1, 1, 1]} : vector<4x64x64xf32> to vector<1x64x64xf32>
    %20 = vector.shape_cast %19 : vector<1x64x64xf32> to vector<64x64xf32>
    %21 = vector.shape_cast %20 : vector<64x64xf32> to vector<1x64x64xf32>
    %22 = vector.broadcast %21 : vector<1x64x64xf32> to vector<2x64x64xf32>
    %23 = arith.addf %18, %22 : vector<2x64x64xf32>
    %cst_11 = arith.constant dense<0xFF800000> : vector<2x64xf32>
    %24 = vector.multi_reduction <maximumf>, %23, %cst_11 [2] : vector<2x64x64xf32> to vector<2x64xf32>
    %25 = vector.shape_cast %24 : vector<2x64xf32> to vector<2x64x1xf32>
    %26 = vector.broadcast %25 : vector<2x64x1xf32> to vector<2x64x64xf32>
    %27 = arith.subf %23, %26 : vector<2x64x64xf32>
    %28 = math.exp %27 : vector<2x64x64xf32>
    %cst_12 = arith.constant dense<0.000000e+00> : vector<2x64xf32>
    %29 = vector.multi_reduction <add>, %28, %cst_12 [2] : vector<2x64x64xf32> to vector<2x64xf32>
    %30 = vector.shape_cast %29 : vector<2x64xf32> to vector<2x64x1xf32>
    %31 = arith.truncf %28 : vector<2x64x64xf32> to vector<2x64x64xbf16>
    "tpu.trace_start"() <{level = 10 : i32, message = "wnm,wmd->wnd"}> : () -> ()
    %cst_13 = arith.constant dense<0.000000e+00> : vector<2x64x32xf32>
    %32 = tpu.matmul %31, %17, %cst_13 {dimension_numbers = #tpu.dot_dimension_numbers<[2], [1], [1], [2], [0, 0, 0, 1, 1, 2], [0], [0]>} : vector<2x64x64xbf16>, vector<2x64x32xbf16>, vector<2x64x32xf32> -> vector<2x64x32xf32>
    "tpu.trace_stop"() : () -> ()
    %33 = tpu.reciprocal %30 {approx = true} : vector<2x64x1xf32> -> vector<2x64x1xf32>
    %34 = vector.broadcast %33 : vector<2x64x1xf32> to vector<2x64x32xf32>
    %35 = arith.mulf %32, %34 : vector<2x64x32xf32>
    %36 = vector.shape_cast %35 : vector<2x64x32xf32> to vector<128x32xf32>
    %37 = vector.extract_strided_slice %7 {offsets = [0, 32], sizes = [128, 32], strides = [1, 1]} : vector<128x384xf32> to vector<128x32xf32>
    %38 = arith.truncf %37 : vector<128x32xf32> to vector<128x32xbf16>
    %39 = vector.shape_cast %38 : vector<128x32xbf16> to vector<2x64x32xbf16>
    %40 = vector.extract_strided_slice %7 {offsets = [0, 160], sizes = [128, 32], strides = [1, 1]} : vector<128x384xf32> to vector<128x32xf32>
    %41 = arith.truncf %40 : vector<128x32xf32> to vector<128x32xbf16>
    %42 = vector.shape_cast %41 : vector<128x32xbf16> to vector<2x64x32xbf16>
    %43 = vector.extract_strided_slice %7 {offsets = [0, 288], sizes = [128, 32], strides = [1, 1]} : vector<128x384xf32> to vector<128x32xf32>
    %44 = arith.truncf %43 : vector<128x32xf32> to vector<128x32xbf16>
    %45 = vector.shape_cast %44 : vector<128x32xbf16> to vector<2x64x32xbf16>
    "tpu.trace_start"() <{level = 10 : i32, message = "wnd,wmd->wnm"}> : () -> ()
    %cst_14 = arith.constant dense<0.000000e+00> : vector<2x64x64xf32>
    %46 = tpu.matmul %39, %42, %cst_14 {dimension_numbers = #tpu.dot_dimension_numbers<[2], [2], [1], [1], [0, 0, 0, 1, 1, 1], [0], [0]>} : vector<2x64x32xbf16>, vector<2x64x32xbf16>, vector<2x64x64xf32> -> vector<2x64x64xf32>
    "tpu.trace_stop"() : () -> ()
    %47 = vector.extract_strided_slice %8 {offsets = [1, 0, 0], sizes = [1, 64, 64], strides = [1, 1, 1]} : vector<4x64x64xf32> to vector<1x64x64xf32>
    %48 = vector.shape_cast %47 : vector<1x64x64xf32> to vector<64x64xf32>
    %49 = vector.shape_cast %48 : vector<64x64xf32> to vector<1x64x64xf32>
    %50 = vector.broadcast %49 : vector<1x64x64xf32> to vector<2x64x64xf32>
    %51 = arith.addf %46, %50 : vector<2x64x64xf32>
    %cst_15 = arith.constant dense<0xFF800000> : vector<2x64xf32>
    %52 = vector.multi_reduction <maximumf>, %51, %cst_15 [2] : vector<2x64x64xf32> to vector<2x64xf32>
    %53 = vector.shape_cast %52 : vector<2x64xf32> to vector<2x64x1xf32>
    %54 = vector.broadcast %53 : vector<2x64x1xf32> to vector<2x64x64xf32>
    %55 = arith.subf %51, %54 : vector<2x64x64xf32>
    %56 = math.exp %55 : vector<2x64x64xf32>
    %cst_16 = arith.constant dense<0.000000e+00> : vector<2x64xf32>
    %57 = vector.multi_reduction <add>, %56, %cst_16 [2] : vector<2x64x64xf32> to vector<2x64xf32>
    %58 = vector.shape_cast %57 : vector<2x64xf32> to vector<2x64x1xf32>
    %59 = arith.truncf %56 : vector<2x64x64xf32> to vector<2x64x64xbf16>
    "tpu.trace_start"() <{level = 10 : i32, message = "wnm,wmd->wnd"}> : () -> ()
    %cst_17 = arith.constant dense<0.000000e+00> : vector<2x64x32xf32>
    %60 = tpu.matmul %59, %45, %cst_17 {dimension_numbers = #tpu.dot_dimension_numbers<[2], [1], [1], [2], [0, 0, 0, 1, 1, 2], [0], [0]>} : vector<2x64x64xbf16>, vector<2x64x32xbf16>, vector<2x64x32xf32> -> vector<2x64x32xf32>
    "tpu.trace_stop"() : () -> ()
    %61 = tpu.reciprocal %58 {approx = true} : vector<2x64x1xf32> -> vector<2x64x1xf32>
    %62 = vector.broadcast %61 : vector<2x64x1xf32> to vector<2x64x32xf32>
    %63 = arith.mulf %60, %62 : vector<2x64x32xf32>
    %64 = vector.shape_cast %63 : vector<2x64x32xf32> to vector<128x32xf32>
    %65 = vector.extract_strided_slice %7 {offsets = [0, 64], sizes = [128, 32], strides = [1, 1]} : vector<128x384xf32> to vector<128x32xf32>
    %66 = arith.truncf %65 : vector<128x32xf32> to vector<128x32xbf16>
    %67 = vector.shape_cast %66 : vector<128x32xbf16> to vector<2x64x32xbf16>
    %68 = vector.extract_strided_slice %7 {offsets = [0, 192], sizes = [128, 32], strides = [1, 1]} : vector<128x384xf32> to vector<128x32xf32>
    %69 = arith.truncf %68 : vector<128x32xf32> to vector<128x32xbf16>
    %70 = vector.shape_cast %69 : vector<128x32xbf16> to vector<2x64x32xbf16>
    %71 = vector.extract_strided_slice %7 {offsets = [0, 320], sizes = [128, 32], strides = [1, 1]} : vector<128x384xf32> to vector<128x32xf32>
    %72 = arith.truncf %71 : vector<128x32xf32> to vector<128x32xbf16>
    %73 = vector.shape_cast %72 : vector<128x32xbf16> to vector<2x64x32xbf16>
    "tpu.trace_start"() <{level = 10 : i32, message = "wnd,wmd->wnm"}> : () -> ()
    %cst_18 = arith.constant dense<0.000000e+00> : vector<2x64x64xf32>
    %74 = tpu.matmul %67, %70, %cst_18 {dimension_numbers = #tpu.dot_dimension_numbers<[2], [2], [1], [1], [0, 0, 0, 1, 1, 1], [0], [0]>} : vector<2x64x32xbf16>, vector<2x64x32xbf16>, vector<2x64x64xf32> -> vector<2x64x64xf32>
    "tpu.trace_stop"() : () -> ()
    %75 = vector.extract_strided_slice %8 {offsets = [2, 0, 0], sizes = [1, 64, 64], strides = [1, 1, 1]} : vector<4x64x64xf32> to vector<1x64x64xf32>
    %76 = vector.shape_cast %75 : vector<1x64x64xf32> to vector<64x64xf32>
    %77 = vector.shape_cast %76 : vector<64x64xf32> to vector<1x64x64xf32>
    %78 = vector.broadcast %77 : vector<1x64x64xf32> to vector<2x64x64xf32>
    %79 = arith.addf %74, %78 : vector<2x64x64xf32>
    %cst_19 = arith.constant dense<0xFF800000> : vector<2x64xf32>
    %80 = vector.multi_reduction <maximumf>, %79, %cst_19 [2] : vector<2x64x64xf32> to vector<2x64xf32>
    %81 = vector.shape_cast %80 : vector<2x64xf32> to vector<2x64x1xf32>
    %82 = vector.broadcast %81 : vector<2x64x1xf32> to vector<2x64x64xf32>
    %83 = arith.subf %79, %82 : vector<2x64x64xf32>
    %84 = math.exp %83 : vector<2x64x64xf32>
    %cst_20 = arith.constant dense<0.000000e+00> : vector<2x64xf32>
    %85 = vector.multi_reduction <add>, %84, %cst_20 [2] : vector<2x64x64xf32> to vector<2x64xf32>
    %86 = vector.shape_cast %85 : vector<2x64xf32> to vector<2x64x1xf32>
    %87 = arith.truncf %84 : vector<2x64x64xf32> to vector<2x64x64xbf16>
    "tpu.trace_start"() <{level = 10 : i32, message = "wnm,wmd->wnd"}> : () -> ()
    %cst_21 = arith.constant dense<0.000000e+00> : vector<2x64x32xf32>
    %88 = tpu.matmul %87, %73, %cst_21 {dimension_numbers = #tpu.dot_dimension_numbers<[2], [1], [1], [2], [0, 0, 0, 1, 1, 2], [0], [0]>} : vector<2x64x64xbf16>, vector<2x64x32xbf16>, vector<2x64x32xf32> -> vector<2x64x32xf32>
    "tpu.trace_stop"() : () -> ()
    %89 = tpu.reciprocal %86 {approx = true} : vector<2x64x1xf32> -> vector<2x64x1xf32>
    %90 = vector.broadcast %89 : vector<2x64x1xf32> to vector<2x64x32xf32>
    %91 = arith.mulf %88, %90 : vector<2x64x32xf32>
    %92 = vector.shape_cast %91 : vector<2x64x32xf32> to vector<128x32xf32>
    %93 = vector.extract_strided_slice %7 {offsets = [0, 96], sizes = [128, 32], strides = [1, 1]} : vector<128x384xf32> to vector<128x32xf32>
    %94 = arith.truncf %93 : vector<128x32xf32> to vector<128x32xbf16>
    %95 = vector.shape_cast %94 : vector<128x32xbf16> to vector<2x64x32xbf16>
    %96 = vector.extract_strided_slice %7 {offsets = [0, 224], sizes = [128, 32], strides = [1, 1]} : vector<128x384xf32> to vector<128x32xf32>
    %97 = arith.truncf %96 : vector<128x32xf32> to vector<128x32xbf16>
    %98 = vector.shape_cast %97 : vector<128x32xbf16> to vector<2x64x32xbf16>
    %99 = vector.extract_strided_slice %7 {offsets = [0, 352], sizes = [128, 32], strides = [1, 1]} : vector<128x384xf32> to vector<128x32xf32>
    %100 = arith.truncf %99 : vector<128x32xf32> to vector<128x32xbf16>
    %101 = vector.shape_cast %100 : vector<128x32xbf16> to vector<2x64x32xbf16>
    "tpu.trace_start"() <{level = 10 : i32, message = "wnd,wmd->wnm"}> : () -> ()
    %cst_22 = arith.constant dense<0.000000e+00> : vector<2x64x64xf32>
    %102 = tpu.matmul %95, %98, %cst_22 {dimension_numbers = #tpu.dot_dimension_numbers<[2], [2], [1], [1], [0, 0, 0, 1, 1, 1], [0], [0]>} : vector<2x64x32xbf16>, vector<2x64x32xbf16>, vector<2x64x64xf32> -> vector<2x64x64xf32>
    "tpu.trace_stop"() : () -> ()
    %103 = vector.extract_strided_slice %8 {offsets = [3, 0, 0], sizes = [1, 64, 64], strides = [1, 1, 1]} : vector<4x64x64xf32> to vector<1x64x64xf32>
    %104 = vector.shape_cast %103 : vector<1x64x64xf32> to vector<64x64xf32>
    %105 = vector.shape_cast %104 : vector<64x64xf32> to vector<1x64x64xf32>
    %106 = vector.broadcast %105 : vector<1x64x64xf32> to vector<2x64x64xf32>
    %107 = arith.addf %102, %106 : vector<2x64x64xf32>
    %cst_23 = arith.constant dense<0xFF800000> : vector<2x64xf32>
    %108 = vector.multi_reduction <maximumf>, %107, %cst_23 [2] : vector<2x64x64xf32> to vector<2x64xf32>
    %109 = vector.shape_cast %108 : vector<2x64xf32> to vector<2x64x1xf32>
    %110 = vector.broadcast %109 : vector<2x64x1xf32> to vector<2x64x64xf32>
    %111 = arith.subf %107, %110 : vector<2x64x64xf32>
    %112 = math.exp %111 : vector<2x64x64xf32>
    %cst_24 = arith.constant dense<0.000000e+00> : vector<2x64xf32>
    %113 = vector.multi_reduction <add>, %112, %cst_24 [2] : vector<2x64x64xf32> to vector<2x64xf32>
    %114 = vector.shape_cast %113 : vector<2x64xf32> to vector<2x64x1xf32>
    %115 = arith.truncf %112 : vector<2x64x64xf32> to vector<2x64x64xbf16>
    "tpu.trace_start"() <{level = 10 : i32, message = "wnm,wmd->wnd"}> : () -> ()
    %cst_25 = arith.constant dense<0.000000e+00> : vector<2x64x32xf32>
    %116 = tpu.matmul %115, %101, %cst_25 {dimension_numbers = #tpu.dot_dimension_numbers<[2], [1], [1], [2], [0, 0, 0, 1, 1, 2], [0], [0]>} : vector<2x64x64xbf16>, vector<2x64x32xbf16>, vector<2x64x32xf32> -> vector<2x64x32xf32>
    "tpu.trace_stop"() : () -> ()
    %117 = tpu.reciprocal %114 {approx = true} : vector<2x64x1xf32> -> vector<2x64x1xf32>
    %118 = vector.broadcast %117 : vector<2x64x1xf32> to vector<2x64x32xf32>
    %119 = arith.mulf %116, %118 : vector<2x64x32xf32>
    %120 = vector.shape_cast %119 : vector<2x64x32xf32> to vector<128x32xf32>
    %121 = tpu.concatenate %36, %64, %92, %120 in 1 : vector<128x32xf32>, vector<128x32xf32>, vector<128x32xf32>, vector<128x32xf32> -> vector<128x128xf32>
    %122 = arith.truncf %121 : vector<128x128xf32> to vector<128x128xbf16>
    %c0_26 = arith.constant 0 : index
    %c0_27 = arith.constant 0 : index
    %123 = vector.load %arg5[%c0_26, %c0_27] : memref<128x128xbf16, #tpu.memory_space<vmem>>, vector<128x128xbf16>
    %cst_28 = arith.constant dense<0.000000e+00> : vector<128x128xf32>
    %124 = tpu.matmul %122, %123, %cst_28 {dimension_numbers = #tpu.dot_dimension_numbers<[1], [0], [0], [1], [0, 0, 1, 1], [], []>} : vector<128x128xbf16>, vector<128x128xbf16>, vector<128x128xf32> -> vector<128x128xf32>
    %c0_29 = arith.constant 0 : index
    %c0_30 = arith.constant 0 : index
    %125 = vector.load %arg6[%c0_29, %c0_30] : memref<1x128xf32, #tpu.memory_space<vmem>>, vector<1x128xf32>
    %126 = vector.broadcast %125 : vector<1x128xf32> to vector<128x128xf32>
    %127 = arith.addf %124, %126 : vector<128x128xf32>
    %128 = vector.shape_cast %127 : vector<128x128xf32> to vector<1x2x64x128xf32>
    %c0_31 = arith.constant 0 : index
    %c0_32 = arith.constant 0 : index
    %c0_33 = arith.constant 0 : index
    %c0_34 = arith.constant 0 : index
    %129 = vector.load %arg8[%c0_31, %c0_32, %c0_33, %c0_34] : memref<1x2x64x128xf32, #tpu.memory_space<vmem>>, vector<1x2x64x128xf32>
    tpu.vector_store %arg8[%c0_31, %c0_32, %c0_33, %c0_34], %128 {strides = array<i32>} : memref<1x2x64x128xf32, #tpu.memory_space<vmem>>, vector<1x2x64x128xf32>,
    return
  }
  func.func @transform_0(%arg0: i32, %arg1: i32) -> (i32, i32, i32, i32) {
    %c0_i32 = arith.constant 0 : i32
    %c0_i32_0 = arith.constant 0 : i32
    %c0_i32_1 = arith.constant 0 : i32
    return %arg0, %arg1, %c0_i32, %c0_i32_0 : i32, i32, i32, i32
  }
  func.func @transform_1(%arg0: i32, %arg1: i32) -> (i32, i32) {
    %c0_i32 = arith.constant 0 : i32
    %c0_i32_0 = arith.constant 0 : i32
    %c0_i32_1 = arith.constant 0 : i32
    return %c0_i32, %c0_i32_0 : i32, i32
  }
  func.func @transform_2(%arg0: i32, %arg1: i32) -> (i32, i32) {
    %c0_i32 = arith.constant 0 : i32
    %c0_i32_0 = arith.constant 0 : i32
    %c0_i32_1 = arith.constant 0 : i32
    return %c0_i32, %c0_i32_0 : i32, i32
  }
  func.func @transform_3(%arg0: i32, %arg1: i32) -> (i32, i32) {
    %c0_i32 = arith.constant 0 : i32
    %c0_i32_0 = arith.constant 0 : i32
    %c0_i32_1 = arith.constant 0 : i32
    return %c0_i32, %c0_i32_0 : i32, i32
  }
  func.func @transform_4(%arg0: i32, %arg1: i32) -> (i32, i32) {
    %c0_i32 = arith.constant 0 : i32
    %c0_i32_0 = arith.constant 0 : i32
    %c0_i32_1 = arith.constant 0 : i32
    return %c0_i32, %c0_i32_0 : i32, i32
  }
  func.func @transform_5(%arg0: i32, %arg1: i32) -> (i32, i32, i32) {
    %c0_i32 = arith.constant 0 : i32
    %c0_i32_0 = arith.constant 0 : i32
    %c0_i32_1 = arith.constant 0 : i32
    %c0_i32_2 = arith.constant 0 : i32
    return %c0_i32, %c0_i32_0, %c0_i32_1 : i32, i32, i32
  }
  func.func @transform_6(%arg0: i32, %arg1: i32) -> (i32, i32, i32, i32) {
    %c0_i32 = arith.constant 0 : i32
    %c0_i32_0 = arith.constant 0 : i32
    %c0_i32_1 = arith.constant 0 : i32
    return %arg0, %arg1, %c0_i32, %c0_i32_0 : i32, i32, i32, i32
  }
}

</mosaic_0001>

<llo_original>
// kernel: tpu_custom_call.1
$region0: #{tpu_custom_call.1}
  #allocation0 [shape = 'u32[]', space=smem, size = 0x4, offset = 0x4, fixed_abs, tag = 'smem constant byte address 0x4 - core index']
  #allocation1 [shape = 'u32[144,128]{1,0:T(1,128)}', space=vmem, size = 0x12000, scoped, tag = 'internal scratch']
  %s0 = inlined_call_operand.hbm [shape: f32[2,4,64,128], index: 0, kind: input, shape index: {}]
  %s1 = inlined_call_operand.hbm [shape: bf16[128,384], index: 1, kind: input, shape index: {}]
  %s2 = inlined_call_operand.vmem [shape: f32[1,384], index: 2, kind: input, shape index: {}]
  %s3 = inlined_call_operand.hbm [shape: bf16[128,128], index: 3, kind: input, shape index: {}]
  %s4 = inlined_call_operand.vmem [shape: f32[1,128], index: 4, kind: input, shape index: {}]
  %s5 = inlined_call_operand.hbm [shape: f32[4,64,64], index: 5, kind: input, shape index: {}]
  %s6 = inlined_call_operand.hbm [shape: f32[2,4,64,128], index: 6, kind: output, shape index: {}]
  %s7 = sld [smem:[#allocation0]]
  $region73: #{tpu_custom_call.1} parent=0
    _
  %s9 = ssub.s32 1, %s7
  %s10 = scalar_select 0, %s9, %s7
  $region1: #{tpu_custom_call.1} parent=0
    #allocation2 [shape = 'u8[131072]{0}', space=vmem, size = 0x20000, scoped, tag = 'input window, operand 0']
    #allocation3 [shape = 's32[2]{0}', space=sflag, size = 0x8, scoped, tag = 'scoped memory for tpu_custom_call.1']
    #allocation4 [shape = 's32[2]{0}', space=sflag, size = 0x8, scoped, tag = 'scoped memory for tpu_custom_call.1']
    #allocation5 [shape = 'u8[98304]{0}', space=vmem, size = 0x18000, scoped, tag = 'input window, operand 1, single buffered']
    #allocation6 [shape = 's32[1]{0}', space=sflag, size = 0x4, scoped, tag = 'scoped memory for tpu_custom_call.1']
    #allocation7 [shape = 'u8[32768]{0}', space=vmem, size = 0x8000, scoped, tag = 'input window, operand 3, single buffered']
    #allocation8 [shape = 'u8[131072]{0}', space=vmem, size = 0x20000, scoped, tag = 'input window, operand 5, single buffered']
    #allocation9 [shape = 's32[1]{0}', space=sflag, size = 0x4, scoped, tag = 'scoped memory for tpu_custom_call.1']
    #allocation10 [shape = 'u8[131072]{0}', space=vmem, size = 0x20000, scoped, tag = 'output window, operand 0']
    %11 = vsyncpa [#allocation3], 0
    %s12 = scalar_lea.sflag [#allocation3], 1
    %13 = vsyncpa %s12, 0
    %14 = vsyncpa [#allocation6], 0
    %15 = vsyncpa [#allocation9], 0
    %16 = vsyncpa [#allocation4], 0
    %s17 = scalar_lea.sflag [#allocation4], 1
    %18 = vsyncpa %s17, 0
    loop: start=0, step=1, limit=6
    $region2: #{tpu_custom_call.1} parent=1 // loop_pre_header
      _
    $region3: #{tpu_custom_call.1} parent=1 // loop_header
      %s20 = sphi 0, %s24
      %p21 = scmp.ge.s32.totalorder %s20, 6
      %s27 = sphi 0, %s39
      %s28 = sphi 0, %s35
      %s29 = sphi 0, %s27
      %s30 = sphi 0, %s28
      %s31 = sphi 0, %s29
      %s32 = sphi 0, %s30
      %s44 = sphi 0, %s46
      %s47 = sphi 0, %s44
      %s48 = sphi 0, %s47
      %s64 = sphi 0, %s48
      %s68 = sphi 0, %s68
      %s70 = sphi 0, %s68
      %s71 = sphi 0, %s70
      %s85 = sphi 0, %s71
      %s89 = sphi 0, %s89
      %s91 = sphi 0, %s89
      %s92 = sphi 0, %s91
      %s106 = sphi 0, %s92
      %s110 = sphi 0, %s110
      %s112 = sphi 0, %s110
      %s113 = sphi 0, %s112
      %s127 = sphi 0, %s113
      %s131 = sphi 0, %s131
      %s133 = sphi 0, %s131
      %s134 = sphi 0, %s133
      %s148 = sphi 0, %s134
      %s152 = sphi 0, %s152
      %s154 = sphi 0, %s152
      %s155 = sphi 0, %s154
      %s169 = sphi 0, %s155
      %s177 = sphi 0, %s179
      %s180 = sphi 0, %s177
      %s181 = sphi 0, %s180
      %s197 = sphi 0, %s181
    $region4: #{tpu_custom_call.1} parent=1 // loop_header_branch
      %23 = sbr.rel (%p21) target = $region8
    $region5: #{tpu_custom_call.1} parent=1 // loop_body
      %s25 = ssub.s32 %s20, 1
      %s26 = ssub.s32 %s20, 2
      %s33 = sadd.s32 1, %s28
      %p34 = scmp.ge.s32.totalorder %s33, 2
      %s35 = scalar_select %p34, 0, %s33
      %s36 = sadd.s32 1, %s27
      %s37 = scalar_select %p34, %s36, %s27
      %p38 = scmp.ge.s32.totalorder %s37, 2
      %s39 = scalar_select %p38, 0, %s37
      %s40 = ssub.s32 %s27, %s39
      %s41 = ssub.s32 %s28, %s35
      %s42 = sor.u32 %s40, %s41
      %p43 = scmp.eq.s32.totalorder %s42, 0
      %s45 = sadd.s32 %s44, 1
      %s46 = scalar_select %p43, %s44, %s45
      %p49 = pneg %p43
      %p50 = scmp.eq.s32.totalorder %s20, 3
      %p51 = por %p49, %p50
      %p52 = scmp.ne.s32.totalorder %s44, %s47
      %p53 = scmp.eq.s32.totalorder %s20, 0
      %p54 = por %p52, %p53
      %p55 = scmp.ne.s32.totalorder %s44, %s47
      %p56 = scmp.eq.s32.totalorder %s25, 3
      %p57 = por %p55, %p56
      %p58 = scmp.ne.s32.totalorder %s47, %s48
      %p59 = scmp.eq.s32.totalorder %s25, 0
      %p60 = por %p58, %p59
      %p61 = scmp.ne.s32.totalorder %s47, %s48
      %p62 = scmp.eq.s32.totalorder %s26, 3
      %p63 = por %p61, %p62
      %p65 = scmp.ne.s32.totalorder %s48, %s64
      %p66 = scmp.eq.s32.totalorder %s26, 0
      %p67 = por %p65, %p66
      %s69 = sadd.s32 %s68, 1
      %p72 = scmp.eq.s32.totalorder %s20, 3
      %p73 = scmp.ne.s32.totalorder %s68, %s70
      %p74 = scmp.eq.s32.totalorder %s20, 0
      %p75 = por %p73, %p74
      %p76 = scmp.ne.s32.totalorder %s68, %s70
      %p77 = scmp.eq.s32.totalorder %s25, 3
      %p78 = por %p76, %p77
      %p79 = scmp.ne.s32.totalorder %s70, %s71
      %p80 = scmp.eq.s32.totalorder %s25, 0
      %p81 = por %p79, %p80
      %p82 = scmp.ne.s32.totalorder %s70, %s71
      %p83 = scmp.eq.s32.totalorder %s26, 3
      %p84 = por %p82, %p83
      %p86 = scmp.ne.s32.totalorder %s71, %s85
      %p87 = scmp.eq.s32.totalorder %s26, 0
      %p88 = por %p86, %p87
      %s90 = sadd.s32 %s89, 1
      %p93 = scmp.eq.s32.totalorder %s20, 3
      %p94 = scmp.ne.s32.totalorder %s89, %s91
      %p95 = scmp.eq.s32.totalorder %s20, 0
      %p96 = por %p94, %p95
      %p97 = scmp.ne.s32.totalorder %s89, %s91
      %p98 = scmp.eq.s32.totalorder %s25, 3
      %p99 = por %p97, %p98
      %p100 = scmp.ne.s32.totalorder %s91, %s92
      %p101 = scmp.eq.s32.totalorder %s25, 0
      %p102 = por %p100, %p101
      %p103 = scmp.ne.s32.totalorder %s91, %s92
      %p104 = scmp.eq.s32.totalorder %s26, 3
      %p105 = por %p103, %p104
      %p107 = scmp.ne.s32.totalorder %s92, %s106
      %p108 = scmp.eq.s32.totalorder %s26, 0
      %p109 = por %p107, %p108
      %s111 = sadd.s32 %s110, 1
      %p114 = scmp.eq.s32.totalorder %s20, 3
      %p115 = scmp.ne.s32.totalorder %s110, %s112
      %p116 = scmp.eq.s32.totalorder %s20, 0
      %p117 = por %p115, %p116
      %p118 = scmp.ne.s32.totalorder %s110, %s112
      %p119 = scmp.eq.s32.totalorder %s25, 3
      %p120 = por %p118, %p119
      %p121 = scmp.ne.s32.totalorder %s112, %s113
      %p122 = scmp.eq.s32.totalorder %s25, 0
      %p123 = por %p121, %p122
      %p124 = scmp.ne.s32.totalorder %s112, %s113
      %p125 = scmp.eq.s32.totalorder %s26, 3
      %p126 = por %p124, %p125
      %p128 = scmp.ne.s32.totalorder %s113, %s127
      %p129 = scmp.eq.s32.totalorder %s26, 0
      %p130 = por %p128, %p129
      %s132 = sadd.s32 %s131, 1
      %p135 = scmp.eq.s32.totalorder %s20, 3
      %p136 = scmp.ne.s32.totalorder %s131, %s133
      %p137 = scmp.eq.s32.totalorder %s20, 0
      %p138 = por %p136, %p137
      %p139 = scmp.ne.s32.totalorder %s131, %s133
      %p140 = scmp.eq.s32.totalorder %s25, 3
      %p141 = por %p139, %p140
      %p142 = scmp.ne.s32.totalorder %s133, %s134
      %p143 = scmp.eq.s32.totalorder %s25, 0
      %p144 = por %p142, %p143
      %p145 = scmp.ne.s32.totalorder %s133, %s134
      %p146 = scmp.eq.s32.totalorder %s26, 3
      %p147 = por %p145, %p146
      %p149 = scmp.ne.s32.totalorder %s134, %s148
      %p150 = scmp.eq.s32.totalorder %s26, 0
      %p151 = por %p149, %p150
      %s153 = sadd.s32 %s152, 1
      %p156 = scmp.eq.s32.totalorder %s20, 3
      %p157 = scmp.ne.s32.totalorder %s152, %s154
      %p158 = scmp.eq.s32.totalorder %s20, 0
      %p159 = por %p157, %p158
      %p160 = scmp.ne.s32.totalorder %s152, %s154
      %p161 = scmp.eq.s32.totalorder %s25, 3
      %p162 = por %p160, %p161
      %p163 = scmp.ne.s32.totalorder %s154, %s155
      %p164 = scmp.eq.s32.totalorder %s25, 0
      %p165 = por %p163, %p164
      %p166 = scmp.ne.s32.totalorder %s154, %s155
      %p167 = scmp.eq.s32.totalorder %s26, 3
      %p168 = por %p166, %p167
      %p170 = scmp.ne.s32.totalorder %s155, %s169
      %p171 = scmp.eq.s32.totalorder %s26, 0
      %p172 = por %p170, %p171
      %s173 = ssub.s32 %s27, %s39
      %s174 = ssub.s32 %s28, %s35
      %s175 = sor.u32 %s173, %s174
      %p176 = scmp.eq.s32.totalorder %s175, 0
      %s178 = sadd.s32 %s177, 1
      %s179 = scalar_select %p176, %s177, %s178
      %p182 = pneg %p176
      %p183 = scmp.eq.s32.totalorder %s20, 3
      %p184 = por %p182, %p183
      %p185 = scmp.ne.s32.totalorder %s177, %s180
      %p186 = scmp.eq.s32.totalorder %s20, 0
      %p187 = por %p185, %p186
      %p188 = scmp.ne.s32.totalorder %s177, %s180
      %p189 = scmp.eq.s32.totalorder %s25, 3
      %p190 = por %p188, %p189
      %p191 = scmp.ne.s32.totalorder %s180, %s181
      %p192 = scmp.eq.s32.totalorder %s25, 0
      %p193 = por %p191, %p192
      %p194 = scmp.ne.s32.totalorder %s180, %s181
      %p195 = scmp.eq.s32.totalorder %s26, 3
      %p196 = por %p194, %p195
      %p198 = scmp.ne.s32.totalorder %s181, %s197
      %p199 = scmp.eq.s32.totalorder %s26, 0
      %p200 = por %p198, %p199
      %p201 = scmp.le.s32.totalorder 1, %s20
      %p202 = scmp.lt.s32.totalorder %s20, 5
      %p203 = pnand %p201, %p202
      %p204 = pneg %p203
      // Predicated region
      $region9: #{tpu_custom_call.1} parent=5 // pred_check
        _
      $region10: #{tpu_custom_call.1} parent=5 // pred_check_branch
        %206 = sbr.rel (%p203) target = $region12
      $region11: #{tpu_custom_call.1} parent=5 // pred_region
        %s207 = ssub.s32 %s20, 1
        // Predicated region
        $region13: #{tpu_custom_call.1} parent=11 // pred_check
          %p208 = pneg %p81
        $region14: #{tpu_custom_call.1} parent=11 // pred_check_branch
          %210 = sbr.rel (%p208) target = $region16
        $region15: #{tpu_custom_call.1} parent=11 // pred_region
          %s212 = ssub.s32 3072, 3072
          %213 = vsyncadd [#allocation6], %s212
          %s214 = sshll.u32 [#allocation5], 4
          %s215 = int_to_ptr.vmem [resolvable:$true] %s214
          %220 = dma.hbm_to_vmem [thread:$0]  %s1, 3072, %s215, [#allocation6], 192, 192, 12
        $region16: #{tpu_custom_call.1} parent=11 // pred_fallthru
          _
        // Predicated region
        $region17: #{tpu_custom_call.1} parent=11 // pred_check
          %p221 = pneg %p102
        $region18: #{tpu_custom_call.1} parent=11 // pred_check_branch
          %223 = sbr.rel (%p221) target = $region20
        $region19: #{tpu_custom_call.1} parent=11 // pred_region
          _
        $region20: #{tpu_custom_call.1} parent=11 // pred_fallthru
          _
        // Predicated region
        $region21: #{tpu_custom_call.1} parent=11 // pred_check
          %p224 = pneg %p123
        $region22: #{tpu_custom_call.1} parent=11 // pred_check_branch
          %226 = sbr.rel (%p224) target = $region24
        $region23: #{tpu_custom_call.1} parent=11 // pred_region
          %s228 = ssub.s32 1024, 1024
          %229 = vsyncadd [#allocation6], %s228
          %s230 = sshll.u32 [#allocation7], 4
          %s231 = int_to_ptr.vmem [resolvable:$true] %s230
          %236 = dma.hbm_to_vmem [thread:$0]  %s3, 1024, %s231, [#allocation6], 64, 64, 4
        $region24: #{tpu_custom_call.1} parent=11 // pred_fallthru
          _
        // Predicated region
        $region25: #{tpu_custom_call.1} parent=11 // pred_check
          %p237 = pneg %p144
        $region26: #{tpu_custom_call.1} parent=11 // pred_check_branch
          %239 = sbr.rel (%p237) target = $region28
        $region27: #{tpu_custom_call.1} parent=11 // pred_region
          _
        $region28: #{tpu_custom_call.1} parent=11 // pred_fallthru
          _
        // Predicated region
        $region29: #{tpu_custom_call.1} parent=11 // pred_check
          %p240 = pneg %p165
        $region30: #{tpu_custom_call.1} parent=11 // pred_check_branch
          %242 = sbr.rel (%p240) target = $region32
        $region31: #{tpu_custom_call.1} parent=11 // pred_region
          %s244 = ssub.s32 4096, 4096
          %245 = vsyncadd [#allocation9], %s244
          %s246 = sshll.u32 [#allocation8], 4
          %s247 = int_to_ptr.vmem [resolvable:$true] %s246
          %252 = dma.hbm_to_vmem [thread:$0]  %s5, 4096, %s247, [#allocation9], 128, 128, 8
        $region32: #{tpu_custom_call.1} parent=11 // pred_fallthru
          _
      $region12: #{tpu_custom_call.1} parent=5 // pred_fallthru
        _
      %p253 = scmp.lt.s32.totalorder %s20, 4
      // Predicated region
      $region33: #{tpu_custom_call.1} parent=5 // pred_check
        %p254 = pneg %p253
      $region34: #{tpu_custom_call.1} parent=5 // pred_check_branch
        %256 = sbr.rel (%p254) target = $region36
      $region35: #{tpu_custom_call.1} parent=5 // pred_region
        // Predicated region
        $region37: #{tpu_custom_call.1} parent=35 // pred_check
          %p257 = pneg %p54
        $region38: #{tpu_custom_call.1} parent=35 // pred_check_branch
          %259 = sbr.rel (%p257) target = $region40
        $region39: #{tpu_custom_call.1} parent=35 // pred_region
          %s260 = sand.u32 %s44, 1
          %s261 = scalar_lea.sflag [#allocation3], %s260
          %s262 = sand.u32 %s44, 1
          %s263 = smul.addr %s262, 128
          %s264 = scalar_lea.vmem [#allocation2], %s263
          %s265 = smul.u32 2, %s28
          %s267 = ssub.s32 2048, 2048
          %268 = vsyncadd %s261, %s267
          %s269 = smul.addr %s265, 8
          %s270 = smul.addr %s27, 32
          %s271 = sadd.s32 %s269, %s270
          %s272 = smul.addr %s271, 128
          %s273 = scalar_lea.hbm %s0, %s272
          %s274 = sshll.u32 %s264, 4
          %s275 = int_to_ptr.vmem [resolvable:$true] %s274
          %280 = dma.hbm_to_vmem [thread:$0]  %s273, 2048, %s275, %s261, 128, 128, 8
        $region40: #{tpu_custom_call.1} parent=35 // pred_fallthru
          _
      $region36: #{tpu_custom_call.1} parent=5 // pred_fallthru
        _
      %p281 = scmp.le.s32.totalorder 1, %s20
      %p282 = scmp.lt.s32.totalorder %s20, 5
      %p283 = pnand %p281, %p282
      %p284 = pneg %p283
      // Predicated region
      $region41: #{tpu_custom_call.1} parent=5 // pred_check
        _
      $region42: #{tpu_custom_call.1} parent=5 // pred_check_branch
        %286 = sbr.rel (%p283) target = $region44
      $region43: #{tpu_custom_call.1} parent=5 // pred_region
        %s287 = ssub.s32 %s20, 1
        %s288 = sand.u32 %s47, 1
        %s289 = scalar_lea.sflag [#allocation3], %s288
        %s290 = sand.u32 %s47, 1
        %s291 = smul.addr %s290, 128
        %s292 = scalar_lea.vmem [#allocation2], %s291
        // Predicated region
        $region45: #{tpu_custom_call.1} parent=43 // pred_check
          %p293 = pneg %p60
        $region46: #{tpu_custom_call.1} parent=43 // pred_check_branch
          %295 = sbr.rel (%p293) target = $region48
        $region47: #{tpu_custom_call.1} parent=43 // pred_region
          %296 = dma.done %s289, 2048
        $region48: #{tpu_custom_call.1} parent=43 // pred_fallthru
          _
        // Predicated region
        $region49: #{tpu_custom_call.1} parent=43 // pred_check
          %p297 = pneg %p81
        $region50: #{tpu_custom_call.1} parent=43 // pred_check_branch
          %299 = sbr.rel (%p297) target = $region52
        $region51: #{tpu_custom_call.1} parent=43 // pred_region
          %300 = dma.done [#allocation6], 3072
        $region52: #{tpu_custom_call.1} parent=43 // pred_fallthru
          _
        // Predicated region
        $region53: #{tpu_custom_call.1} parent=43 // pred_check
          %p301 = pneg %p123
        $region54: #{tpu_custom_call.1} parent=43 // pred_check_branch
          %303 = sbr.rel (%p301) target = $region56
        $region55: #{tpu_custom_call.1} parent=43 // pred_region
          %304 = dma.done [#allocation6], 1024
        $region56: #{tpu_custom_call.1} parent=43 // pred_fallthru
          _
        // Predicated region
        $region57: #{tpu_custom_call.1} parent=43 // pred_check
          %p305 = pneg %p165
        $region58: #{tpu_custom_call.1} parent=43 // pred_check_branch
          %307 = sbr.rel (%p305) target = $region60
        $region59: #{tpu_custom_call.1} parent=43 // pred_region
          %308 = dma.done [#allocation9], 4096
        $region60: #{tpu_custom_call.1} parent=43 // pred_fallthru
          _
        %s309 = sand.u32 %s47, 1
        %s310 = scalar_lea.sflag [#allocation3], %s309
        %s311 = sand.u32 %s47, 1
        %s312 = smul.addr %s311, 128
        %s313 = scalar_lea.vmem [#allocation2], %s312
        %p314 = pneg %p60
        %p315 = pneg %p57
        %p316 = pneg %p81
        %p317 = pneg %p78
        %p318 = pneg %p102
        %p319 = pneg %p99
        %p320 = pneg %p123
        %p321 = pneg %p120
        %p322 = pneg %p144
        %p323 = pneg %p141
        %p324 = pneg %p165
        %p325 = pneg %p162
        %p326 = pneg %p193
        %p327 = pneg %p190
        %s328 = sand.u32 %s180, 1
        %s329 = scalar_lea.sflag [#allocation4], %s328
        %s330 = sand.u32 %s180, 1
        %s331 = smul.addr %s330, 128
        %s332 = scalar_lea.vmem [#allocation10], %s331
        %s333 = smul.u32 2, %s30
        %s334 = smul.u32 2, %s30
        %v336 = vld [vmem:[%s292] sm:$0xff]
        %v337 = vld [vmem:[%s292 + $0x8] sm:$0xff]
        %v338 = vld [vmem:[%s292 + $0x10] sm:$0xff]
        %v339 = vld [vmem:[%s292 + $0x18] sm:$0xff]
        %v340 = vld [vmem:[%s292 + $0x20] sm:$0xff]
        %v341 = vld [vmem:[%s292 + $0x28] sm:$0xff]
        %v342 = vld [vmem:[%s292 + $0x30] sm:$0xff]
        %v343 = vld [vmem:[%s292 + $0x38] sm:$0xff]
        %v344 = vld [vmem:[%s292 + $0x40] sm:$0xff]
        %v345 = vld [vmem:[%s292 + $0x48] sm:$0xff]
        %v346 = vld [vmem:[%s292 + $0x50] sm:$0xff]
        %v347 = vld [vmem:[%s292 + $0x58] sm:$0xff]
        %v348 = vld [vmem:[%s292 + $0x60] sm:$0xff]
        %v349 = vld [vmem:[%s292 + $0x68] sm:$0xff]
        %v350 = vld [vmem:[%s292 + $0x70] sm:$0xff]
        %v351 = vld [vmem:[%s292 + $0x78] sm:$0xff]
        %v352 = vpack.c.bf16 %v337, %v336
        %v353 = vpack.c.bf16 %v339, %v338
        %v354 = vpack.c.bf16 %v341, %v340
        %v355 = vpack.c.bf16 %v343, %v342
        %v356 = vpack.c.bf16 %v345, %v344
        %v357 = vpack.c.bf16 %v347, %v346
        %v358 = vpack.c.bf16 %v349, %v348
        %v359 = vpack.c.bf16 %v351, %v350
        %v360 = vld [vmem:[#allocation5] sm:$0xff]
        %v361 = vld [vmem:[#allocation5 + $0x8] sm:$0xf]
        %v362 = vld [vmem:[#allocation5 + $0xc] sm:$0xff]
        %v363 = vld [vmem:[#allocation5 + $0x14] sm:$0xf]
        %v364 = vld [vmem:[#allocation5 + $0x18] sm:$0xff]
        %v365 = vld [vmem:[#allocation5 + $0x20] sm:$0xf]
        %v366 = vld [vmem:[#allocation5 + $0x24] sm:$0xff]
        %v367 = vld [vmem:[#allocation5 + $0x2c] sm:$0xf]
        %v368 = vld [vmem:[#allocation5 + $0x30] sm:$0xff]
        %v369 = vld [vmem:[#allocation5 + $0x38] sm:$0xf]
        %v370 = vld [vmem:[#allocation5 + $0x3c] sm:$0xff]
        %v371 = vld [vmem:[#allocation5 + $0x44] sm:$0xf]
        %v372 = vld [vmem:[#allocation5 + $0x48] sm:$0xff]
        %v373 = vld [vmem:[#allocation5 + $0x50] sm:$0xf]
        %v374 = vld [vmem:[#allocation5 + $0x54] sm:$0xff]
        %v375 = vld [vmem:[#allocation5 + $0x5c] sm:$0xf]
        %v376 = vld [vmem:[#allocation5 + $0x60] sm:$0xff]
        %v377 = vld [vmem:[#allocation5 + $0x68] sm:$0xf]
        %v378 = vld [vmem:[#allocation5 + $0x6c] sm:$0xff]
        %v379 = vld [vmem:[#allocation5 + $0x74] sm:$0xf]
        %v380 = vld [vmem:[#allocation5 + $0x78] sm:$0xff]
        %v381 = vld [vmem:[#allocation5 + $0x80] sm:$0xf]
        %v382 = vld [vmem:[#allocation5 + $0x84] sm:$0xff]
        %v383 = vld [vmem:[#allocation5 + $0x8c] sm:$0xf]
        %v384 = vld [vmem:[#allocation5 + $0x90] sm:$0xff]
        %v385 = vld [vmem:[#allocation5 + $0x98] sm:$0xf]
        %v386 = vld [vmem:[#allocation5 + $0x9c] sm:$0xff]
        %v387 = vld [vmem:[#allocation5 + $0xa4] sm:$0xf]
        %v388 = vld [vmem:[#allocation5 + $0xa8] sm:$0xff]
        %v389 = vld [vmem:[#allocation5 + $0xb0] sm:$0xf]
        %v390 = vld [vmem:[#allocation5 + $0xb4] sm:$0xff]
        %v391 = vld [vmem:[#allocation5 + $0xbc] sm:$0xf]
        %v392 = vld [vmem:[%s2] sm:$0x7]
        %v394 = vlaneseq
        %v395 = vshrl.u32 %v394, 7
        %v396 = vsub.s32 0, %v395
        %v397 = vrot.slane %v392, %v396
        %v398 = vlaneseq
        %v399 = vshrl.u32 %v398, 7
        %v400 = vsub.s32 1, %v399
        %v401 = vrot.slane %v392, %v400
        %v402 = vlaneseq
        %v403 = vshrl.u32 %v402, 7
        %v404 = vsub.s32 2, %v403
        %v405 = vrot.slane %v392, %v404
        %v441 = vunpack.c.l.b16 %v360
        %v442 = vunpack.c.h.b16 %v360
        %v443 = vunpack.c.l.b16 %v361
        %v444 = vunpack.c.l.b16 %v362
        %v445 = vunpack.c.h.b16 %v362
        %v446 = vunpack.c.l.b16 %v363
        %v447 = vunpack.c.l.b16 %v364
        %v448 = vunpack.c.h.b16 %v364
        %v449 = vunpack.c.l.b16 %v365
        %v450 = vunpack.c.l.b16 %v366
        %v451 = vunpack.c.h.b16 %v366
        %v452 = vunpack.c.l.b16 %v367
        %v453 = vunpack.c.l.b16 %v368
        %v454 = vunpack.c.h.b16 %v368
        %v455 = vunpack.c.l.b16 %v369
        %v456 = vunpack.c.l.b16 %v370
        %v457 = vunpack.c.h.b16 %v370
        %v458 = vunpack.c.l.b16 %v371
        %v459 = vunpack.c.l.b16 %v372
        %v460 = vunpack.c.h.b16 %v372
        %v461 = vunpack.c.l.b16 %v373
        %v462 = vunpack.c.l.b16 %v374
        %v463 = vunpack.c.h.b16 %v374
        %v464 = vunpack.c.l.b16 %v375
        %v465 = vunpack.c.l.b16 %v376
        %v466 = vunpack.c.h.b16 %v376
        %v467 = vunpack.c.l.b16 %v377
        %v468 = vunpack.c.l.b16 %v378
        %v469 = vunpack.c.h.b16 %v378
        %v470 = vunpack.c.l.b16 %v379
        %v471 = vunpack.c.l.b16 %v380
        %v472 = vunpack.c.h.b16 %v380
        %v473 = vunpack.c.l.b16 %v381
        %v474 = vunpack.c.l.b16 %v382
        %v475 = vunpack.c.h.b16 %v382
        %v476 = vunpack.c.l.b16 %v383
        %v477 = vunpack.c.l.b16 %v384
        %v478 = vunpack.c.h.b16 %v384
        %v479 = vunpack.c.l.b16 %v385
        %v480 = vunpack.c.l.b16 %v386
        %v481 = vunpack.c.h.b16 %v386
        %v482 = vunpack.c.l.b16 %v387
        %v483 = vunpack.c.l.b16 %v388
        %v484 = vunpack.c.h.b16 %v388
        %v485 = vunpack.c.l.b16 %v389
        %v486 = vunpack.c.l.b16 %v390
        %v487 = vunpack.c.h.b16 %v390
        %v488 = vunpack.c.l.b16 %v391
        %v489 = vpack.c.b16 %v444, %v441
        %v490 = vpack.c.b16 %v445, %v442
        %v491 = vpack.c.b16 %v446, %v443
        %v492 = vpack.c.b16 %v450, %v447
        %v493 = vpack.c.b16 %v451, %v448
        %v494 = vpack.c.b16 %v452, %v449
        %v495 = vpack.c.b16 %v456, %v453
        %v496 = vpack.c.b16 %v457, %v454
        %v497 = vpack.c.b16 %v458, %v455
        %v498 = vpack.c.b16 %v462, %v459
        %v499 = vpack.c.b16 %v463, %v460
        %v500 = vpack.c.b16 %v464, %v461
        %v501 = vpack.c.b16 %v468, %v465
        %v502 = vpack.c.b16 %v469, %v466
        %v503 = vpack.c.b16 %v470, %v467
        %v504 = vpack.c.b16 %v474, %v471
        %v505 = vpack.c.b16 %v475, %v472
        %v506 = vpack.c.b16 %v476, %v473
        %v507 = vpack.c.b16 %v480, %v477
        %v508 = vpack.c.b16 %v481, %v478
        %v509 = vpack.c.b16 %v482, %v479
        %v510 = vpack.c.b16 %v486, %v483
        %v511 = vpack.c.b16 %v487, %v484
        %v512 = vpack.c.b16 %v488, %v485
        %537 = vmatprep.subr.bf16.mxu0 %v490
        %538 = vmatpush1.bf16.msra.mxu0 %v489
        %539 = vmatprep.subr.bf16.mxu0 %v493
        %540 = vmatpush1.bf16.msra.mxu0 %v492
        %541 = vmatprep.subr.bf16.mxu0 %v496
        %542 = vmatpush1.bf16.msra.mxu0 %v495
        %543 = vmatprep.subr.bf16.mxu0 %v499
        %544 = vmatpush1.bf16.msra.mxu0 %v498
        %545 = vmatprep.subr.bf16.mxu0 %v502
        %546 = vmatpush1.bf16.msra.mxu0 %v501
        %547 = vmatprep.subr.bf16.mxu0 %v505
        %548 = vmatpush1.bf16.msra.mxu0 %v504
        %549 = vmatprep.subr.bf16.mxu0 %v508
        %550 = vmatpush1.bf16.msra.mxu0 %v507
        %551 = vmatprep.subr.bf16.mxu0 %v511
        %552 = vmatpush1.bf16.msra.mxu0 %v510
        %553 = vmatprep.subr.bf16.mxu0 0
        %554 = vmatpush1.bf16.msra.mxu0 0
        %555 = vmatprep.subr.bf16.mxu0 0
        %556 = vmatpush1.bf16.msra.mxu0 0
        %557 = vmatprep.subr.bf16.mxu0 0
        %558 = vmatpush1.bf16.msra.mxu0 0
        %559 = vmatprep.subr.bf16.mxu0 0
        %560 = vmatpush1.bf16.msra.mxu0 0
        %561 = vmatprep.subr.bf16.mxu0 0
        %562 = vmatpush1.bf16.msra.mxu0 0
        %563 = vmatprep.subr.bf16.mxu0 0
        %564 = vmatpush1.bf16.msra.mxu0 0
        %565 = vmatprep.subr.bf16.mxu0 0
        %566 = vmatpush1.bf16.msra.mxu0 0
        %567 = vmatprep.subr.bf16.mxu0 0
        %568 = vmatpush1.bf16.msra.mxu0 0
        %569 = vmatprep.mubr.bf16.mxu0 0
        %570 = vmatmul.mubr.bf16.gmra.mrb[0].mxu0 %v352
        %v571 = vpop.f32.mrb[0].mxu0
        %v572 = vadd.f32 %v397, %v571
        %v573 = vpop.f32.mrb[0].mxu0
        %v574 = vadd.f32 %v401, %v573
        %v575 = vpop.f32.mrb[0].mxu0
        %v576 = vadd.f32 %v397, %v575
        %v577 = vpop.f32.mrb[0].mxu0
        %v578 = vadd.f32 %v401, %v577
        %579 = vmatprep.mubr.bf16.mxu0 0
        %580 = vmatmul.mubr.bf16.gmra.mrb[0].mxu0 %v353
        %v581 = vpop.f32.mrb[0].mxu0
        %v582 = vadd.f32 %v397, %v581
        %v583 = vpop.f32.mrb[0].mxu0
        %v584 = vadd.f32 %v401, %v583
        %v585 = vpop.f32.mrb[0].mxu0
        %v586 = vadd.f32 %v397, %v585
        %v587 = vpop.f32.mrb[0].mxu0
        %v588 = vadd.f32 %v401, %v587
        %589 = vmatprep.mubr.bf16.mxu0 0
        %590 = vmatmul.mubr.bf16.gmra.mrb[0].mxu0 %v354
        %v591 = vpop.f32.mrb[0].mxu0
        %v592 = vadd.f32 %v397, %v591
        %v593 = vpop.f32.mrb[0].mxu0
        %v594 = vadd.f32 %v401, %v593
        %v595 = vpop.f32.mrb[0].mxu0
        %v596 = vadd.f32 %v397, %v595
        %v597 = vpop.f32.mrb[0].mxu0
        %v598 = vadd.f32 %v401, %v597
        %599 = vmatprep.mubr.bf16.mxu0 0
        %600 = vmatmul.mubr.bf16.gmra.mrb[0].mxu0 %v355
        %v601 = vpop.f32.mrb[0].mxu0
        %v602 = vadd.f32 %v397, %v601
        %v603 = vpop.f32.mrb[0].mxu0
        %v604 = vadd.f32 %v401, %v603
        %v605 = vpop.f32.mrb[0].mxu0
        %v606 = vadd.f32 %v397, %v605
        %v607 = vpop.f32.mrb[0].mxu0
        %v608 = vadd.f32 %v401, %v607
        %609 = vmatprep.mubr.bf16.mxu0 0
        %610 = vmatmul.mubr.bf16.gmra.mrb[0].mxu0 %v356
        %v611 = vpop.f32.mrb[0].mxu0
        %v612 = vadd.f32 %v397, %v611
        %v613 = vpop.f32.mrb[0].mxu0
        %v614 = vadd.f32 %v401, %v613
        %v615 = vpop.f32.mrb[0].mxu0
        %v616 = vadd.f32 %v397, %v615
        %v617 = vpop.f32.mrb[0].mxu0
        %v618 = vadd.f32 %v401, %v617
        %619 = vmatprep.mubr.bf16.mxu0 0
        %620 = vmatmul.mubr.bf16.gmra.mrb[0].mxu0 %v357
        %v621 = vpop.f32.mrb[0].mxu0
        %v622 = vadd.f32 %v397, %v621
        %v623 = vpop.f32.mrb[0].mxu0
        %v624 = vadd.f32 %v401, %v623
        %v625 = vpop.f32.mrb[0].mxu0
        %v626 = vadd.f32 %v397, %v625
        %v627 = vpop.f32.mrb[0].mxu0
        %v628 = vadd.f32 %v401, %v627
        %629 = vmatprep.mubr.bf16.mxu0 0
        %630 = vmatmul.mubr.bf16.gmra.mrb[0].mxu0 %v358
        %v631 = vpop.f32.mrb[0].mxu0
        %v632 = vadd.f32 %v397, %v631
        %v633 = vpop.f32.mrb[0].mxu0
        %v634 = vadd.f32 %v401, %v633
        %v635 = vpop.f32.mrb[0].mxu0
        %v636 = vadd.f32 %v397, %v635
        %v637 = vpop.f32.mrb[0].mxu0
        %v638 = vadd.f32 %v401, %v637
        %639 = vmatprep.mubr.bf16.mxu0 0
        %640 = vmatmul.mubr.bf16.gmra.mrb[0].mxu0 %v359
        %v641 = vpop.f32.mrb[0].mxu0
        %v642 = vadd.f32 %v397, %v641
        %v643 = vpop.f32.mrb[0].mxu0
        %v644 = vadd.f32 %v401, %v643
        %v645 = vpop.f32.mrb[0].mxu0
        %v646 = vadd.f32 %v397, %v645
        %v647 = vpop.f32.mrb[0].mxu0
        %v648 = vadd.f32 %v401, %v647
        %649 = vdwg.mxu0
        %650 = vmatprep.subr.bf16.mxu0 0
        %651 = vmatpush1.bf16.msra.mxu0 %v491
        %652 = vmatprep.subr.bf16.mxu0 0
        %653 = vmatpush1.bf16.msra.mxu0 %v494
        %654 = vmatprep.subr.bf16.mxu0 0
        %655 = vmatpush1.bf16.msra.mxu0 %v497
        %656 = vmatprep.subr.bf16.mxu0 0
        %657 = vmatpush1.bf16.msra.mxu0 %v500
        %658 = vmatprep.subr.bf16.mxu0 0
        %659 = vmatpush1.bf16.msra.mxu0 %v503
        %660 = vmatprep.subr.bf16.mxu0 0
        %661 = vmatpush1.bf16.msra.mxu0 %v506
        %662 = vmatprep.subr.bf16.mxu0 0
        %663 = vmatpush1.bf16.msra.mxu0 %v509
        %664 = vmatprep.subr.bf16.mxu0 0
        %665 = vmatpush1.bf16.msra.mxu0 %v512
        %666 = vmatprep.subr.bf16.mxu0 0
        %667 = vmatpush1.bf16.msra.mxu0 0
        %668 = vmatprep.subr.bf16.mxu0 0
        %669 = vmatpush1.bf16.msra.mxu0 0
        %670 = vmatprep.subr.bf16.mxu0 0
        %671 = vmatpush1.bf16.msra.mxu0 0
        %672 = vmatprep.subr.bf16.mxu0 0
        %673 = vmatpush1.bf16.msra.mxu0 0
        %674 = vmatprep.subr.bf16.mxu0 0
        %675 = vmatpush1.bf16.msra.mxu0 0
        %676 = vmatprep.subr.bf16.mxu0 0
        %677 = vmatpush1.bf16.msra.mxu0 0
        %678 = vmatprep.subr.bf16.mxu0 0
        %679 = vmatpush1.bf16.msra.mxu0 0
        %680 = vmatprep.subr.bf16.mxu0 0
        %681 = vmatpush1.bf16.msra.mxu0 0
        %682 = vmatprep.mubr.bf16.mxu0 0
        %683 = vmatmul.mubr.bf16.gmra.mrb[0].mxu0 %v352
        %v684 = vpop.f32.mrb[0].mxu0
        %v685 = vadd.f32 %v405, %v684
        %v686 = vpop.f32.mrb[0].mxu0
        %v687 = vpop.f32.mrb[0].mxu0
        %v688 = vadd.f32 %v405, %v687
        %v689 = vpop.f32.mrb[0].mxu0
        %690 = vmatprep.mubr.bf16.mxu0 0
        %691 = vmatmul.mubr.bf16.gmra.mrb[0].mxu0 %v353
        %v692 = vpop.f32.mrb[0].mxu0
        %v693 = vadd.f32 %v405, %v692
        %v694 = vpop.f32.mrb[0].mxu0
        %v695 = vpop.f32.mrb[0].mxu0
        %v696 = vadd.f32 %v405, %v695
        %v697 = vpop.f32.mrb[0].mxu0
        %698 = vmatprep.mubr.bf16.mxu0 0
        %699 = vmatmul.mubr.bf16.gmra.mrb[0].mxu0 %v354
        %v700 = vpop.f32.mrb[0].mxu0
        %v701 = vadd.f32 %v405, %v700
        %v702 = vpop.f32.mrb[0].mxu0
        %v703 = vpop.f32.mrb[0].mxu0
        %v704 = vadd.f32 %v405, %v703
        %v705 = vpop.f32.mrb[0].mxu0
        %706 = vmatprep.mubr.bf16.mxu0 0
        %707 = vmatmul.mubr.bf16.gmra.mrb[0].mxu0 %v355
        %v708 = vpop.f32.mrb[0].mxu0
        %v709 = vadd.f32 %v405, %v708
        %v710 = vpop.f32.mrb[0].mxu0
        %v711 = vpop.f32.mrb[0].mxu0
        %v712 = vadd.f32 %v405, %v711
        %v713 = vpop.f32.mrb[0].mxu0
        %714 = vmatprep.mubr.bf16.mxu0 0
        %715 = vmatmul.mubr.bf16.gmra.mrb[0].mxu0 %v356
        %v716 = vpop.f32.mrb[0].mxu0
        %v717 = vadd.f32 %v405, %v716
        %v718 = vpop.f32.mrb[0].mxu0
        %v719 = vpop.f32.mrb[0].mxu0
        %v720 = vadd.f32 %v405, %v719
        %v721 = vpop.f32.mrb[0].mxu0
        %722 = vmatprep.mubr.bf16.mxu0 0
        %723 = vmatmul.mubr.bf16.gmra.mrb[0].mxu0 %v357
        %v724 = vpop.f32.mrb[0].mxu0
        %v725 = vadd.f32 %v405, %v724
        %v726 = vpop.f32.mrb[0].mxu0
        %v727 = vpop.f32.mrb[0].mxu0
        %v728 = vadd.f32 %v405, %v727
        %v729 = vpop.f32.mrb[0].mxu0
        %730 = vmatprep.mubr.bf16.mxu0 0
        %731 = vmatmul.mubr.bf16.gmra.mrb[0].mxu0 %v358
        %v732 = vpop.f32.mrb[0].mxu0
        %v733 = vadd.f32 %v405, %v732
        %v734 = vpop.f32.mrb[0].mxu0
        %v735 = vpop.f32.mrb[0].mxu0
        %v736 = vadd.f32 %v405, %v735
        %v737 = vpop.f32.mrb[0].mxu0
        %738 = vmatprep.mubr.bf16.mxu0 0
        %739 = vmatmul.mubr.bf16.gmra.mrb[0].mxu0 %v359
        %v740 = vpop.f32.mrb[0].mxu0
        %v741 = vadd.f32 %v405, %v740
        %v742 = vpop.f32.mrb[0].mxu0
        %v743 = vpop.f32.mrb[0].mxu0
        %v744 = vadd.f32 %v405, %v743
        %v745 = vpop.f32.mrb[0].mxu0
        %746 = vdwg.mxu0
        %v747 = vld [vmem:[#allocation8] sm:$0xff]
        %v748 = vld [vmem:[#allocation8 + $0x8] sm:$0xff]
        %v749 = vld [vmem:[#allocation8 + $0x10] sm:$0xff]
        %v750 = vld [vmem:[#allocation8 + $0x18] sm:$0xff]
        %v751 = vld [vmem:[#allocation8 + $0x20] sm:$0xff]
        %v752 = vld [vmem:[#allocation8 + $0x28] sm:$0xff]
        %v753 = vld [vmem:[#allocation8 + $0x30] sm:$0xff]
        %v754 = vld [vmem:[#allocation8 + $0x38] sm:$0xff]
        %v755 = vld [vmem:[#allocation8 + $0x40] sm:$0xff]
        %v756 = vld [vmem:[#allocation8 + $0x48] sm:$0xff]
        %v757 = vld [vmem:[#allocation8 + $0x50] sm:$0xff]
        %v758 = vld [vmem:[#allocation8 + $0x58] sm:$0xff]
        %v759 = vld [vmem:[#allocation8 + $0x60] sm:$0xff]
        %v760 = vld [vmem:[#allocation8 + $0x68] sm:$0xff]
        %v761 = vld [vmem:[#allocation8 + $0x70] sm:$0xff]
        %v762 = vld [vmem:[#allocation8 + $0x78] sm:$0xff]
        %v763 = vld [vmem:[#allocation8 + $0x80] sm:$0xff]
        %v764 = vld [vmem:[#allocation8 + $0x88] sm:$0xff]
        %v765 = vld [vmem:[#allocation8 + $0x90] sm:$0xff]
        %v766 = vld [vmem:[#allocation8 + $0x98] sm:$0xff]
        %v767 = vld [vmem:[#allocation8 + $0xa0] sm:$0xff]
        %v768 = vld [vmem:[#allocation8 + $0xa8] sm:$0xff]
        %v769 = vld [vmem:[#allocation8 + $0xb0] sm:$0xff]
        %v770 = vld [vmem:[#allocation8 + $0xb8] sm:$0xff]
        %v771 = vld [vmem:[#allocation8 + $0xc0] sm:$0xff]
        %v772 = vld [vmem:[#allocation8 + $0xc8] sm:$0xff]
        %v773 = vld [vmem:[#allocation8 + $0xd0] sm:$0xff]
        %v774 = vld [vmem:[#allocation8 + $0xd8] sm:$0xff]
        %v775 = vld [vmem:[#allocation8 + $0xe0] sm:$0xff]
        %v776 = vld [vmem:[#allocation8 + $0xe8] sm:$0xff]
        %v777 = vld [vmem:[#allocation8 + $0xf0] sm:$0xff]
        %v778 = vld [vmem:[#allocation8 + $0xf8] sm:$0xff]
        %v779 = vpack.c.bf16 %v576, %v572
        %v780 = vpack.c.bf16 %v586, %v582
        %v781 = vpack.c.bf16 %v596, %v592
        %v782 = vpack.c.bf16 %v606, %v602
        %v783 = vpack.c.bf16 %v616, %v612
        %v784 = vpack.c.bf16 %v626, %v622
        %v785 = vpack.c.bf16 %v636, %v632
        %v786 = vpack.c.bf16 %v646, %v642
        %v787 = vpack.c.bf16 %v578, %v574
        %v788 = vpack.c.bf16 %v588, %v584
        %v789 = vpack.c.bf16 %v598, %v594
        %v790 = vpack.c.bf16 %v608, %v604
        %v791 = vpack.c.bf16 %v618, %v614
        %v792 = vpack.c.bf16 %v628, %v624
        %v793 = vpack.c.bf16 %v638, %v634
        %v794 = vpack.c.bf16 %v648, %v644
        %v795 = vpack.c.bf16 %v688, %v685
        %v796 = vpack.c.bf16 %v696, %v693
        %v797 = vpack.c.bf16 %v704, %v701
        %v798 = vpack.c.bf16 %v712, %v709
        %v799 = vpack.c.bf16 %v720, %v717
        %v800 = vpack.c.bf16 %v728, %v725
        %v801 = vpack.c.bf16 %v736, %v733
        %v802 = vpack.c.bf16 %v744, %v741
        %vm803 = vcmask 261120
        %v805 = vsel %vm803, %v779, 0
        %v808 = vsel %vm803, %v780, 0
        %v811 = vsel %vm803, %v781, 0
        %v814 = vsel %vm803, %v782, 0
        %v817 = vsel %vm803, %v787, 0
        %v820 = vsel %vm803, %v788, 0
        %v823 = vsel %vm803, %v789, 0
        %v826 = vsel %vm803, %v790, 0
        %828 = vmatprep.subr.bf16.mxu0 0
        %829 = vmatpush1.bf16.xpose.msra.mxu0 %v817
        %830 = vmatprep.subr.bf16.mxu0 0
        %831 = vmatpush1.bf16.xpose.msra.mxu0 %v820
        %832 = vmatprep.subr.bf16.mxu0 0
        %833 = vmatpush1.bf16.xpose.msra.mxu0 %v823
        %834 = vmatprep.subr.bf16.mxu0 0
        %835 = vmatpush1.bf16.xpose.msra.mxu0 %v826
        %836 = vmatprep.subr.bf16.mxu0 0
        %837 = vmatpush1.bf16.xpose.msra.mxu0 0
        %838 = vmatprep.subr.bf16.mxu0 0
        %839 = vmatpush1.bf16.xpose.msra.mxu0 0
        %840 = vmatprep.subr.bf16.mxu0 0
        %841 = vmatpush1.bf16.xpose.msra.mxu0 0
        %842 = vmatprep.subr.bf16.mxu0 0
        %843 = vmatpush1.bf16.xpose.msra.mxu0 0
        %844 = vmatprep.subr.bf16.mxu0 0
        %845 = vmatpush1.bf16.xpose.msra.mxu0 0
        %846 = vmatprep.subr.bf16.mxu0 0
        %847 = vmatpush1.bf16.xpose.msra.mxu0 0
        %848 = vmatprep.subr.bf16.mxu0 0
        %849 = vmatpush1.bf16.xpose.msra.mxu0 0
        %850 = vmatprep.subr.bf16.mxu0 0
        %851 = vmatpush1.bf16.xpose.msra.mxu0 0
        %852 = vmatprep.subr.bf16.mxu0 0
        %853 = vmatpush1.bf16.xpose.msra.mxu0 0
        %854 = vmatprep.subr.bf16.mxu0 0
        %855 = vmatpush1.bf16.xpose.msra.mxu0 0
        %856 = vmatprep.subr.bf16.mxu0 0
        %857 = vmatpush1.bf16.xpose.msra.mxu0 0
        %858 = vmatprep.subr.bf16.mxu0 0
        %859 = vmatpush1.bf16.xpose.msra.mxu0 0
        %860 = vmatprep.mubr.bf16.mxu0 0
        %861 = vmatmul.mubr.bf16.gmra.mrb[0].mxu0 %v805
        %v862 = vpop.f32.mrb[0].mxu0
        %v863 = vadd.f32 %v747, %v862
        %v864 = vpop.f32.mrb[0].mxu0
        %v865 = vpop.f32.mrb[0].mxu0
        %v866 = vadd.f32 %v748, %v865
        %v867 = vpop.f32.mrb[0].mxu0
        %868 = vmatprep.mubr.bf16.mxu0 0
        %869 = vmatmul.mubr.bf16.gmra.mrb[0].mxu0 %v808
        %v870 = vpop.f32.mrb[0].mxu0
        %v871 = vadd.f32 %v749, %v870
        %v872 = vpop.f32.mrb[0].mxu0
        %v873 = vpop.f32.mrb[0].mxu0
        %v874 = vadd.f32 %v750, %v873
        %v875 = vpop.f32.mrb[0].mxu0
        %876 = vmatprep.mubr.bf16.mxu0 0
        %877 = vmatmul.mubr.bf16.gmra.mrb[0].mxu0 %v811
        %v878 = vpop.f32.mrb[0].mxu0
        %v879 = vadd.f32 %v751, %v878
        %v880 = vpop.f32.mrb[0].mxu0
        %v881 = vpop.f32.mrb[0].mxu0
        %v882 = vadd.f32 %v752, %v881
        %v883 = vpop.f32.mrb[0].mxu0
        %884 = vmatprep.mubr.bf16.mxu0 0
        %885 = vmatmul.mubr.bf16.gmra.mrb[0].mxu0 %v814
        %v886 = vpop.f32.mrb[0].mxu0
        %v887 = vadd.f32 %v753, %v886
        %v888 = vpop.f32.mrb[0].mxu0
        %v889 = vpop.f32.mrb[0].mxu0
        %v890 = vadd.f32 %v754, %v889
        %v891 = vpop.f32.mrb[0].mxu0
        %892 = vdwg.mxu0
        %v894 = vsel %vm803, %v783, 0
        %v897 = vsel %vm803, %v784, 0
        %v900 = vsel %vm803, %v785, 0
        %v903 = vsel %vm803, %v786, 0
        %v906 = vsel %vm803, %v791, 0
        %v909 = vsel %vm803, %v792, 0
        %v912 = vsel %vm803, %v793, 0
        %v915 = vsel %vm803, %v794, 0
        %917 = vmatprep.subr.bf16.mxu0 0
        %918 = vmatpush1.bf16.xpose.msra.mxu0 %v906
        %919 = vmatprep.subr.bf16.mxu0 0
        %920 = vmatpush1.bf16.xpose.msra.mxu0 %v909
        %921 = vmatprep.subr.bf16.mxu0 0
        %922 = vmatpush1.bf16.xpose.msra.mxu0 %v912
        %923 = vmatprep.subr.bf16.mxu0 0
        %924 = vmatpush1.bf16.xpose.msra.mxu0 %v915
        %925 = vmatprep.subr.bf16.mxu0 0
        %926 = vmatpush1.bf16.xpose.msra.mxu0 0
        %927 = vmatprep.subr.bf16.mxu0 0
        %928 = vmatpush1.bf16.xpose.msra.mxu0 0
        %929 = vmatprep.subr.bf16.mxu0 0
        %930 = vmatpush1.bf16.xpose.msra.mxu0 0
        %931 = vmatprep.subr.bf16.mxu0 0
        %932 = vmatpush1.bf16.xpose.msra.mxu0 0
        %933 = vmatprep.subr.bf16.mxu0 0
        %934 = vmatpush1.bf16.xpose.msra.mxu0 0
        %935 = vmatprep.subr.bf16.mxu0 0
        %936 = vmatpush1.bf16.xpose.msra.mxu0 0
        %937 = vmatprep.subr.bf16.mxu0 0
        %938 = vmatpush1.bf16.xpose.msra.mxu0 0
        %939 = vmatprep.subr.bf16.mxu0 0
        %940 = vmatpush1.bf16.xpose.msra.mxu0 0
        %941 = vmatprep.subr.bf16.mxu0 0
        %942 = vmatpush1.bf16.xpose.msra.mxu0 0
        %943 = vmatprep.subr.bf16.mxu0 0
        %944 = vmatpush1.bf16.xpose.msra.mxu0 0
        %945 = vmatprep.subr.bf16.mxu0 0
        %946 = vmatpush1.bf16.xpose.msra.mxu0 0
        %947 = vmatprep.subr.bf16.mxu0 0
        %948 = vmatpush1.bf16.xpose.msra.mxu0 0
        %949 = vmatprep.mubr.bf16.mxu0 0
        %950 = vmatmul.mubr.bf16.gmra.mrb[0].mxu0 %v894
        %v951 = vpop.f32.mrb[0].mxu0
        %v952 = vadd.f32 %v747, %v951
        %v953 = vpop.f32.mrb[0].mxu0
        %v954 = vpop.f32.mrb[0].mxu0
        %v955 = vadd.f32 %v748, %v954
        %v956 = vpop.f32.mrb[0].mxu0
        %957 = vmatprep.mubr.bf16.mxu0 0
        %958 = vmatmul.mubr.bf16.gmra.mrb[0].mxu0 %v897
        %v959 = vpop.f32.mrb[0].mxu0
        %v960 = vadd.f32 %v749, %v959
        %v961 = vpop.f32.mrb[0].mxu0
        %v962 = vpop.f32.mrb[0].mxu0
        %v963 = vadd.f32 %v750, %v962
        %v964 = vpop.f32.mrb[0].mxu0
        %965 = vmatprep.mubr.bf16.mxu0 0
        %966 = vmatmul.mubr.bf16.gmra.mrb[0].mxu0 %v900
        %v967 = vpop.f32.mrb[0].mxu0
        %v968 = vadd.f32 %v751, %v967
        %v969 = vpop.f32.mrb[0].mxu0
        %v970 = vpop.f32.mrb[0].mxu0
        %v971 = vadd.f32 %v752, %v970
        %v972 = vpop.f32.mrb[0].mxu0
        %973 = vmatprep.mubr.bf16.mxu0 0
        %974 = vmatmul.mubr.bf16.gmra.mrb[0].mxu0 %v903
        %v975 = vpop.f32.mrb[0].mxu0
        %v976 = vadd.f32 %v753, %v975
        %v977 = vpop.f32.mrb[0].mxu0
        %v978 = vpop.f32.mrb[0].mxu0
        %v979 = vadd.f32 %v754, %v978
        %v980 = vpop.f32.mrb[0].mxu0
        %981 = vdwg.mxu0
        %vm982 = vcmask 523264
        %v983 = vsel %vm982, %v863, -inf
        %984 = vmax.xlane.f32.xlu0 %v983
        %v985 = vpop.xlane.xlu0 %984
        %v986 = vsel %vm982, %v866, -inf
        %987 = vmax.xlane.f32.xlu0 %v986
        %v988 = vpop.xlane.xlu0 %987
        %v989 = vsel %vm982, %v871, -inf
        %990 = vmax.xlane.f32.xlu0 %v989
        %v991 = vpop.xlane.xlu0 %990
        %v992 = vsel %vm982, %v874, -inf
        %993 = vmax.xlane.f32.xlu0 %v992
        %v994 = vpop.xlane.xlu0 %993
        %v995 = vsel %vm982, %v879, -inf
        %996 = vmax.xlane.f32.xlu0 %v995
        %v997 = vpop.xlane.xlu0 %996
        %v998 = vsel %vm982, %v882, -inf
        %999 = vmax.xlane.f32.xlu0 %v998
        %v1000 = vpop.xlane.xlu0 %999
        %v1001 = vsel %vm982, %v887, -inf
        %1002 = vmax.xlane.f32.xlu0 %v1001
        %v1003 = vpop.xlane.xlu0 %1002
        %v1004 = vsel %vm982, %v890, -inf
        %1005 = vmax.xlane.f32.xlu0 %v1004
        %v1006 = vpop.xlane.xlu0 %1005
        %v1007 = vsel %vm982, %v952, -inf
        %1008 = vmax.xlane.f32.xlu0 %v1007
        %v1009 = vpop.xlane.xlu0 %1008
        %v1010 = vsel %vm982, %v955, -inf
        %1011 = vmax.xlane.f32.xlu0 %v1010
        %v1012 = vpop.xlane.xlu0 %1011
        %v1013 = vsel %vm982, %v960, -inf
        %1014 = vmax.xlane.f32.xlu0 %v1013
        %v1015 = vpop.xlane.xlu0 %1014
        %v1016 = vsel %vm982, %v963, -inf
        %1017 = vmax.xlane.f32.xlu0 %v1016
        %v1018 = vpop.xlane.xlu0 %1017
        %v1019 = vsel %vm982, %v968, -inf
        %1020 = vmax.xlane.f32.xlu0 %v1019
        %v1021 = vpop.xlane.xlu0 %1020
        %v1022 = vsel %vm982, %v971, -inf
        %1023 = vmax.xlane.f32.xlu0 %v1022
        %v1024 = vpop.xlane.xlu0 %1023
        %v1025 = vsel %vm982, %v976, -inf
        %1026 = vmax.xlane.f32.xlu0 %v1025
        %v1027 = vpop.xlane.xlu0 %1026
        %v1028 = vsel %vm982, %v979, -inf
        %1029 = vmax.xlane.f32.xlu0 %v1028
        %v1030 = vpop.xlane.xlu0 %1029
        %v1031 = vsub.f32 %v863, %v985
        %v1032 = vsub.f32 %v866, %v988
        %v1033 = vsub.f32 %v871, %v991
        %v1034 = vsub.f32 %v874, %v994
        %v1035 = vsub.f32 %v879, %v997
        %v1036 = vsub.f32 %v882, %v1000
        %v1037 = vsub.f32 %v887, %v1003
        %v1038 = vsub.f32 %v890, %v1006
        %v1039 = vsub.f32 %v952, %v1009
        %v1040 = vsub.f32 %v955, %v1012
        %v1041 = vsub.f32 %v960, %v1015
        %v1042 = vsub.f32 %v963, %v1018
        %v1043 = vsub.f32 %v968, %v1021
        %v1044 = vsub.f32 %v971, %v1024
        %v1045 = vsub.f32 %v976, %v1027
        %v1046 = vsub.f32 %v979, %v1030
        %v1047 = vmul.f32 %v1031, 1.442695
        %v1048 = vpow.pop %v1047
        %v1049 = vmul.f32 %v1032, 1.442695
        %v1050 = vpow.pop %v1049
        %v1051 = vmul.f32 %v1033, 1.442695
        %v1052 = vpow.pop %v1051
        %v1053 = vmul.f32 %v1034, 1.442695
        %v1054 = vpow.pop %v1053
        %v1055 = vmul.f32 %v1035, 1.442695
        %v1056 = vpow.pop %v1055
        %v1057 = vmul.f32 %v1036, 1.442695
        %v1058 = vpow.pop %v1057
        %v1059 = vmul.f32 %v1037, 1.442695
        %v1060 = vpow.pop %v1059
        %v1061 = vmul.f32 %v1038, 1.442695
        %v1062 = vpow.pop %v1061
        %v1063 = vmul.f32 %v1039, 1.442695
        %v1064 = vpow.pop %v1063
        %v1065 = vmul.f32 %v1040, 1.442695
        %v1066 = vpow.pop %v1065
        %v1067 = vmul.f32 %v1041, 1.442695
        %v1068 = vpow.pop %v1067
        %v1069 = vmul.f32 %v1042, 1.442695
        %v1070 = vpow.pop %v1069
        %v1071 = vmul.f32 %v1043, 1.442695
        %v1072 = vpow.pop %v1071
        %v1073 = vmul.f32 %v1044, 1.442695
        %v1074 = vpow.pop %v1073
        %v1075 = vmul.f32 %v1045, 1.442695
        %v1076 = vpow.pop %v1075
        %v1077 = vmul.f32 %v1046, 1.442695
        %v1078 = vpow.pop %v1077
        %v1079 = vsel %vm982, %v1048, 0.0
        %1080 = vadd.xlane.f32.xlu0 %v1079
        %v1081 = vpop.xlane.xlu0 %1080
        %v1082 = vsel %vm982, %v1050, 0.0
        %1083 = vadd.xlane.f32.xlu0 %v1082
        %v1084 = vpop.xlane.xlu0 %1083
        %v1085 = vsel %vm982, %v1052, 0.0
        %1086 = vadd.xlane.f32.xlu0 %v1085
        %v1087 = vpop.xlane.xlu0 %1086
        %v1088 = vsel %vm982, %v1054, 0.0
        %1089 = vadd.xlane.f32.xlu0 %v1088
        %v1090 = vpop.xlane.xlu0 %1089
        %v1091 = vsel %vm982, %v1056, 0.0
        %1092 = vadd.xlane.f32.xlu0 %v1091
        %v1093 = vpop.xlane.xlu0 %1092
        %v1094 = vsel %vm982, %v1058, 0.0
        %1095 = vadd.xlane.f32.xlu0 %v1094
        %v1096 = vpop.xlane.xlu0 %1095
        %v1097 = vsel %vm982, %v1060, 0.0
        %1098 = vadd.xlane.f32.xlu0 %v1097
        %v1099 = vpop.xlane.xlu0 %1098
        %v1100 = vsel %vm982, %v1062, 0.0
        %1101 = vadd.xlane.f32.xlu0 %v1100
        %v1102 = vpop.xlane.xlu0 %1101
        %v1103 = vsel %vm982, %v1064, 0.0
        %1104 = vadd.xlane.f32.xlu0 %v1103
        %v1105 = vpop.xlane.xlu0 %1104
        %v1106 = vsel %vm982, %v1066, 0.0
        %1107 = vadd.xlane.f32.xlu0 %v1106
        %v1108 = vpop.xlane.xlu0 %1107
        %v1109 = vsel %vm982, %v1068, 0.0
        %1110 = vadd.xlane.f32.xlu0 %v1109
        %v1111 = vpop.xlane.xlu0 %1110
        %v1112 = vsel %vm982, %v1070, 0.0
        %1113 = vadd.xlane.f32.xlu0 %v1112
        %v1114 = vpop.xlane.xlu0 %1113
        %v1115 = vsel %vm982, %v1072, 0.0
        %1116 = vadd.xlane.f32.xlu0 %v1115
        %v1117 = vpop.xlane.xlu0 %1116
        %v1118 = vsel %vm982, %v1074, 0.0
        %1119 = vadd.xlane.f32.xlu0 %v1118
        %v1120 = vpop.xlane.xlu0 %1119
        %v1121 = vsel %vm982, %v1076, 0.0
        %1122 = vadd.xlane.f32.xlu0 %v1121
        %v1123 = vpop.xlane.xlu0 %1122
        %v1124 = vsel %vm982, %v1078, 0.0
        %1125 = vadd.xlane.f32.xlu0 %v1124
        %v1126 = vpop.xlane.xlu0 %1125
        %v1127 = vpack.c.bf16 %v1050, %v1048
        %v1128 = vpack.c.bf16 %v1054, %v1052
        %v1129 = vpack.c.bf16 %v1058, %v1056
        %v1130 = vpack.c.bf16 %v1062, %v1060
        %v1131 = vpack.c.bf16 %v1066, %v1064
        %v1132 = vpack.c.bf16 %v1070, %v1068
        %v1133 = vpack.c.bf16 %v1074, %v1072
        %v1134 = vpack.c.bf16 %v1078, %v1076
        %v1136 = vsel %vm982, %v1127, 0
        %v1139 = vsel %vm982, %v1128, 0
        %v1142 = vsel %vm982, %v1129, 0
        %v1145 = vsel %vm982, %v1130, 0
        %1147 = vmatprep.subr.bf16.mxu0 0
        %1148 = vmatpush1.bf16.msra.mxu0 %v795
        %1149 = vmatprep.subr.bf16.mxu0 0
        %1150 = vmatpush1.bf16.msra.mxu0 %v796
        %1151 = vmatprep.subr.bf16.mxu0 0
        %1152 = vmatpush1.bf16.msra.mxu0 %v797
        %1153 = vmatprep.subr.bf16.mxu0 0
        %1154 = vmatpush1.bf16.msra.mxu0 %v798
        %1155 = vmatprep.subr.bf16.mxu0 0
        %1156 = vmatpush1.bf16.msra.mxu0 0
        %1157 = vmatprep.subr.bf16.mxu0 0
        %1158 = vmatpush1.bf16.msra.mxu0 0
        %1159 = vmatprep.subr.bf16.mxu0 0
        %1160 = vmatpush1.bf16.msra.mxu0 0
        %1161 = vmatprep.subr.bf16.mxu0 0
        %1162 = vmatpush1.bf16.msra.mxu0 0
        %1163 = vmatprep.subr.bf16.mxu0 0
        %1164 = vmatpush1.bf16.msra.mxu0 0
        %1165 = vmatprep.subr.bf16.mxu0 0
        %1166 = vmatpush1.bf16.msra.mxu0 0
        %1167 = vmatprep.subr.bf16.mxu0 0
        %1168 = vmatpush1.bf16.msra.mxu0 0
        %1169 = vmatprep.subr.bf16.mxu0 0
        %1170 = vmatpush1.bf16.msra.mxu0 0
        %1171 = vmatprep.subr.bf16.mxu0 0
        %1172 = vmatpush1.bf16.msra.mxu0 0
        %1173 = vmatprep.subr.bf16.mxu0 0
        %1174 = vmatpush1.bf16.msra.mxu0 0
        %1175 = vmatprep.subr.bf16.mxu0 0
        %1176 = vmatpush1.bf16.msra.mxu0 0
        %1177 = vmatprep.subr.bf16.mxu0 0
        %1178 = vmatpush1.bf16.msra.mxu0 0
        %1179 = vmatprep.mubr.bf16.mxu0 0
        %1180 = vmatmul.mubr.bf16.gmra.mrb[0].mxu0 %v1136
        %v1181 = vpop.f32.mrb[0].mxu0
        %v1182 = vadd.f32 0.0, %v1181
        %v1183 = vpop.f32.mrb[0].mxu0
        %v1184 = vpop.f32.mrb[0].mxu0
        %v1185 = vadd.f32 0.0, %v1184
        %v1186 = vpop.f32.mrb[0].mxu0
        %1187 = vmatprep.mubr.bf16.mxu0 0
        %1188 = vmatmul.mubr.bf16.gmra.mrb[0].mxu0 %v1139
        %v1189 = vpop.f32.mrb[0].mxu0
        %v1190 = vadd.f32 0.0, %v1189
        %v1191 = vpop.f32.mrb[0].mxu0
        %v1192 = vpop.f32.mrb[0].mxu0
        %v1193 = vadd.f32 0.0, %v1192
        %v1194 = vpop.f32.mrb[0].mxu0
        %1195 = vmatprep.mubr.bf16.mxu0 0
        %1196 = vmatmul.mubr.bf16.gmra.mrb[0].mxu0 %v1142
        %v1197 = vpop.f32.mrb[0].mxu0
        %v1198 = vadd.f32 0.0, %v1197
        %v1199 = vpop.f32.mrb[0].mxu0
        %v1200 = vpop.f32.mrb[0].mxu0
        %v1201 = vadd.f32 0.0, %v1200
        %v1202 = vpop.f32.mrb[0].mxu0
        %1203 = vmatprep.mubr.bf16.mxu0 0
        %1204 = vmatmul.mubr.bf16.gmra.mrb[0].mxu0 %v1145
        %v1205 = vpop.f32.mrb[0].mxu0
        %v1206 = vadd.f32 0.0, %v1205
        %v1207 = vpop.f32.mrb[0].mxu0
        %v1208 = vpop.f32.mrb[0].mxu0
        %v1209 = vadd.f32 0.0, %v1208
        %v1210 = vpop.f32.mrb[0].mxu0
        %1211 = vdwg.mxu0
        %v1213 = vsel %vm982, %v1131, 0
        %v1216 = vsel %vm982, %v1132, 0
        %v1219 = vsel %vm982, %v1133, 0
        %v1222 = vsel %vm982, %v1134, 0
        %1224 = vmatprep.subr.bf16.mxu0 0
        %1225 = vmatpush1.bf16.msra.mxu0 %v799
        %1226 = vmatprep.subr.bf16.mxu0 0
        %1227 = vmatpush1.bf16.msra.mxu0 %v800
        %1228 = vmatprep.subr.bf16.mxu0 0
        %1229 = vmatpush1.bf16.msra.mxu0 %v801
        %1230 = vmatprep.subr.bf16.mxu0 0
        %1231 = vmatpush1.bf16.msra.mxu0 %v802
        %1232 = vmatprep.subr.bf16.mxu0 0
        %1233 = vmatpush1.bf16.msra.mxu0 0
        %1234 = vmatprep.subr.bf16.mxu0 0
        %1235 = vmatpush1.bf16.msra.mxu0 0
        %1236 = vmatprep.subr.bf16.mxu0 0
        %1237 = vmatpush1.bf16.msra.mxu0 0
        %1238 = vmatprep.subr.bf16.mxu0 0
        %1239 = vmatpush1.bf16.msra.mxu0 0
        %1240 = vmatprep.subr.bf16.mxu0 0
        %1241 = vmatpush1.bf16.msra.mxu0 0
        %1242 = vmatprep.subr.bf16.mxu0 0
        %1243 = vmatpush1.bf16.msra.mxu0 0
        %1244 = vmatprep.subr.bf16.mxu0 0
        %1245 = vmatpush1.bf16.msra.mxu0 0
        %1246 = vmatprep.subr.bf16.mxu0 0
        %1247 = vmatpush1.bf16.msra.mxu0 0
        %1248 = vmatprep.subr.bf16.mxu0 0
        %1249 = vmatpush1.bf16.msra.mxu0 0
        %1250 = vmatprep.subr.bf16.mxu0 0
        %1251 = vmatpush1.bf16.msra.mxu0 0
        %1252 = vmatprep.subr.bf16.mxu0 0
        %1253 = vmatpush1.bf16.msra.mxu0 0
        %1254 = vmatprep.subr.bf16.mxu0 0
        %1255 = vmatpush1.bf16.msra.mxu0 0
        %1256 = vmatprep.mubr.bf16.mxu0 0
        %1257 = vmatmul.mubr.bf16.gmra.mrb[0].mxu0 %v1213
        %v1258 = vpop.f32.mrb[0].mxu0
        %v1259 = vadd.f32 0.0, %v1258
        %v1260 = vpop.f32.mrb[0].mxu0
        %v1261 = vpop.f32.mrb[0].mxu0
        %v1262 = vadd.f32 0.0, %v1261
        %v1263 = vpop.f32.mrb[0].mxu0
        %1264 = vmatprep.mubr.bf16.mxu0 0
        %1265 = vmatmul.mubr.bf16.gmra.mrb[0].mxu0 %v1216
        %v1266 = vpop.f32.mrb[0].mxu0
        %v1267 = vadd.f32 0.0, %v1266
        %v1268 = vpop.f32.mrb[0].mxu0
        %v1269 = vpop.f32.mrb[0].mxu0
        %v1270 = vadd.f32 0.0, %v1269
        %v1271 = vpop.f32.mrb[0].mxu0
        %1272 = vmatprep.mubr.bf16.mxu0 0
        %1273 = vmatmul.mubr.bf16.gmra.mrb[0].mxu0 %v1219
        %v1274 = vpop.f32.mrb[0].mxu0
        %v1275 = vadd.f32 0.0, %v1274
        %v1276 = vpop.f32.mrb[0].mxu0
        %v1277 = vpop.f32.mrb[0].mxu0
        %v1278 = vadd.f32 0.0, %v1277
        %v1279 = vpop.f32.mrb[0].mxu0
        %1280 = vmatprep.mubr.bf16.mxu0 0
        %1281 = vmatmul.mubr.bf16.gmra.mrb[0].mxu0 %v1222
        %v1282 = vpop.f32.mrb[0].mxu0
        %v1283 = vadd.f32 0.0, %v1282
        %v1284 = vpop.f32.mrb[0].mxu0
        %v1285 = vpop.f32.mrb[0].mxu0
        %v1286 = vadd.f32 0.0, %v1285
        %v1287 = vpop.f32.mrb[0].mxu0
        %1288 = vdwg.mxu0
        %v1289 = vrcp.pop %v1081
        %v1290 = vrcp.pop %v1084
        %v1291 = vrcp.pop %v1087
        %v1292 = vrcp.pop %v1090
        %v1293 = vrcp.pop %v1093
        %v1294 = vrcp.pop %v1096
        %v1295 = vrcp.pop %v1099
        %v1296 = vrcp.pop %v1102
        %v1297 = vrcp.pop %v1105
        %v1298 = vrcp.pop %v1108
        %v1299 = vrcp.pop %v1111
        %v1300 = vrcp.pop %v1114
        %v1301 = vrcp.pop %v1117
        %v1302 = vrcp.pop %v1120
        %v1303 = vrcp.pop %v1123
        %v1304 = vrcp.pop %v1126
        %v1305 = vmul.f32 %v1182, %v1289
        %v1306 = vmul.f32 %v1185, %v1290
        %v1307 = vmul.f32 %v1190, %v1291
        %v1308 = vmul.f32 %v1193, %v1292
        %v1309 = vmul.f32 %v1198, %v1293
        %v1310 = vmul.f32 %v1201, %v1294
        %v1311 = vmul.f32 %v1206, %v1295
        %v1312 = vmul.f32 %v1209, %v1296
        %v1313 = vmul.f32 %v1259, %v1297
        %v1314 = vmul.f32 %v1262, %v1298
        %v1315 = vmul.f32 %v1267, %v1299
        %v1316 = vmul.f32 %v1270, %v1300
        %v1317 = vmul.f32 %v1275, %v1301
        %v1318 = vmul.f32 %v1278, %v1302
        %v1319 = vmul.f32 %v1283, %v1303
        %v1320 = vmul.f32 %v1286, %v1304
        %1325 = vrot.lane.b32.xlu0 %v779, 96
        %v1326 = vpop.permute.xlu0 %1325
        %1327 = vrot.lane.b32.xlu0 %v780, 96
        %v1328 = vpop.permute.xlu0 %1327
        %1329 = vrot.lane.b32.xlu0 %v781, 96
        %v1330 = vpop.permute.xlu0 %1329
        %1331 = vrot.lane.b32.xlu0 %v782, 96
        %v1332 = vpop.permute.xlu0 %1331
        %1337 = vrot.lane.b32.xlu0 %v787, 96
        %v1338 = vpop.permute.xlu0 %1337
        %1339 = vrot.lane.b32.xlu0 %v788, 96
        %v1340 = vpop.permute.xlu0 %1339
        %1341 = vrot.lane.b32.xlu0 %v789, 96
        %v1342 = vpop.permute.xlu0 %1341
        %1343 = vrot.lane.b32.xlu0 %v790, 96
        %v1344 = vpop.permute.xlu0 %1343
        %v1346 = vsel %vm803, %v1326, 0
        %v1349 = vsel %vm803, %v1328, 0
        %v1352 = vsel %vm803, %v1330, 0
        %v1355 = vsel %vm803, %v1332, 0
        %v1358 = vsel %vm803, %v1338, 0
        %v1361 = vsel %vm803, %v1340, 0
        %v1364 = vsel %vm803, %v1342, 0
        %v1367 = vsel %vm803, %v1344, 0
        %1369 = vmatprep.subr.bf16.mxu0 0
        %1370 = vmatpush1.bf16.xpose.msra.mxu0 %v1358
        %1371 = vmatprep.subr.bf16.mxu0 0
        %1372 = vmatpush1.bf16.xpose.msra.mxu0 %v1361
        %1373 = vmatprep.subr.bf16.mxu0 0
        %1374 = vmatpush1.bf16.xpose.msra.mxu0 %v1364
        %1375 = vmatprep.subr.bf16.mxu0 0
        %1376 = vmatpush1.bf16.xpose.msra.mxu0 %v1367
        %1377 = vmatprep.subr.bf16.mxu0 0
        %1378 = vmatpush1.bf16.xpose.msra.mxu0 0
        %1379 = vmatprep.subr.bf16.mxu0 0
        %1380 = vmatpush1.bf16.xpose.msra.mxu0 0
        %1381 = vmatprep.subr.bf16.mxu0 0
        %1382 = vmatpush1.bf16.xpose.msra.mxu0 0
        %1383 = vmatprep.subr.bf16.mxu0 0
        %1384 = vmatpush1.bf16.xpose.msra.mxu0 0
        %1385 = vmatprep.subr.bf16.mxu0 0
        %1386 = vmatpush1.bf16.xpose.msra.mxu0 0
        %1387 = vmatprep.subr.bf16.mxu0 0
        %1388 = vmatpush1.bf16.xpose.msra.mxu0 0
        %1389 = vmatprep.subr.bf16.mxu0 0
        %1390 = vmatpush1.bf16.xpose.msra.mxu0 0
        %1391 = vmatprep.subr.bf16.mxu0 0
        %1392 = vmatpush1.bf16.xpose.msra.mxu0 0
        %1393 = vmatprep.subr.bf16.mxu0 0
        %1394 = vmatpush1.bf16.xpose.msra.mxu0 0
        %1395 = vmatprep.subr.bf16.mxu0 0
        %1396 = vmatpush1.bf16.xpose.msra.mxu0 0
        %1397 = vmatprep.subr.bf16.mxu0 0
        %1398 = vmatpush1.bf16.xpose.msra.mxu0 0
        %1399 = vmatprep.subr.bf16.mxu0 0
        %1400 = vmatpush1.bf16.xpose.msra.mxu0 0
        %1401 = vmatprep.mubr.bf16.mxu0 0
        %1402 = vmatmul.mubr.bf16.gmra.mrb[0].mxu0 %v1346
        %v1403 = vpop.f32.mrb[0].mxu0
        %v1404 = vadd.f32 %v755, %v1403
        %v1405 = vpop.f32.mrb[0].mxu0
        %v1406 = vpop.f32.mrb[0].mxu0
        %v1407 = vadd.f32 %v756, %v1406
        %v1408 = vpop.f32.mrb[0].mxu0
        %1409 = vmatprep.mubr.bf16.mxu0 0
        %1410 = vmatmul.mubr.bf16.gmra.mrb[0].mxu0 %v1349
        %v1411 = vpop.f32.mrb[0].mxu0
        %v1412 = vadd.f32 %v757, %v1411
        %v1413 = vpop.f32.mrb[0].mxu0
        %v1414 = vpop.f32.mrb[0].mxu0
        %v1415 = vadd.f32 %v758, %v1414
        %v1416 = vpop.f32.mrb[0].mxu0
        %1417 = vmatprep.mubr.bf16.mxu0 0
        %1418 = vmatmul.mubr.bf16.gmra.mrb[0].mxu0 %v1352
        %v1419 = vpop.f32.mrb[0].mxu0
        %v1420 = vadd.f32 %v759, %v1419
        %v1421 = vpop.f32.mrb[0].mxu0
        %v1422 = vpop.f32.mrb[0].mxu0
        %v1423 = vadd.f32 %v760, %v1422
        %v1424 = vpop.f32.mrb[0].mxu0
        %1425 = vmatprep.mubr.bf16.mxu0 0
        %1426 = vmatmul.mubr.bf16.gmra.mrb[0].mxu0 %v1355
        %v1427 = vpop.f32.mrb[0].mxu0
        %v1428 = vadd.f32 %v761, %v1427
        %v1429 = vpop.f32.mrb[0].mxu0
        %v1430 = vpop.f32.mrb[0].mxu0
        %v1431 = vadd.f32 %v762, %v1430
        %v1432 = vpop.f32.mrb[0].mxu0
        %1433 = vdwg.mxu0
        %1438 = vrot.lane.b32.xlu0 %v783, 96
        %v1439 = vpop.permute.xlu0 %1438
        %1440 = vrot.lane.b32.xlu0 %v784, 96
        %v1441 = vpop.permute.xlu0 %1440
        %1442 = vrot.lane.b32.xlu0 %v785, 96
        %v1443 = vpop.permute.xlu0 %1442
        %1444 = vrot.lane.b32.xlu0 %v786, 96
        %v1445 = vpop.permute.xlu0 %1444
        %1450 = vrot.lane.b32.xlu0 %v791, 96
        %v1451 = vpop.permute.xlu0 %1450
        %1452 = vrot.lane.b32.xlu0 %v792, 96
        %v1453 = vpop.permute.xlu0 %1452
        %1454 = vrot.lane.b32.xlu0 %v793, 96
        %v1455 = vpop.permute.xlu0 %1454
        %1456 = vrot.lane.b32.xlu0 %v794, 96
        %v1457 = vpop.permute.xlu0 %1456
        %v1459 = vsel %vm803, %v1439, 0
        %v1462 = vsel %vm803, %v1441, 0
        %v1465 = vsel %vm803, %v1443, 0
        %v1468 = vsel %vm803, %v1445, 0
        %v1471 = vsel %vm803, %v1451, 0
        %v1474 = vsel %vm803, %v1453, 0
        %v1477 = vsel %vm803, %v1455, 0
        %v1480 = vsel %vm803, %v1457, 0
        %1482 = vmatprep.subr.bf16.mxu0 0
        %1483 = vmatpush1.bf16.xpose.msra.mxu0 %v1471
        %1484 = vmatprep.subr.bf16.mxu0 0
        %1485 = vmatpush1.bf16.xpose.msra.mxu0 %v1474
        %1486 = vmatprep.subr.bf16.mxu0 0
        %1487 = vmatpush1.bf16.xpose.msra.mxu0 %v1477
        %1488 = vmatprep.subr.bf16.mxu0 0
        %1489 = vmatpush1.bf16.xpose.msra.mxu0 %v1480
        %1490 = vmatprep.subr.bf16.mxu0 0
        %1491 = vmatpush1.bf16.xpose.msra.mxu0 0
        %1492 = vmatprep.subr.bf16.mxu0 0
        %1493 = vmatpush1.bf16.xpose.msra.mxu0 0
        %1494 = vmatprep.subr.bf16.mxu0 0
        %1495 = vmatpush1.bf16.xpose.msra.mxu0 0
        %1496 = vmatprep.subr.bf16.mxu0 0
        %1497 = vmatpush1.bf16.xpose.msra.mxu0 0
        %1498 = vmatprep.subr.bf16.mxu0 0
        %1499 = vmatpush1.bf16.xpose.msra.mxu0 0
        %1500 = vmatprep.subr.bf16.mxu0 0
        %1501 = vmatpush1.bf16.xpose.msra.mxu0 0
        %1502 = vmatprep.subr.bf16.mxu0 0
        %1503 = vmatpush1.bf16.xpose.msra.mxu0 0
        %1504 = vmatprep.subr.bf16.mxu0 0
        %1505 = vmatpush1.bf16.xpose.msra.mxu0 0
        %1506 = vmatprep.subr.bf16.mxu0 0
        %1507 = vmatpush1.bf16.xpose.msra.mxu0 0
        %1508 = vmatprep.subr.bf16.mxu0 0
        %1509 = vmatpush1.bf16.xpose.msra.mxu0 0
        %1510 = vmatprep.subr.bf16.mxu0 0
        %1511 = vmatpush1.bf16.xpose.msra.mxu0 0
        %1512 = vmatprep.subr.bf16.mxu0 0
        %1513 = vmatpush1.bf16.xpose.msra.mxu0 0
        %1514 = vmatprep.mubr.bf16.mxu0 0
        %1515 = vmatmul.mubr.bf16.gmra.mrb[0].mxu0 %v1459
        %v1516 = vpop.f32.mrb[0].mxu0
        %v1517 = vadd.f32 %v755, %v1516
        %v1518 = vpop.f32.mrb[0].mxu0
        %v1519 = vpop.f32.mrb[0].mxu0
        %v1520 = vadd.f32 %v756, %v1519
        %v1521 = vpop.f32.mrb[0].mxu0
        %1522 = vmatprep.mubr.bf16.mxu0 0
        %1523 = vmatmul.mubr.bf16.gmra.mrb[0].mxu0 %v1462
        %v1524 = vpop.f32.mrb[0].mxu0
        %v1525 = vadd.f32 %v757, %v1524
        %v1526 = vpop.f32.mrb[0].mxu0
        %v1527 = vpop.f32.mrb[0].mxu0
        %v1528 = vadd.f32 %v758, %v1527
        %v1529 = vpop.f32.mrb[0].mxu0
        %1530 = vmatprep.mubr.bf16.mxu0 0
        %1531 = vmatmul.mubr.bf16.gmra.mrb[0].mxu0 %v1465
        %v1532 = vpop.f32.mrb[0].mxu0
        %v1533 = vadd.f32 %v759, %v1532
        %v1534 = vpop.f32.mrb[0].mxu0
        %v1535 = vpop.f32.mrb[0].mxu0
        %v1536 = vadd.f32 %v760, %v1535
        %v1537 = vpop.f32.mrb[0].mxu0
        %1538 = vmatprep.mubr.bf16.mxu0 0
        %1539 = vmatmul.mubr.bf16.gmra.mrb[0].mxu0 %v1468
        %v1540 = vpop.f32.mrb[0].mxu0
        %v1541 = vadd.f32 %v761, %v1540
        %v1542 = vpop.f32.mrb[0].mxu0
        %v1543 = vpop.f32.mrb[0].mxu0
        %v1544 = vadd.f32 %v762, %v1543
        %v1545 = vpop.f32.mrb[0].mxu0
        %1546 = vdwg.mxu0
        %v1547 = vsel %vm982, %v1404, -inf
        %1548 = vmax.xlane.f32.xlu0 %v1547
        %v1549 = vpop.xlane.xlu0 %1548
        %v1550 = vsel %vm982, %v1407, -inf
        %1551 = vmax.xlane.f32.xlu0 %v1550
        %v1552 = vpop.xlane.xlu0 %1551
        %v1553 = vsel %vm982, %v1412, -inf
        %1554 = vmax.xlane.f32.xlu0 %v1553
        %v1555 = vpop.xlane.xlu0 %1554
        %v1556 = vsel %vm982, %v1415, -inf
        %1557 = vmax.xlane.f32.xlu0 %v1556
        %v1558 = vpop.xlane.xlu0 %1557
        %v1559 = vsel %vm982, %v1420, -inf
        %1560 = vmax.xlane.f32.xlu0 %v1559
        %v1561 = vpop.xlane.xlu0 %1560
        %v1562 = vsel %vm982, %v1423, -inf
        %1563 = vmax.xlane.f32.xlu0 %v1562
        %v1564 = vpop.xlane.xlu0 %1563
        %v1565 = vsel %vm982, %v1428, -inf
        %1566 = vmax.xlane.f32.xlu0 %v1565
        %v1567 = vpop.xlane.xlu0 %1566
        %v1568 = vsel %vm982, %v1431, -inf
        %1569 = vmax.xlane.f32.xlu0 %v1568
        %v1570 = vpop.xlane.xlu0 %1569
        %v1571 = vsel %vm982, %v1517, -inf
        %1572 = vmax.xlane.f32.xlu0 %v1571
        %v1573 = vpop.xlane.xlu0 %1572
        %v1574 = vsel %vm982, %v1520, -inf
        %1575 = vmax.xlane.f32.xlu0 %v1574
        %v1576 = vpop.xlane.xlu0 %1575
        %v1577 = vsel %vm982, %v1525, -inf
        %1578 = vmax.xlane.f32.xlu0 %v1577
        %v1579 = vpop.xlane.xlu0 %1578
        %v1580 = vsel %vm982, %v1528, -inf
        %1581 = vmax.xlane.f32.xlu0 %v1580
        %v1582 = vpop.xlane.xlu0 %1581
        %v1583 = vsel %vm982, %v1533, -inf
        %1584 = vmax.xlane.f32.xlu0 %v1583
        %v1585 = vpop.xlane.xlu0 %1584
        %v1586 = vsel %vm982, %v1536, -inf
        %1587 = vmax.xlane.f32.xlu0 %v1586
        %v1588 = vpop.xlane.xlu0 %1587
        %v1589 = vsel %vm982, %v1541, -inf
        %1590 = vmax.xlane.f32.xlu0 %v1589
        %v1591 = vpop.xlane.xlu0 %1590
        %v1592 = vsel %vm982, %v1544, -inf
        %1593 = vmax.xlane.f32.xlu0 %v1592
        %v1594 = vpop.xlane.xlu0 %1593
        %v1595 = vsub.f32 %v1404, %v1549
        %v1596 = vsub.f32 %v1407, %v1552
        %v1597 = vsub.f32 %v1412, %v1555
        %v1598 = vsub.f32 %v1415, %v1558
        %v1599 = vsub.f32 %v1420, %v1561
        %v1600 = vsub.f32 %v1423, %v1564
        %v1601 = vsub.f32 %v1428, %v1567
        %v1602 = vsub.f32 %v1431, %v1570
        %v1603 = vsub.f32 %v1517, %v1573
        %v1604 = vsub.f32 %v1520, %v1576
        %v1605 = vsub.f32 %v1525, %v1579
        %v1606 = vsub.f32 %v1528, %v1582
        %v1607 = vsub.f32 %v1533, %v1585
        %v1608 = vsub.f32 %v1536, %v1588
        %v1609 = vsub.f32 %v1541, %v1591
        %v1610 = vsub.f32 %v1544, %v1594
        %v1611 = vmul.f32 %v1595, 1.442695
        %v1612 = vpow.pop %v1611
        %v1613 = vmul.f32 %v1596, 1.442695
        %v1614 = vpow.pop %v1613
        %v1615 = vmul.f32 %v1597, 1.442695
        %v1616 = vpow.pop %v1615
        %v1617 = vmul.f32 %v1598, 1.442695
        %v1618 = vpow.pop %v1617
        %v1619 = vmul.f32 %v1599, 1.442695
        %v1620 = vpow.pop %v1619
        %v1621 = vmul.f32 %v1600, 1.442695
        %v1622 = vpow.pop %v1621
        %v1623 = vmul.f32 %v1601, 1.442695
        %v1624 = vpow.pop %v1623
        %v1625 = vmul.f32 %v1602, 1.442695
        %v1626 = vpow.pop %v1625
        %v1627 = vmul.f32 %v1603, 1.442695
        %v1628 = vpow.pop %v1627
        %v1629 = vmul.f32 %v1604, 1.442695
        %v1630 = vpow.pop %v1629
        %v1631 = vmul.f32 %v1605, 1.442695
        %v1632 = vpow.pop %v1631
        %v1633 = vmul.f32 %v1606, 1.442695
        %v1634 = vpow.pop %v1633
        %v1635 = vmul.f32 %v1607, 1.442695
        %v1636 = vpow.pop %v1635
        %v1637 = vmul.f32 %v1608, 1.442695
        %v1638 = vpow.pop %v1637
        %v1639 = vmul.f32 %v1609, 1.442695
        %v1640 = vpow.pop %v1639
        %v1641 = vmul.f32 %v1610, 1.442695
        %v1642 = vpow.pop %v1641
        %v1643 = vsel %vm982, %v1612, 0.0
        %1644 = vadd.xlane.f32.xlu0 %v1643
        %v1645 = vpop.xlane.xlu0 %1644
        %v1646 = vsel %vm982, %v1614, 0.0
        %1647 = vadd.xlane.f32.xlu0 %v1646
        %v1648 = vpop.xlane.xlu0 %1647
        %v1649 = vsel %vm982, %v1616, 0.0
        %1650 = vadd.xlane.f32.xlu0 %v1649
        %v1651 = vpop.xlane.xlu0 %1650
        %v1652 = vsel %vm982, %v1618, 0.0
        %1653 = vadd.xlane.f32.xlu0 %v1652
        %v1654 = vpop.xlane.xlu0 %1653
        %v1655 = vsel %vm982, %v1620, 0.0
        %1656 = vadd.xlane.f32.xlu0 %v1655
        %v1657 = vpop.xlane.xlu0 %1656
        %v1658 = vsel %vm982, %v1622, 0.0
        %1659 = vadd.xlane.f32.xlu0 %v1658
        %v1660 = vpop.xlane.xlu0 %1659
        %v1661 = vsel %vm982, %v1624, 0.0
        %1662 = vadd.xlane.f32.xlu0 %v1661
        %v1663 = vpop.xlane.xlu0 %1662
        %v1664 = vsel %vm982, %v1626, 0.0
        %1665 = vadd.xlane.f32.xlu0 %v1664
        %v1666 = vpop.xlane.xlu0 %1665
        %v1667 = vsel %vm982, %v1628, 0.0
        %1668 = vadd.xlane.f32.xlu0 %v1667
        %v1669 = vpop.xlane.xlu0 %1668
        %v1670 = vsel %vm982, %v1630, 0.0
        %1671 = vadd.xlane.f32.xlu0 %v1670
        %v1672 = vpop.xlane.xlu0 %1671
        %v1673 = vsel %vm982, %v1632, 0.0
        %1674 = vadd.xlane.f32.xlu0 %v1673
        %v1675 = vpop.xlane.xlu0 %1674
        %v1676 = vsel %vm982, %v1634, 0.0
        %1677 = vadd.xlane.f32.xlu0 %v1676
        %v1678 = vpop.xlane.xlu0 %1677
        %v1679 = vsel %vm982, %v1636, 0.0
        %1680 = vadd.xlane.f32.xlu0 %v1679
        %v1681 = vpop.xlane.xlu0 %1680
        %v1682 = vsel %vm982, %v1638, 0.0
        %1683 = vadd.xlane.f32.xlu0 %v1682
        %v1684 = vpop.xlane.xlu0 %1683
        %v1685 = vsel %vm982, %v1640, 0.0
        %1686 = vadd.xlane.f32.xlu0 %v1685
        %v1687 = vpop.xlane.xlu0 %1686
        %v1688 = vsel %vm982, %v1642, 0.0
        %1689 = vadd.xlane.f32.xlu0 %v1688
        %v1690 = vpop.xlane.xlu0 %1689
        %v1691 = vpack.c.bf16 %v1614, %v1612
        %v1692 = vpack.c.bf16 %v1618, %v1616
        %v1693 = vpack.c.bf16 %v1622, %v1620
        %v1694 = vpack.c.bf16 %v1626, %v1624
        %v1695 = vpack.c.bf16 %v1630, %v1628
        %v1696 = vpack.c.bf16 %v1634, %v1632
        %v1697 = vpack.c.bf16 %v1638, %v1636
        %v1698 = vpack.c.bf16 %v1642, %v1640
        %1703 = vrot.lane.b32.xlu0 %v795, 96
        %v1704 = vpop.permute.xlu0 %1703
        %1705 = vrot.lane.b32.xlu0 %v796, 96
        %v1706 = vpop.permute.xlu0 %1705
        %1707 = vrot.lane.b32.xlu0 %v797, 96
        %v1708 = vpop.permute.xlu0 %1707
        %1709 = vrot.lane.b32.xlu0 %v798, 96
        %v1710 = vpop.permute.xlu0 %1709
        %v1716 = vsel %vm982, %v1691, 0
        %v1719 = vsel %vm982, %v1692, 0
        %v1722 = vsel %vm982, %v1693, 0
        %v1725 = vsel %vm982, %v1694, 0
        %1727 = vmatprep.subr.bf16.mxu0 0
        %1728 = vmatpush1.bf16.msra.mxu0 %v1704
        %1729 = vmatprep.subr.bf16.mxu0 0
        %1730 = vmatpush1.bf16.msra.mxu0 %v1706
        %1731 = vmatprep.subr.bf16.mxu0 0
        %1732 = vmatpush1.bf16.msra.mxu0 %v1708
        %1733 = vmatprep.subr.bf16.mxu0 0
        %1734 = vmatpush1.bf16.msra.mxu0 %v1710
        %1735 = vmatprep.subr.bf16.mxu0 0
        %1736 = vmatpush1.bf16.msra.mxu0 0
        %1737 = vmatprep.subr.bf16.mxu0 0
        %1738 = vmatpush1.bf16.msra.mxu0 0
        %1739 = vmatprep.subr.bf16.mxu0 0
        %1740 = vmatpush1.bf16.msra.mxu0 0
        %1741 = vmatprep.subr.bf16.mxu0 0
        %1742 = vmatpush1.bf16.msra.mxu0 0
        %1743 = vmatprep.subr.bf16.mxu0 0
        %1744 = vmatpush1.bf16.msra.mxu0 0
        %1745 = vmatprep.subr.bf16.mxu0 0
        %1746 = vmatpush1.bf16.msra.mxu0 0
        %1747 = vmatprep.subr.bf16.mxu0 0
        %1748 = vmatpush1.bf16.msra.mxu0 0
        %1749 = vmatprep.subr.bf16.mxu0 0
        %1750 = vmatpush1.bf16.msra.mxu0 0
        %1751 = vmatprep.subr.bf16.mxu0 0
        %1752 = vmatpush1.bf16.msra.mxu0 0
        %1753 = vmatprep.subr.bf16.mxu0 0
        %1754 = vmatpush1.bf16.msra.mxu0 0
        %1755 = vmatprep.subr.bf16.mxu0 0
        %1756 = vmatpush1.bf16.msra.mxu0 0
        %1757 = vmatprep.subr.bf16.mxu0 0
        %1758 = vmatpush1.bf16.msra.mxu0 0
        %1759 = vmatprep.mubr.bf16.mxu0 0
        %1760 = vmatmul.mubr.bf16.gmra.mrb[0].mxu0 %v1716
        %v1761 = vpop.f32.mrb[0].mxu0
        %v1762 = vadd.f32 0.0, %v1761
        %v1763 = vpop.f32.mrb[0].mxu0
        %v1764 = vpop.f32.mrb[0].mxu0
        %v1765 = vadd.f32 0.0, %v1764
        %v1766 = vpop.f32.mrb[0].mxu0
        %1767 = vmatprep.mubr.bf16.mxu0 0
        %1768 = vmatmul.mubr.bf16.gmra.mrb[0].mxu0 %v1719
        %v1769 = vpop.f32.mrb[0].mxu0
        %v1770 = vadd.f32 0.0, %v1769
        %v1771 = vpop.f32.mrb[0].mxu0
        %v1772 = vpop.f32.mrb[0].mxu0
        %v1773 = vadd.f32 0.0, %v1772
        %v1774 = vpop.f32.mrb[0].mxu0
        %1775 = vmatprep.mubr.bf16.mxu0 0
        %1776 = vmatmul.mubr.bf16.gmra.mrb[0].mxu0 %v1722
        %v1777 = vpop.f32.mrb[0].mxu0
        %v1778 = vadd.f32 0.0, %v1777
        %v1779 = vpop.f32.mrb[0].mxu0
        %v1780 = vpop.f32.mrb[0].mxu0
        %v1781 = vadd.f32 0.0, %v1780
        %v1782 = vpop.f32.mrb[0].mxu0
        %1783 = vmatprep.mubr.bf16.mxu0 0
        %1784 = vmatmul.mubr.bf16.gmra.mrb[0].mxu0 %v1725
        %v1785 = vpop.f32.mrb[0].mxu0
        %v1786 = vadd.f32 0.0, %v1785
        %v1787 = vpop.f32.mrb[0].mxu0
        %v1788 = vpop.f32.mrb[0].mxu0
        %v1789 = vadd.f32 0.0, %v1788
        %v1790 = vpop.f32.mrb[0].mxu0
        %1791 = vdwg.mxu0
        %1796 = vrot.lane.b32.xlu0 %v799, 96
        %v1797 = vpop.permute.xlu0 %1796
        %1798 = vrot.lane.b32.xlu0 %v800, 96
        %v1799 = vpop.permute.xlu0 %1798
        %1800 = vrot.lane.b32.xlu0 %v801, 96
        %v1801 = vpop.permute.xlu0 %1800
        %1802 = vrot.lane.b32.xlu0 %v802, 96
        %v1803 = vpop.permute.xlu0 %1802
        %v1809 = vsel %vm982, %v1695, 0
        %v1812 = vsel %vm982, %v1696, 0
        %v1815 = vsel %vm982, %v1697, 0
        %v1818 = vsel %vm982, %v1698, 0
        %1820 = vmatprep.subr.bf16.mxu0 0
        %1821 = vmatpush1.bf16.msra.mxu0 %v1797
        %1822 = vmatprep.subr.bf16.mxu0 0
        %1823 = vmatpush1.bf16.msra.mxu0 %v1799
        %1824 = vmatprep.subr.bf16.mxu0 0
        %1825 = vmatpush1.bf16.msra.mxu0 %v1801
        %1826 = vmatprep.subr.bf16.mxu0 0
        %1827 = vmatpush1.bf16.msra.mxu0 %v1803
        %1828 = vmatprep.subr.bf16.mxu0 0
        %1829 = vmatpush1.bf16.msra.mxu0 0
        %1830 = vmatprep.subr.bf16.mxu0 0
        %1831 = vmatpush1.bf16.msra.mxu0 0
        %1832 = vmatprep.subr.bf16.mxu0 0
        %1833 = vmatpush1.bf16.msra.mxu0 0
        %1834 = vmatprep.subr.bf16.mxu0 0
        %1835 = vmatpush1.bf16.msra.mxu0 0
        %1836 = vmatprep.subr.bf16.mxu0 0
        %1837 = vmatpush1.bf16.msra.mxu0 0
        %1838 = vmatprep.subr.bf16.mxu0 0
        %1839 = vmatpush1.bf16.msra.mxu0 0
        %1840 = vmatprep.subr.bf16.mxu0 0
        %1841 = vmatpush1.bf16.msra.mxu0 0
        %1842 = vmatprep.subr.bf16.mxu0 0
        %1843 = vmatpush1.bf16.msra.mxu0 0
        %1844 = vmatprep.subr.bf16.mxu0 0
        %1845 = vmatpush1.bf16.msra.mxu0 0
        %1846 = vmatprep.subr.bf16.mxu0 0
        %1847 = vmatpush1.bf16.msra.mxu0 0
        %1848 = vmatprep.subr.bf16.mxu0 0
        %1849 = vmatpush1.bf16.msra.mxu0 0
        %1850 = vmatprep.subr.bf16.mxu0 0
        %1851 = vmatpush1.bf16.msra.mxu0 0
        %1852 = vmatprep.mubr.bf16.mxu0 0
        %1853 = vmatmul.mubr.bf16.gmra.mrb[0].mxu0 %v1809
        %v1854 = vpop.f32.mrb[0].mxu0
        %v1855 = vadd.f32 0.0, %v1854
        %v1856 = vpop.f32.mrb[0].mxu0
        %v1857 = vpop.f32.mrb[0].mxu0
        %v1858 = vadd.f32 0.0, %v1857
        %v1859 = vpop.f32.mrb[0].mxu0
        %1860 = vmatprep.mubr.bf16.mxu0 0
        %1861 = vmatmul.mubr.bf16.gmra.mrb[0].mxu0 %v1812
        %v1862 = vpop.f32.mrb[0].mxu0
        %v1863 = vadd.f32 0.0, %v1862
        %v1864 = vpop.f32.mrb[0].mxu0
        %v1865 = vpop.f32.mrb[0].mxu0
        %v1866 = vadd.f32 0.0, %v1865
        %v1867 = vpop.f32.mrb[0].mxu0
        %1868 = vmatprep.mubr.bf16.mxu0 0
        %1869 = vmatmul.mubr.bf16.gmra.mrb[0].mxu0 %v1815
        %v1870 = vpop.f32.mrb[0].mxu0
        %v1871 = vadd.f32 0.0, %v1870
        %v1872 = vpop.f32.mrb[0].mxu0
        %v1873 = vpop.f32.mrb[0].mxu0
        %v1874 = vadd.f32 0.0, %v1873
        %v1875 = vpop.f32.mrb[0].mxu0
        %1876 = vmatprep.mubr.bf16.mxu0 0
        %1877 = vmatmul.mubr.bf16.gmra.mrb[0].mxu0 %v1818
        %v1878 = vpop.f32.mrb[0].mxu0
        %v1879 = vadd.f32 0.0, %v1878
        %v1880 = vpop.f32.mrb[0].mxu0
        %v1881 = vpop.f32.mrb[0].mxu0
        %v1882 = vadd.f32 0.0, %v1881
        %v1883 = vpop.f32.mrb[0].mxu0
        %1884 = vdwg.mxu0
        %v1885 = vrcp.pop %v1645
        %v1886 = vrcp.pop %v1648
        %v1887 = vrcp.pop %v1651
        %v1888 = vrcp.pop %v1654
        %v1889 = vrcp.pop %v1657
        %v1890 = vrcp.pop %v1660
        %v1891 = vrcp.pop %v1663
        %v1892 = vrcp.pop %v1666
        %v1893 = vrcp.pop %v1669
        %v1894 = vrcp.pop %v1672
        %v1895 = vrcp.pop %v1675
        %v1896 = vrcp.pop %v1678
        %v1897 = vrcp.pop %v1681
        %v1898 = vrcp.pop %v1684
        %v1899 = vrcp.pop %v1687
        %v1900 = vrcp.pop %v1690
        %v1901 = vmul.f32 %v1762, %v1885
        %v1902 = vmul.f32 %v1765, %v1886
        %v1903 = vmul.f32 %v1770, %v1887
        %v1904 = vmul.f32 %v1773, %v1888
        %v1905 = vmul.f32 %v1778, %v1889
        %v1906 = vmul.f32 %v1781, %v1890
        %v1907 = vmul.f32 %v1786, %v1891
        %v1908 = vmul.f32 %v1789, %v1892
        %v1909 = vmul.f32 %v1855, %v1893
        %v1910 = vmul.f32 %v1858, %v1894
        %v1911 = vmul.f32 %v1863, %v1895
        %v1912 = vmul.f32 %v1866, %v1896
        %v1913 = vmul.f32 %v1871, %v1897
        %v1914 = vmul.f32 %v1874, %v1898
        %v1915 = vmul.f32 %v1879, %v1899
        %v1916 = vmul.f32 %v1882, %v1900
        %1917 = vrot.lane.b32.xlu0 %v779, 64
        %v1918 = vpop.permute.xlu0 %1917
        %1919 = vrot.lane.b32.xlu0 %v780, 64
        %v1920 = vpop.permute.xlu0 %1919
        %1921 = vrot.lane.b32.xlu0 %v781, 64
        %v1922 = vpop.permute.xlu0 %1921
        %1923 = vrot.lane.b32.xlu0 %v782, 64
        %v1924 = vpop.permute.xlu0 %1923
        %1925 = vrot.lane.b32.xlu0 %v787, 64
        %v1926 = vpop.permute.xlu0 %1925
        %1927 = vrot.lane.b32.xlu0 %v788, 64
        %v1928 = vpop.permute.xlu0 %1927
        %1929 = vrot.lane.b32.xlu0 %v789, 64
        %v1930 = vpop.permute.xlu0 %1929
        %1931 = vrot.lane.b32.xlu0 %v790, 64
        %v1932 = vpop.permute.xlu0 %1931
        %v1934 = vsel %vm803, %v1918, 0
        %v1937 = vsel %vm803, %v1920, 0
        %v1940 = vsel %vm803, %v1922, 0
        %v1943 = vsel %vm803, %v1924, 0
        %v1946 = vsel %vm803, %v1926, 0
        %v1949 = vsel %vm803, %v1928, 0
        %v1952 = vsel %vm803, %v1930, 0
        %v1955 = vsel %vm803, %v1932, 0
        %1957 = vmatprep.subr.bf16.mxu0 0
        %1958 = vmatpush1.bf16.xpose.msra.mxu0 %v1946
        %1959 = vmatprep.subr.bf16.mxu0 0
        %1960 = vmatpush1.bf16.xpose.msra.mxu0 %v1949
        %1961 = vmatprep.subr.bf16.mxu0 0
        %1962 = vmatpush1.bf16.xpose.msra.mxu0 %v1952
        %1963 = vmatprep.subr.bf16.mxu0 0
        %1964 = vmatpush1.bf16.xpose.msra.mxu0 %v1955
        %1965 = vmatprep.subr.bf16.mxu0 0
        %1966 = vmatpush1.bf16.xpose.msra.mxu0 0
        %1967 = vmatprep.subr.bf16.mxu0 0
        %1968 = vmatpush1.bf16.xpose.msra.mxu0 0
        %1969 = vmatprep.subr.bf16.mxu0 0
        %1970 = vmatpush1.bf16.xpose.msra.mxu0 0
        %1971 = vmatprep.subr.bf16.mxu0 0
        %1972 = vmatpush1.bf16.xpose.msra.mxu0 0
        %1973 = vmatprep.subr.bf16.mxu0 0
        %1974 = vmatpush1.bf16.xpose.msra.mxu0 0
        %1975 = vmatprep.subr.bf16.mxu0 0
        %1976 = vmatpush1.bf16.xpose.msra.mxu0 0
        %1977 = vmatprep.subr.bf16.mxu0 0
        %1978 = vmatpush1.bf16.xpose.msra.mxu0 0
        %1979 = vmatprep.subr.bf16.mxu0 0
        %1980 = vmatpush1.bf16.xpose.msra.mxu0 0
        %1981 = vmatprep.subr.bf16.mxu0 0
        %1982 = vmatpush1.bf16.xpose.msra.mxu0 0
        %1983 = vmatprep.subr.bf16.mxu0 0
        %1984 = vmatpush1.bf16.xpose.msra.mxu0 0
        %1985 = vmatprep.subr.bf16.mxu0 0
        %1986 = vmatpush1.bf16.xpose.msra.mxu0 0
        %1987 = vmatprep.subr.bf16.mxu0 0
        %1988 = vmatpush1.bf16.xpose.msra.mxu0 0
        %1989 = vmatprep.mubr.bf16.mxu0 0
        %1990 = vmatmul.mubr.bf16.gmra.mrb[0].mxu0 %v1934
        %v1991 = vpop.f32.mrb[0].mxu0
        %v1992 = vadd.f32 %v763, %v1991
        %v1993 = vpop.f32.mrb[0].mxu0
        %v1994 = vpop.f32.mrb[0].mxu0
        %v1995 = vadd.f32 %v764, %v1994
        %v1996 = vpop.f32.mrb[0].mxu0
        %1997 = vmatprep.mubr.bf16.mxu0 0
        %1998 = vmatmul.mubr.bf16.gmra.mrb[0].mxu0 %v1937
        %v1999 = vpop.f32.mrb[0].mxu0
        %v2000 = vadd.f32 %v765, %v1999
        %v2001 = vpop.f32.mrb[0].mxu0
        %v2002 = vpop.f32.mrb[0].mxu0
        %v2003 = vadd.f32 %v766, %v2002
        %v2004 = vpop.f32.mrb[0].mxu0
        %2005 = vmatprep.mubr.bf16.mxu0 0
        %2006 = vmatmul.mubr.bf16.gmra.mrb[0].mxu0 %v1940
        %v2007 = vpop.f32.mrb[0].mxu0
        %v2008 = vadd.f32 %v767, %v2007
        %v2009 = vpop.f32.mrb[0].mxu0
        %v2010 = vpop.f32.mrb[0].mxu0
        %v2011 = vadd.f32 %v768, %v2010
        %v2012 = vpop.f32.mrb[0].mxu0
        %2013 = vmatprep.mubr.bf16.mxu0 0
        %2014 = vmatmul.mubr.bf16.gmra.mrb[0].mxu0 %v1943
        %v2015 = vpop.f32.mrb[0].mxu0
        %v2016 = vadd.f32 %v769, %v2015
        %v2017 = vpop.f32.mrb[0].mxu0
        %v2018 = vpop.f32.mrb[0].mxu0
        %v2019 = vadd.f32 %v770, %v2018
        %v2020 = vpop.f32.mrb[0].mxu0
        %2021 = vdwg.mxu0
        %2022 = vrot.lane.b32.xlu0 %v783, 64
        %v2023 = vpop.permute.xlu0 %2022
        %2024 = vrot.lane.b32.xlu0 %v784, 64
        %v2025 = vpop.permute.xlu0 %2024
        %2026 = vrot.lane.b32.xlu0 %v785, 64
        %v2027 = vpop.permute.xlu0 %2026
        %2028 = vrot.lane.b32.xlu0 %v786, 64
        %v2029 = vpop.permute.xlu0 %2028
        %2030 = vrot.lane.b32.xlu0 %v791, 64
        %v2031 = vpop.permute.xlu0 %2030
        %2032 = vrot.lane.b32.xlu0 %v792, 64
        %v2033 = vpop.permute.xlu0 %2032
        %2034 = vrot.lane.b32.xlu0 %v793, 64
        %v2035 = vpop.permute.xlu0 %2034
        %2036 = vrot.lane.b32.xlu0 %v794, 64
        %v2037 = vpop.permute.xlu0 %2036
        %v2039 = vsel %vm803, %v2023, 0
        %v2042 = vsel %vm803, %v2025, 0
        %v2045 = vsel %vm803, %v2027, 0
        %v2048 = vsel %vm803, %v2029, 0
        %v2051 = vsel %vm803, %v2031, 0
        %v2054 = vsel %vm803, %v2033, 0
        %v2057 = vsel %vm803, %v2035, 0
        %v2060 = vsel %vm803, %v2037, 0
        %2062 = vmatprep.subr.bf16.mxu0 0
        %2063 = vmatpush1.bf16.xpose.msra.mxu0 %v2051
        %2064 = vmatprep.subr.bf16.mxu0 0
        %2065 = vmatpush1.bf16.xpose.msra.mxu0 %v2054
        %2066 = vmatprep.subr.bf16.mxu0 0
        %2067 = vmatpush1.bf16.xpose.msra.mxu0 %v2057
        %2068 = vmatprep.subr.bf16.mxu0 0
        %2069 = vmatpush1.bf16.xpose.msra.mxu0 %v2060
        %2070 = vmatprep.subr.bf16.mxu0 0
        %2071 = vmatpush1.bf16.xpose.msra.mxu0 0
        %2072 = vmatprep.subr.bf16.mxu0 0
        %2073 = vmatpush1.bf16.xpose.msra.mxu0 0
        %2074 = vmatprep.subr.bf16.mxu0 0
        %2075 = vmatpush1.bf16.xpose.msra.mxu0 0
        %2076 = vmatprep.subr.bf16.mxu0 0
        %2077 = vmatpush1.bf16.xpose.msra.mxu0 0
        %2078 = vmatprep.subr.bf16.mxu0 0
        %2079 = vmatpush1.bf16.xpose.msra.mxu0 0
        %2080 = vmatprep.subr.bf16.mxu0 0
        %2081 = vmatpush1.bf16.xpose.msra.mxu0 0
        %2082 = vmatprep.subr.bf16.mxu0 0
        %2083 = vmatpush1.bf16.xpose.msra.mxu0 0
        %2084 = vmatprep.subr.bf16.mxu0 0
        %2085 = vmatpush1.bf16.xpose.msra.mxu0 0
        %2086 = vmatprep.subr.bf16.mxu0 0
        %2087 = vmatpush1.bf16.xpose.msra.mxu0 0
        %2088 = vmatprep.subr.bf16.mxu0 0
        %2089 = vmatpush1.bf16.xpose.msra.mxu0 0
        %2090 = vmatprep.subr.bf16.mxu0 0
        %2091 = vmatpush1.bf16.xpose.msra.mxu0 0
        %2092 = vmatprep.subr.bf16.mxu0 0
        %2093 = vmatpush1.bf16.xpose.msra.mxu0 0
        %2094 = vmatprep.mubr.bf16.mxu0 0
        %2095 = vmatmul.mubr.bf16.gmra.mrb[0].mxu0 %v2039
        %v2096 = vpop.f32.mrb[0].mxu0
        %v2097 = vadd.f32 %v763, %v2096
        %v2098 = vpop.f32.mrb[0].mxu0
        %v2099 = vpop.f32.mrb[0].mxu0
        %v2100 = vadd.f32 %v764, %v2099
        %v2101 = vpop.f32.mrb[0].mxu0
        %2102 = vmatprep.mubr.bf16.mxu0 0
        %2103 = vmatmul.mubr.bf16.gmra.mrb[0].mxu0 %v2042
        %v2104 = vpop.f32.mrb[0].mxu0
        %v2105 = vadd.f32 %v765, %v2104
        %v2106 = vpop.f32.mrb[0].mxu0
        %v2107 = vpop.f32.mrb[0].mxu0
        %v2108 = vadd.f32 %v766, %v2107
        %v2109 = vpop.f32.mrb[0].mxu0
        %2110 = vmatprep.mubr.bf16.mxu0 0
        %2111 = vmatmul.mubr.bf16.gmra.mrb[0].mxu0 %v2045
        %v2112 = vpop.f32.mrb[0].mxu0
        %v2113 = vadd.f32 %v767, %v2112
        %v2114 = vpop.f32.mrb[0].mxu0
        %v2115 = vpop.f32.mrb[0].mxu0
        %v2116 = vadd.f32 %v768, %v2115
        %v2117 = vpop.f32.mrb[0].mxu0
        %2118 = vmatprep.mubr.bf16.mxu0 0
        %2119 = vmatmul.mubr.bf16.gmra.mrb[0].mxu0 %v2048
        %v2120 = vpop.f32.mrb[0].mxu0
        %v2121 = vadd.f32 %v769, %v2120
        %v2122 = vpop.f32.mrb[0].mxu0
        %v2123 = vpop.f32.mrb[0].mxu0
        %v2124 = vadd.f32 %v770, %v2123
        %v2125 = vpop.f32.mrb[0].mxu0
        %2126 = vdwg.mxu0
        %v2127 = vsel %vm982, %v1992, -inf
        %2128 = vmax.xlane.f32.xlu0 %v2127
        %v2129 = vpop.xlane.xlu0 %2128
        %v2130 = vsel %vm982, %v1995, -inf
        %2131 = vmax.xlane.f32.xlu0 %v2130
        %v2132 = vpop.xlane.xlu0 %2131
        %v2133 = vsel %vm982, %v2000, -inf
        %2134 = vmax.xlane.f32.xlu0 %v2133
        %v2135 = vpop.xlane.xlu0 %2134
        %v2136 = vsel %vm982, %v2003, -inf
        %2137 = vmax.xlane.f32.xlu0 %v2136
        %v2138 = vpop.xlane.xlu0 %2137
        %v2139 = vsel %vm982, %v2008, -inf
        %2140 = vmax.xlane.f32.xlu0 %v2139
        %v2141 = vpop.xlane.xlu0 %2140
        %v2142 = vsel %vm982, %v2011, -inf
        %2143 = vmax.xlane.f32.xlu0 %v2142
        %v2144 = vpop.xlane.xlu0 %2143
        %v2145 = vsel %vm982, %v2016, -inf
        %2146 = vmax.xlane.f32.xlu0 %v2145
        %v2147 = vpop.xlane.xlu0 %2146
        %v2148 = vsel %vm982, %v2019, -inf
        %2149 = vmax.xlane.f32.xlu0 %v2148
        %v2150 = vpop.xlane.xlu0 %2149
        %v2151 = vsel %vm982, %v2097, -inf
        %2152 = vmax.xlane.f32.xlu0 %v2151
        %v2153 = vpop.xlane.xlu0 %2152
        %v2154 = vsel %vm982, %v2100, -inf
        %2155 = vmax.xlane.f32.xlu0 %v2154
        %v2156 = vpop.xlane.xlu0 %2155
        %v2157 = vsel %vm982, %v2105, -inf
        %2158 = vmax.xlane.f32.xlu0 %v2157
        %v2159 = vpop.xlane.xlu0 %2158
        %v2160 = vsel %vm982, %v2108, -inf
        %2161 = vmax.xlane.f32.xlu0 %v2160
        %v2162 = vpop.xlane.xlu0 %2161
        %v2163 = vsel %vm982, %v2113, -inf
        %2164 = vmax.xlane.f32.xlu0 %v2163
        %v2165 = vpop.xlane.xlu0 %2164
        %v2166 = vsel %vm982, %v2116, -inf
        %2167 = vmax.xlane.f32.xlu0 %v2166
        %v2168 = vpop.xlane.xlu0 %2167
        %v2169 = vsel %vm982, %v2121, -inf
        %2170 = vmax.xlane.f32.xlu0 %v2169
        %v2171 = vpop.xlane.xlu0 %2170
        %v2172 = vsel %vm982, %v2124, -inf
        %2173 = vmax.xlane.f32.xlu0 %v2172
        %v2174 = vpop.xlane.xlu0 %2173
        %v2175 = vsub.f32 %v1992, %v2129
        %v2176 = vsub.f32 %v1995, %v2132
        %v2177 = vsub.f32 %v2000, %v2135
        %v2178 = vsub.f32 %v2003, %v2138
        %v2179 = vsub.f32 %v2008, %v2141
        %v2180 = vsub.f32 %v2011, %v2144
        %v2181 = vsub.f32 %v2016, %v2147
        %v2182 = vsub.f32 %v2019, %v2150
        %v2183 = vsub.f32 %v2097, %v2153
        %v2184 = vsub.f32 %v2100, %v2156
        %v2185 = vsub.f32 %v2105, %v2159
        %v2186 = vsub.f32 %v2108, %v2162
        %v2187 = vsub.f32 %v2113, %v2165
        %v2188 = vsub.f32 %v2116, %v2168
        %v2189 = vsub.f32 %v2121, %v2171
        %v2190 = vsub.f32 %v2124, %v2174
        %v2191 = vmul.f32 %v2175, 1.442695
        %v2192 = vpow.pop %v2191
        %v2193 = vmul.f32 %v2176, 1.442695
        %v2194 = vpow.pop %v2193
        %v2195 = vmul.f32 %v2177, 1.442695
        %v2196 = vpow.pop %v2195
        %v2197 = vmul.f32 %v2178, 1.442695
        %v2198 = vpow.pop %v2197
        %v2199 = vmul.f32 %v2179, 1.442695
        %v2200 = vpow.pop %v2199
        %v2201 = vmul.f32 %v2180, 1.442695
        %v2202 = vpow.pop %v2201
        %v2203 = vmul.f32 %v2181, 1.442695
        %v2204 = vpow.pop %v2203
        %v2205 = vmul.f32 %v2182, 1.442695
        %v2206 = vpow.pop %v2205
        %v2207 = vmul.f32 %v2183, 1.442695
        %v2208 = vpow.pop %v2207
        %v2209 = vmul.f32 %v2184, 1.442695
        %v2210 = vpow.pop %v2209
        %v2211 = vmul.f32 %v2185, 1.442695
        %v2212 = vpow.pop %v2211
        %v2213 = vmul.f32 %v2186, 1.442695
        %v2214 = vpow.pop %v2213
        %v2215 = vmul.f32 %v2187, 1.442695
        %v2216 = vpow.pop %v2215
        %v2217 = vmul.f32 %v2188, 1.442695
        %v2218 = vpow.pop %v2217
        %v2219 = vmul.f32 %v2189, 1.442695
        %v2220 = vpow.pop %v2219
        %v2221 = vmul.f32 %v2190, 1.442695
        %v2222 = vpow.pop %v2221
        %v2223 = vsel %vm982, %v2192, 0.0
        %2224 = vadd.xlane.f32.xlu0 %v2223
        %v2225 = vpop.xlane.xlu0 %2224
        %v2226 = vsel %vm982, %v2194, 0.0
        %2227 = vadd.xlane.f32.xlu0 %v2226
        %v2228 = vpop.xlane.xlu0 %2227
        %v2229 = vsel %vm982, %v2196, 0.0
        %2230 = vadd.xlane.f32.xlu0 %v2229
        %v2231 = vpop.xlane.xlu0 %2230
        %v2232 = vsel %vm982, %v2198, 0.0
        %2233 = vadd.xlane.f32.xlu0 %v2232
        %v2234 = vpop.xlane.xlu0 %2233
        %v2235 = vsel %vm982, %v2200, 0.0
        %2236 = vadd.xlane.f32.xlu0 %v2235
        %v2237 = vpop.xlane.xlu0 %2236
        %v2238 = vsel %vm982, %v2202, 0.0
        %2239 = vadd.xlane.f32.xlu0 %v2238
        %v2240 = vpop.xlane.xlu0 %2239
        %v2241 = vsel %vm982, %v2204, 0.0
        %2242 = vadd.xlane.f32.xlu0 %v2241
        %v2243 = vpop.xlane.xlu0 %2242
        %v2244 = vsel %vm982, %v2206, 0.0
        %2245 = vadd.xlane.f32.xlu0 %v2244
        %v2246 = vpop.xlane.xlu0 %2245
        %v2247 = vsel %vm982, %v2208, 0.0
        %2248 = vadd.xlane.f32.xlu0 %v2247
        %v2249 = vpop.xlane.xlu0 %2248
        %v2250 = vsel %vm982, %v2210, 0.0
        %2251 = vadd.xlane.f32.xlu0 %v2250
        %v2252 = vpop.xlane.xlu0 %2251
        %v2253 = vsel %vm982, %v2212, 0.0
        %2254 = vadd.xlane.f32.xlu0 %v2253
        %v2255 = vpop.xlane.xlu0 %2254
        %v2256 = vsel %vm982, %v2214, 0.0
        %2257 = vadd.xlane.f32.xlu0 %v2256
        %v2258 = vpop.xlane.xlu0 %2257
        %v2259 = vsel %vm982, %v2216, 0.0
        %2260 = vadd.xlane.f32.xlu0 %v2259
        %v2261 = vpop.xlane.xlu0 %2260
        %v2262 = vsel %vm982, %v2218, 0.0
        %2263 = vadd.xlane.f32.xlu0 %v2262
        %v2264 = vpop.xlane.xlu0 %2263
        %v2265 = vsel %vm982, %v2220, 0.0
        %2266 = vadd.xlane.f32.xlu0 %v2265
        %v2267 = vpop.xlane.xlu0 %2266
        %v2268 = vsel %vm982, %v2222, 0.0
        %2269 = vadd.xlane.f32.xlu0 %v2268
        %v2270 = vpop.xlane.xlu0 %2269
        %v2271 = vpack.c.bf16 %v2194, %v2192
        %v2272 = vpack.c.bf16 %v2198, %v2196
        %v2273 = vpack.c.bf16 %v2202, %v2200
        %v2274 = vpack.c.bf16 %v2206, %v2204
        %v2275 = vpack.c.bf16 %v2210, %v2208
        %v2276 = vpack.c.bf16 %v2214, %v2212
        %v2277 = vpack.c.bf16 %v2218, %v2216
        %v2278 = vpack.c.bf16 %v2222, %v2220
        %2279 = vrot.lane.b32.xlu0 %v795, 64
        %v2280 = vpop.permute.xlu0 %2279
        %2281 = vrot.lane.b32.xlu0 %v796, 64
        %v2282 = vpop.permute.xlu0 %2281
        %2283 = vrot.lane.b32.xlu0 %v797, 64
        %v2284 = vpop.permute.xlu0 %2283
        %2285 = vrot.lane.b32.xlu0 %v798, 64
        %v2286 = vpop.permute.xlu0 %2285
        %v2292 = vsel %vm982, %v2271, 0
        %v2295 = vsel %vm982, %v2272, 0
        %v2298 = vsel %vm982, %v2273, 0
        %v2301 = vsel %vm982, %v2274, 0
        %2303 = vmatprep.subr.bf16.mxu0 0
        %2304 = vmatpush1.bf16.msra.mxu0 %v2280
        %2305 = vmatprep.subr.bf16.mxu0 0
        %2306 = vmatpush1.bf16.msra.mxu0 %v2282
        %2307 = vmatprep.subr.bf16.mxu0 0
        %2308 = vmatpush1.bf16.msra.mxu0 %v2284
        %2309 = vmatprep.subr.bf16.mxu0 0
        %2310 = vmatpush1.bf16.msra.mxu0 %v2286
        %2311 = vmatprep.subr.bf16.mxu0 0
        %2312 = vmatpush1.bf16.msra.mxu0 0
        %2313 = vmatprep.subr.bf16.mxu0 0
        %2314 = vmatpush1.bf16.msra.mxu0 0
        %2315 = vmatprep.subr.bf16.mxu0 0
        %2316 = vmatpush1.bf16.msra.mxu0 0
        %2317 = vmatprep.subr.bf16.mxu0 0
        %2318 = vmatpush1.bf16.msra.mxu0 0
        %2319 = vmatprep.subr.bf16.mxu0 0
        %2320 = vmatpush1.bf16.msra.mxu0 0
        %2321 = vmatprep.subr.bf16.mxu0 0
        %2322 = vmatpush1.bf16.msra.mxu0 0
        %2323 = vmatprep.subr.bf16.mxu0 0
        %2324 = vmatpush1.bf16.msra.mxu0 0
        %2325 = vmatprep.subr.bf16.mxu0 0
        %2326 = vmatpush1.bf16.msra.mxu0 0
        %2327 = vmatprep.subr.bf16.mxu0 0
        %2328 = vmatpush1.bf16.msra.mxu0 0
        %2329 = vmatprep.subr.bf16.mxu0 0
        %2330 = vmatpush1.bf16.msra.mxu0 0
        %2331 = vmatprep.subr.bf16.mxu0 0
        %2332 = vmatpush1.bf16.msra.mxu0 0
        %2333 = vmatprep.subr.bf16.mxu0 0
        %2334 = vmatpush1.bf16.msra.mxu0 0
        %2335 = vmatprep.mubr.bf16.mxu0 0
        %2336 = vmatmul.mubr.bf16.gmra.mrb[0].mxu0 %v2292
        %v2337 = vpop.f32.mrb[0].mxu0
        %v2338 = vadd.f32 0.0, %v2337
        %v2339 = vpop.f32.mrb[0].mxu0
        %v2340 = vpop.f32.mrb[0].mxu0
        %v2341 = vadd.f32 0.0, %v2340
        %v2342 = vpop.f32.mrb[0].mxu0
        %2343 = vmatprep.mubr.bf16.mxu0 0
        %2344 = vmatmul.mubr.bf16.gmra.mrb[0].mxu0 %v2295
        %v2345 = vpop.f32.mrb[0].mxu0
        %v2346 = vadd.f32 0.0, %v2345
        %v2347 = vpop.f32.mrb[0].mxu0
        %v2348 = vpop.f32.mrb[0].mxu0
        %v2349 = vadd.f32 0.0, %v2348
        %v2350 = vpop.f32.mrb[0].mxu0
        %2351 = vmatprep.mubr.bf16.mxu0 0
        %2352 = vmatmul.mubr.bf16.gmra.mrb[0].mxu0 %v2298
        %v2353 = vpop.f32.mrb[0].mxu0
        %v2354 = vadd.f32 0.0, %v2353
        %v2355 = vpop.f32.mrb[0].mxu0
        %v2356 = vpop.f32.mrb[0].mxu0
        %v2357 = vadd.f32 0.0, %v2356
        %v2358 = vpop.f32.mrb[0].mxu0
        %2359 = vmatprep.mubr.bf16.mxu0 0
        %2360 = vmatmul.mubr.bf16.gmra.mrb[0].mxu0 %v2301
        %v2361 = vpop.f32.mrb[0].mxu0
        %v2362 = vadd.f32 0.0, %v2361
        %v2363 = vpop.f32.mrb[0].mxu0
        %v2364 = vpop.f32.mrb[0].mxu0
        %v2365 = vadd.f32 0.0, %v2364
        %v2366 = vpop.f32.mrb[0].mxu0
        %2367 = vdwg.mxu0
        %2368 = vrot.lane.b32.xlu0 %v799, 64
        %v2369 = vpop.permute.xlu0 %2368
        %2370 = vrot.lane.b32.xlu0 %v800, 64
        %v2371 = vpop.permute.xlu0 %2370
        %2372 = vrot.lane.b32.xlu0 %v801, 64
        %v2373 = vpop.permute.xlu0 %2372
        %2374 = vrot.lane.b32.xlu0 %v802, 64
        %v2375 = vpop.permute.xlu0 %2374
        %v2381 = vsel %vm982, %v2275, 0
        %v2384 = vsel %vm982, %v2276, 0
        %v2387 = vsel %vm982, %v2277, 0
        %v2390 = vsel %vm982, %v2278, 0
        %2392 = vmatprep.subr.bf16.mxu0 0
        %2393 = vmatpush1.bf16.msra.mxu0 %v2369
        %2394 = vmatprep.subr.bf16.mxu0 0
        %2395 = vmatpush1.bf16.msra.mxu0 %v2371
        %2396 = vmatprep.subr.bf16.mxu0 0
        %2397 = vmatpush1.bf16.msra.mxu0 %v2373
        %2398 = vmatprep.subr.bf16.mxu0 0
        %2399 = vmatpush1.bf16.msra.mxu0 %v2375
        %2400 = vmatprep.subr.bf16.mxu0 0
        %2401 = vmatpush1.bf16.msra.mxu0 0
        %2402 = vmatprep.subr.bf16.mxu0 0
        %2403 = vmatpush1.bf16.msra.mxu0 0
        %2404 = vmatprep.subr.bf16.mxu0 0
        %2405 = vmatpush1.bf16.msra.mxu0 0
        %2406 = vmatprep.subr.bf16.mxu0 0
        %2407 = vmatpush1.bf16.msra.mxu0 0
        %2408 = vmatprep.subr.bf16.mxu0 0
        %2409 = vmatpush1.bf16.msra.mxu0 0
        %2410 = vmatprep.subr.bf16.mxu0 0
        %2411 = vmatpush1.bf16.msra.mxu0 0
        %2412 = vmatprep.subr.bf16.mxu0 0
        %2413 = vmatpush1.bf16.msra.mxu0 0
        %2414 = vmatprep.subr.bf16.mxu0 0
        %2415 = vmatpush1.bf16.msra.mxu0 0
        %2416 = vmatprep.subr.bf16.mxu0 0
        %2417 = vmatpush1.bf16.msra.mxu0 0
        %2418 = vmatprep.subr.bf16.mxu0 0
        %2419 = vmatpush1.bf16.msra.mxu0 0
        %2420 = vmatprep.subr.bf16.mxu0 0
        %2421 = vmatpush1.bf16.msra.mxu0 0
        %2422 = vmatprep.subr.bf16.mxu0 0
        %2423 = vmatpush1.bf16.msra.mxu0 0
        %2424 = vmatprep.mubr.bf16.mxu0 0
        %2425 = vmatmul.mubr.bf16.gmra.mrb[0].mxu0 %v2381
        %v2426 = vpop.f32.mrb[0].mxu0
        %v2427 = vadd.f32 0.0, %v2426
        %v2428 = vpop.f32.mrb[0].mxu0
        %v2429 = vpop.f32.mrb[0].mxu0
        %v2430 = vadd.f32 0.0, %v2429
        %v2431 = vpop.f32.mrb[0].mxu0
        %2432 = vmatprep.mubr.bf16.mxu0 0
        %2433 = vmatmul.mubr.bf16.gmra.mrb[0].mxu0 %v2384
        %v2434 = vpop.f32.mrb[0].mxu0
        %v2435 = vadd.f32 0.0, %v2434
        %v2436 = vpop.f32.mrb[0].mxu0
        %v2437 = vpop.f32.mrb[0].mxu0
        %v2438 = vadd.f32 0.0, %v2437
        %v2439 = vpop.f32.mrb[0].mxu0
        %2440 = vmatprep.mubr.bf16.mxu0 0
        %2441 = vmatmul.mubr.bf16.gmra.mrb[0].mxu0 %v2387
        %v2442 = vpop.f32.mrb[0].mxu0
        %v2443 = vadd.f32 0.0, %v2442
        %v2444 = vpop.f32.mrb[0].mxu0
        %v2445 = vpop.f32.mrb[0].mxu0
        %v2446 = vadd.f32 0.0, %v2445
        %v2447 = vpop.f32.mrb[0].mxu0
        %2448 = vmatprep.mubr.bf16.mxu0 0
        %2449 = vmatmul.mubr.bf16.gmra.mrb[0].mxu0 %v2390
        %v2450 = vpop.f32.mrb[0].mxu0
        %v2451 = vadd.f32 0.0, %v2450
        %v2452 = vpop.f32.mrb[0].mxu0
        %v2453 = vpop.f32.mrb[0].mxu0
        %v2454 = vadd.f32 0.0, %v2453
        %v2455 = vpop.f32.mrb[0].mxu0
        %2456 = vdwg.mxu0
        %v2457 = vrcp.pop %v2225
        %v2458 = vrcp.pop %v2228
        %v2459 = vrcp.pop %v2231
        %v2460 = vrcp.pop %v2234
        %v2461 = vrcp.pop %v2237
        %v2462 = vrcp.pop %v2240
        %v2463 = vrcp.pop %v2243
        %v2464 = vrcp.pop %v2246
        %v2465 = vrcp.pop %v2249
        %v2466 = vrcp.pop %v2252
        %v2467 = vrcp.pop %v2255
        %v2468 = vrcp.pop %v2258
        %v2469 = vrcp.pop %v2261
        %v2470 = vrcp.pop %v2264
        %v2471 = vrcp.pop %v2267
        %v2472 = vrcp.pop %v2270
        %v2473 = vmul.f32 %v2338, %v2457
        %v2474 = vmul.f32 %v2341, %v2458
        %v2475 = vmul.f32 %v2346, %v2459
        %v2476 = vmul.f32 %v2349, %v2460
        %v2477 = vmul.f32 %v2354, %v2461
        %v2478 = vmul.f32 %v2357, %v2462
        %v2479 = vmul.f32 %v2362, %v2463
        %v2480 = vmul.f32 %v2365, %v2464
        %v2481 = vmul.f32 %v2427, %v2465
        %v2482 = vmul.f32 %v2430, %v2466
        %v2483 = vmul.f32 %v2435, %v2467
        %v2484 = vmul.f32 %v2438, %v2468
        %v2485 = vmul.f32 %v2443, %v2469
        %v2486 = vmul.f32 %v2446, %v2470
        %v2487 = vmul.f32 %v2451, %v2471
        %v2488 = vmul.f32 %v2454, %v2472
        %2489 = vrot.lane.b32.xlu0 %v779, 32
        %v2490 = vpop.permute.xlu0 %2489
        %2491 = vrot.lane.b32.xlu0 %v780, 32
        %v2492 = vpop.permute.xlu0 %2491
        %2493 = vrot.lane.b32.xlu0 %v781, 32
        %v2494 = vpop.permute.xlu0 %2493
        %2495 = vrot.lane.b32.xlu0 %v782, 32
        %v2496 = vpop.permute.xlu0 %2495
        %2497 = vrot.lane.b32.xlu0 %v787, 32
        %v2498 = vpop.permute.xlu0 %2497
        %2499 = vrot.lane.b32.xlu0 %v788, 32
        %v2500 = vpop.permute.xlu0 %2499
        %2501 = vrot.lane.b32.xlu0 %v789, 32
        %v2502 = vpop.permute.xlu0 %2501
        %2503 = vrot.lane.b32.xlu0 %v790, 32
        %v2504 = vpop.permute.xlu0 %2503
        %v2506 = vsel %vm803, %v2490, 0
        %v2509 = vsel %vm803, %v2492, 0
        %v2512 = vsel %vm803, %v2494, 0
        %v2515 = vsel %vm803, %v2496, 0
        %v2518 = vsel %vm803, %v2498, 0
        %v2521 = vsel %vm803, %v2500, 0
        %v2524 = vsel %vm803, %v2502, 0
        %v2527 = vsel %vm803, %v2504, 0
        %2529 = vmatprep.subr.bf16.mxu0 0
        %2530 = vmatpush1.bf16.xpose.msra.mxu0 %v2518
        %2531 = vmatprep.subr.bf16.mxu0 0
        %2532 = vmatpush1.bf16.xpose.msra.mxu0 %v2521
        %2533 = vmatprep.subr.bf16.mxu0 0
        %2534 = vmatpush1.bf16.xpose.msra.mxu0 %v2524
        %2535 = vmatprep.subr.bf16.mxu0 0
        %2536 = vmatpush1.bf16.xpose.msra.mxu0 %v2527
        %2537 = vmatprep.subr.bf16.mxu0 0
        %2538 = vmatpush1.bf16.xpose.msra.mxu0 0
        %2539 = vmatprep.subr.bf16.mxu0 0
        %2540 = vmatpush1.bf16.xpose.msra.mxu0 0
        %2541 = vmatprep.subr.bf16.mxu0 0
        %2542 = vmatpush1.bf16.xpose.msra.mxu0 0
        %2543 = vmatprep.subr.bf16.mxu0 0
        %2544 = vmatpush1.bf16.xpose.msra.mxu0 0
        %2545 = vmatprep.subr.bf16.mxu0 0
        %2546 = vmatpush1.bf16.xpose.msra.mxu0 0
        %2547 = vmatprep.subr.bf16.mxu0 0
        %2548 = vmatpush1.bf16.xpose.msra.mxu0 0
        %2549 = vmatprep.subr.bf16.mxu0 0
        %2550 = vmatpush1.bf16.xpose.msra.mxu0 0
        %2551 = vmatprep.subr.bf16.mxu0 0
        %2552 = vmatpush1.bf16.xpose.msra.mxu0 0
        %2553 = vmatprep.subr.bf16.mxu0 0
        %2554 = vmatpush1.bf16.xpose.msra.mxu0 0
        %2555 = vmatprep.subr.bf16.mxu0 0
        %2556 = vmatpush1.bf16.xpose.msra.mxu0 0
        %2557 = vmatprep.subr.bf16.mxu0 0
        %2558 = vmatpush1.bf16.xpose.msra.mxu0 0
        %2559 = vmatprep.subr.bf16.mxu0 0
        %2560 = vmatpush1.bf16.xpose.msra.mxu0 0
        %2561 = vmatprep.mubr.bf16.mxu0 0
        %2562 = vmatmul.mubr.bf16.gmra.mrb[0].mxu0 %v2506
        %v2563 = vpop.f32.mrb[0].mxu0
        %v2564 = vadd.f32 %v771, %v2563
        %v2565 = vpop.f32.mrb[0].mxu0
        %v2566 = vpop.f32.mrb[0].mxu0
        %v2567 = vadd.f32 %v772, %v2566
        %v2568 = vpop.f32.mrb[0].mxu0
        %2569 = vmatprep.mubr.bf16.mxu0 0
        %2570 = vmatmul.mubr.bf16.gmra.mrb[0].mxu0 %v2509
        %v2571 = vpop.f32.mrb[0].mxu0
        %v2572 = vadd.f32 %v773, %v2571
        %v2573 = vpop.f32.mrb[0].mxu0
        %v2574 = vpop.f32.mrb[0].mxu0
        %v2575 = vadd.f32 %v774, %v2574
        %v2576 = vpop.f32.mrb[0].mxu0
        %2577 = vmatprep.mubr.bf16.mxu0 0
        %2578 = vmatmul.mubr.bf16.gmra.mrb[0].mxu0 %v2512
        %v2579 = vpop.f32.mrb[0].mxu0
        %v2580 = vadd.f32 %v775, %v2579
        %v2581 = vpop.f32.mrb[0].mxu0
        %v2582 = vpop.f32.mrb[0].mxu0
        %v2583 = vadd.f32 %v776, %v2582
        %v2584 = vpop.f32.mrb[0].mxu0
        %2585 = vmatprep.mubr.bf16.mxu0 0
        %2586 = vmatmul.mubr.bf16.gmra.mrb[0].mxu0 %v2515
        %v2587 = vpop.f32.mrb[0].mxu0
        %v2588 = vadd.f32 %v777, %v2587
        %v2589 = vpop.f32.mrb[0].mxu0
        %v2590 = vpop.f32.mrb[0].mxu0
        %v2591 = vadd.f32 %v778, %v2590
        %v2592 = vpop.f32.mrb[0].mxu0
        %2593 = vdwg.mxu0
        %2594 = vrot.lane.b32.xlu0 %v783, 32
        %v2595 = vpop.permute.xlu0 %2594
        %2596 = vrot.lane.b32.xlu0 %v784, 32
        %v2597 = vpop.permute.xlu0 %2596
        %2598 = vrot.lane.b32.xlu0 %v785, 32
        %v2599 = vpop.permute.xlu0 %2598
        %2600 = vrot.lane.b32.xlu0 %v786, 32
        %v2601 = vpop.permute.xlu0 %2600
        %2602 = vrot.lane.b32.xlu0 %v791, 32
        %v2603 = vpop.permute.xlu0 %2602
        %2604 = vrot.lane.b32.xlu0 %v792, 32
        %v2605 = vpop.permute.xlu0 %2604
        %2606 = vrot.lane.b32.xlu0 %v793, 32
        %v2607 = vpop.permute.xlu0 %2606
        %2608 = vrot.lane.b32.xlu0 %v794, 32
        %v2609 = vpop.permute.xlu0 %2608
        %v2611 = vsel %vm803, %v2595, 0
        %v2614 = vsel %vm803, %v2597, 0
        %v2617 = vsel %vm803, %v2599, 0
        %v2620 = vsel %vm803, %v2601, 0
        %v2623 = vsel %vm803, %v2603, 0
        %v2626 = vsel %vm803, %v2605, 0
        %v2629 = vsel %vm803, %v2607, 0
        %v2632 = vsel %vm803, %v2609, 0
        %2634 = vmatprep.subr.bf16.mxu0 0
        %2635 = vmatpush1.bf16.xpose.msra.mxu0 %v2623
        %2636 = vmatprep.subr.bf16.mxu0 0
        %2637 = vmatpush1.bf16.xpose.msra.mxu0 %v2626
        %2638 = vmatprep.subr.bf16.mxu0 0
        %2639 = vmatpush1.bf16.xpose.msra.mxu0 %v2629
        %2640 = vmatprep.subr.bf16.mxu0 0
        %2641 = vmatpush1.bf16.xpose.msra.mxu0 %v2632
        %2642 = vmatprep.subr.bf16.mxu0 0
        %2643 = vmatpush1.bf16.xpose.msra.mxu0 0
        %2644 = vmatprep.subr.bf16.mxu0 0
        %2645 = vmatpush1.bf16.xpose.msra.mxu0 0
        %2646 = vmatprep.subr.bf16.mxu0 0
        %2647 = vmatpush1.bf16.xpose.msra.mxu0 0
        %2648 = vmatprep.subr.bf16.mxu0 0
        %2649 = vmatpush1.bf16.xpose.msra.mxu0 0
        %2650 = vmatprep.subr.bf16.mxu0 0
        %2651 = vmatpush1.bf16.xpose.msra.mxu0 0
        %2652 = vmatprep.subr.bf16.mxu0 0
        %2653 = vmatpush1.bf16.xpose.msra.mxu0 0
        %2654 = vmatprep.subr.bf16.mxu0 0
        %2655 = vmatpush1.bf16.xpose.msra.mxu0 0
        %2656 = vmatprep.subr.bf16.mxu0 0
        %2657 = vmatpush1.bf16.xpose.msra.mxu0 0
        %2658 = vmatprep.subr.bf16.mxu0 0
        %2659 = vmatpush1.bf16.xpose.msra.mxu0 0
        %2660 = vmatprep.subr.bf16.mxu0 0
        %2661 = vmatpush1.bf16.xpose.msra.mxu0 0
        %2662 = vmatprep.subr.bf16.mxu0 0
        %2663 = vmatpush1.bf16.xpose.msra.mxu0 0
        %2664 = vmatprep.subr.bf16.mxu0 0
        %2665 = vmatpush1.bf16.xpose.msra.mxu0 0
        %2666 = vmatprep.mubr.bf16.mxu0 0
        %2667 = vmatmul.mubr.bf16.gmra.mrb[0].mxu0 %v2611
        %v2668 = vpop.f32.mrb[0].mxu0
        %v2669 = vadd.f32 %v771, %v2668
        %v2670 = vpop.f32.mrb[0].mxu0
        %v2671 = vpop.f32.mrb[0].mxu0
        %v2672 = vadd.f32 %v772, %v2671
        %v2673 = vpop.f32.mrb[0].mxu0
        %2674 = vmatprep.mubr.bf16.mxu0 0
        %2675 = vmatmul.mubr.bf16.gmra.mrb[0].mxu0 %v2614
        %v2676 = vpop.f32.mrb[0].mxu0
        %v2677 = vadd.f32 %v773, %v2676
        %v2678 = vpop.f32.mrb[0].mxu0
        %v2679 = vpop.f32.mrb[0].mxu0
        %v2680 = vadd.f32 %v774, %v2679
        %v2681 = vpop.f32.mrb[0].mxu0
        %2682 = vmatprep.mubr.bf16.mxu0 0
        %2683 = vmatmul.mubr.bf16.gmra.mrb[0].mxu0 %v2617
        %v2684 = vpop.f32.mrb[0].mxu0
        %v2685 = vadd.f32 %v775, %v2684
        %v2686 = vpop.f32.mrb[0].mxu0
        %v2687 = vpop.f32.mrb[0].mxu0
        %v2688 = vadd.f32 %v776, %v2687
        %v2689 = vpop.f32.mrb[0].mxu0
        %2690 = vmatprep.mubr.bf16.mxu0 0
        %2691 = vmatmul.mubr.bf16.gmra.mrb[0].mxu0 %v2620
        %v2692 = vpop.f32.mrb[0].mxu0
        %v2693 = vadd.f32 %v777, %v2692
        %v2694 = vpop.f32.mrb[0].mxu0
        %v2695 = vpop.f32.mrb[0].mxu0
        %v2696 = vadd.f32 %v778, %v2695
        %v2697 = vpop.f32.mrb[0].mxu0
        %2698 = vdwg.mxu0
        %v2699 = vsel %vm982, %v2564, -inf
        %2700 = vmax.xlane.f32.xlu0 %v2699
        %v2701 = vpop.xlane.xlu0 %2700
        %v2702 = vsel %vm982, %v2567, -inf
        %2703 = vmax.xlane.f32.xlu0 %v2702
        %v2704 = vpop.xlane.xlu0 %2703
        %v2705 = vsel %vm982, %v2572, -inf
        %2706 = vmax.xlane.f32.xlu0 %v2705
        %v2707 = vpop.xlane.xlu0 %2706
        %v2708 = vsel %vm982, %v2575, -inf
        %2709 = vmax.xlane.f32.xlu0 %v2708
        %v2710 = vpop.xlane.xlu0 %2709
        %v2711 = vsel %vm982, %v2580, -inf
        %2712 = vmax.xlane.f32.xlu0 %v2711
        %v2713 = vpop.xlane.xlu0 %2712
        %v2714 = vsel %vm982, %v2583, -inf
        %2715 = vmax.xlane.f32.xlu0 %v2714
        %v2716 = vpop.xlane.xlu0 %2715
        %v2717 = vsel %vm982, %v2588, -inf
        %2718 = vmax.xlane.f32.xlu0 %v2717
        %v2719 = vpop.xlane.xlu0 %2718
        %v2720 = vsel %vm982, %v2591, -inf
        %2721 = vmax.xlane.f32.xlu0 %v2720
        %v2722 = vpop.xlane.xlu0 %2721
        %v2723 = vsel %vm982, %v2669, -inf
        %2724 = vmax.xlane.f32.xlu0 %v2723
        %v2725 = vpop.xlane.xlu0 %2724
        %v2726 = vsel %vm982, %v2672, -inf
        %2727 = vmax.xlane.f32.xlu0 %v2726
        %v2728 = vpop.xlane.xlu0 %2727
        %v2729 = vsel %vm982, %v2677, -inf
        %2730 = vmax.xlane.f32.xlu0 %v2729
        %v2731 = vpop.xlane.xlu0 %2730
        %v2732 = vsel %vm982, %v2680, -inf
        %2733 = vmax.xlane.f32.xlu0 %v2732
        %v2734 = vpop.xlane.xlu0 %2733
        %v2735 = vsel %vm982, %v2685, -inf
        %2736 = vmax.xlane.f32.xlu0 %v2735
        %v2737 = vpop.xlane.xlu0 %2736
        %v2738 = vsel %vm982, %v2688, -inf
        %2739 = vmax.xlane.f32.xlu0 %v2738
        %v2740 = vpop.xlane.xlu0 %2739
        %v2741 = vsel %vm982, %v2693, -inf
        %2742 = vmax.xlane.f32.xlu0 %v2741
        %v2743 = vpop.xlane.xlu0 %2742
        %v2744 = vsel %vm982, %v2696, -inf
        %2745 = vmax.xlane.f32.xlu0 %v2744
        %v2746 = vpop.xlane.xlu0 %2745
        %v2747 = vsub.f32 %v2564, %v2701
        %v2748 = vsub.f32 %v2567, %v2704
        %v2749 = vsub.f32 %v2572, %v2707
        %v2750 = vsub.f32 %v2575, %v2710
        %v2751 = vsub.f32 %v2580, %v2713
        %v2752 = vsub.f32 %v2583, %v2716
        %v2753 = vsub.f32 %v2588, %v2719
        %v2754 = vsub.f32 %v2591, %v2722
        %v2755 = vsub.f32 %v2669, %v2725
        %v2756 = vsub.f32 %v2672, %v2728
        %v2757 = vsub.f32 %v2677, %v2731
        %v2758 = vsub.f32 %v2680, %v2734
        %v2759 = vsub.f32 %v2685, %v2737
        %v2760 = vsub.f32 %v2688, %v2740
        %v2761 = vsub.f32 %v2693, %v2743
        %v2762 = vsub.f32 %v2696, %v2746
        %v2763 = vmul.f32 %v2747, 1.442695
        %v2764 = vpow.pop %v2763
        %v2765 = vmul.f32 %v2748, 1.442695
        %v2766 = vpow.pop %v2765
        %v2767 = vmul.f32 %v2749, 1.442695
        %v2768 = vpow.pop %v2767
        %v2769 = vmul.f32 %v2750, 1.442695
        %v2770 = vpow.pop %v2769
        %v2771 = vmul.f32 %v2751, 1.442695
        %v2772 = vpow.pop %v2771
        %v2773 = vmul.f32 %v2752, 1.442695
        %v2774 = vpow.pop %v2773
        %v2775 = vmul.f32 %v2753, 1.442695
        %v2776 = vpow.pop %v2775
        %v2777 = vmul.f32 %v2754, 1.442695
        %v2778 = vpow.pop %v2777
        %v2779 = vmul.f32 %v2755, 1.442695
        %v2780 = vpow.pop %v2779
        %v2781 = vmul.f32 %v2756, 1.442695
        %v2782 = vpow.pop %v2781
        %v2783 = vmul.f32 %v2757, 1.442695
        %v2784 = vpow.pop %v2783
        %v2785 = vmul.f32 %v2758, 1.442695
        %v2786 = vpow.pop %v2785
        %v2787 = vmul.f32 %v2759, 1.442695
        %v2788 = vpow.pop %v2787
        %v2789 = vmul.f32 %v2760, 1.442695
        %v2790 = vpow.pop %v2789
        %v2791 = vmul.f32 %v2761, 1.442695
        %v2792 = vpow.pop %v2791
        %v2793 = vmul.f32 %v2762, 1.442695
        %v2794 = vpow.pop %v2793
        %v2795 = vsel %vm982, %v2764, 0.0
        %2796 = vadd.xlane.f32.xlu0 %v2795
        %v2797 = vpop.xlane.xlu0 %2796
        %v2798 = vsel %vm982, %v2766, 0.0
        %2799 = vadd.xlane.f32.xlu0 %v2798
        %v2800 = vpop.xlane.xlu0 %2799
        %v2801 = vsel %vm982, %v2768, 0.0
        %2802 = vadd.xlane.f32.xlu0 %v2801
        %v2803 = vpop.xlane.xlu0 %2802
        %v2804 = vsel %vm982, %v2770, 0.0
        %2805 = vadd.xlane.f32.xlu0 %v2804
        %v2806 = vpop.xlane.xlu0 %2805
        %v2807 = vsel %vm982, %v2772, 0.0
        %2808 = vadd.xlane.f32.xlu0 %v2807
        %v2809 = vpop.xlane.xlu0 %2808
        %v2810 = vsel %vm982, %v2774, 0.0
        %2811 = vadd.xlane.f32.xlu0 %v2810
        %v2812 = vpop.xlane.xlu0 %2811
        %v2813 = vsel %vm982, %v2776, 0.0
        %2814 = vadd.xlane.f32.xlu0 %v2813
        %v2815 = vpop.xlane.xlu0 %2814
        %v2816 = vsel %vm982, %v2778, 0.0
        %2817 = vadd.xlane.f32.xlu0 %v2816
        %v2818 = vpop.xlane.xlu0 %2817
        %v2819 = vsel %vm982, %v2780, 0.0
        %2820 = vadd.xlane.f32.xlu0 %v2819
        %v2821 = vpop.xlane.xlu0 %2820
        %v2822 = vsel %vm982, %v2782, 0.0
        %2823 = vadd.xlane.f32.xlu0 %v2822
        %v2824 = vpop.xlane.xlu0 %2823
        %v2825 = vsel %vm982, %v2784, 0.0
        %2826 = vadd.xlane.f32.xlu0 %v2825
        %v2827 = vpop.xlane.xlu0 %2826
        %v2828 = vsel %vm982, %v2786, 0.0
        %2829 = vadd.xlane.f32.xlu0 %v2828
        %v2830 = vpop.xlane.xlu0 %2829
        %v2831 = vsel %vm982, %v2788, 0.0
        %2832 = vadd.xlane.f32.xlu0 %v2831
        %v2833 = vpop.xlane.xlu0 %2832
        %v2834 = vsel %vm982, %v2790, 0.0
        %2835 = vadd.xlane.f32.xlu0 %v2834
        %v2836 = vpop.xlane.xlu0 %2835
        %v2837 = vsel %vm982, %v2792, 0.0
        %2838 = vadd.xlane.f32.xlu0 %v2837
        %v2839 = vpop.xlane.xlu0 %2838
        %v2840 = vsel %vm982, %v2794, 0.0
        %2841 = vadd.xlane.f32.xlu0 %v2840
        %v2842 = vpop.xlane.xlu0 %2841
        %v2843 = vpack.c.bf16 %v2766, %v2764
        %v2844 = vpack.c.bf16 %v2770, %v2768
        %v2845 = vpack.c.bf16 %v2774, %v2772
        %v2846 = vpack.c.bf16 %v2778, %v2776
        %v2847 = vpack.c.bf16 %v2782, %v2780
        %v2848 = vpack.c.bf16 %v2786, %v2784
        %v2849 = vpack.c.bf16 %v2790, %v2788
        %v2850 = vpack.c.bf16 %v2794, %v2792
        %2851 = vrot.lane.b32.xlu0 %v795, 32
        %v2852 = vpop.permute.xlu0 %2851
        %2853 = vrot.lane.b32.xlu0 %v796, 32
        %v2854 = vpop.permute.xlu0 %2853
        %2855 = vrot.lane.b32.xlu0 %v797, 32
        %v2856 = vpop.permute.xlu0 %2855
        %2857 = vrot.lane.b32.xlu0 %v798, 32
        %v2858 = vpop.permute.xlu0 %2857
        %v2864 = vsel %vm982, %v2843, 0
        %v2867 = vsel %vm982, %v2844, 0
        %v2870 = vsel %vm982, %v2845, 0
        %v2873 = vsel %vm982, %v2846, 0
        %2875 = vmatprep.subr.bf16.mxu0 0
        %2876 = vmatpush1.bf16.msra.mxu0 %v2852
        %2877 = vmatprep.subr.bf16.mxu0 0
        %2878 = vmatpush1.bf16.msra.mxu0 %v2854
        %2879 = vmatprep.subr.bf16.mxu0 0
        %2880 = vmatpush1.bf16.msra.mxu0 %v2856
        %2881 = vmatprep.subr.bf16.mxu0 0
        %2882 = vmatpush1.bf16.msra.mxu0 %v2858
        %2883 = vmatprep.subr.bf16.mxu0 0
        %2884 = vmatpush1.bf16.msra.mxu0 0
        %2885 = vmatprep.subr.bf16.mxu0 0
        %2886 = vmatpush1.bf16.msra.mxu0 0
        %2887 = vmatprep.subr.bf16.mxu0 0
        %2888 = vmatpush1.bf16.msra.mxu0 0
        %2889 = vmatprep.subr.bf16.mxu0 0
        %2890 = vmatpush1.bf16.msra.mxu0 0
        %2891 = vmatprep.subr.bf16.mxu0 0
        %2892 = vmatpush1.bf16.msra.mxu0 0
        %2893 = vmatprep.subr.bf16.mxu0 0
        %2894 = vmatpush1.bf16.msra.mxu0 0
        %2895 = vmatprep.subr.bf16.mxu0 0
        %2896 = vmatpush1.bf16.msra.mxu0 0
        %2897 = vmatprep.subr.bf16.mxu0 0
        %2898 = vmatpush1.bf16.msra.mxu0 0
        %2899 = vmatprep.subr.bf16.mxu0 0
        %2900 = vmatpush1.bf16.msra.mxu0 0
        %2901 = vmatprep.subr.bf16.mxu0 0
        %2902 = vmatpush1.bf16.msra.mxu0 0
        %2903 = vmatprep.subr.bf16.mxu0 0
        %2904 = vmatpush1.bf16.msra.mxu0 0
        %2905 = vmatprep.subr.bf16.mxu0 0
        %2906 = vmatpush1.bf16.msra.mxu0 0
        %2907 = vmatprep.mubr.bf16.mxu0 0
        %2908 = vmatmul.mubr.bf16.gmra.mrb[0].mxu0 %v2864
        %v2909 = vpop.f32.mrb[0].mxu0
        %v2910 = vadd.f32 0.0, %v2909
        %v2911 = vpop.f32.mrb[0].mxu0
        %v2912 = vpop.f32.mrb[0].mxu0
        %v2913 = vadd.f32 0.0, %v2912
        %v2914 = vpop.f32.mrb[0].mxu0
        %2915 = vmatprep.mubr.bf16.mxu0 0
        %2916 = vmatmul.mubr.bf16.gmra.mrb[0].mxu0 %v2867
        %v2917 = vpop.f32.mrb[0].mxu0
        %v2918 = vadd.f32 0.0, %v2917
        %v2919 = vpop.f32.mrb[0].mxu0
        %v2920 = vpop.f32.mrb[0].mxu0
        %v2921 = vadd.f32 0.0, %v2920
        %v2922 = vpop.f32.mrb[0].mxu0
        %2923 = vmatprep.mubr.bf16.mxu0 0
        %2924 = vmatmul.mubr.bf16.gmra.mrb[0].mxu0 %v2870
        %v2925 = vpop.f32.mrb[0].mxu0
        %v2926 = vadd.f32 0.0, %v2925
        %v2927 = vpop.f32.mrb[0].mxu0
        %v2928 = vpop.f32.mrb[0].mxu0
        %v2929 = vadd.f32 0.0, %v2928
        %v2930 = vpop.f32.mrb[0].mxu0
        %2931 = vmatprep.mubr.bf16.mxu0 0
        %2932 = vmatmul.mubr.bf16.gmra.mrb[0].mxu0 %v2873
        %v2933 = vpop.f32.mrb[0].mxu0
        %v2934 = vadd.f32 0.0, %v2933
        %v2935 = vpop.f32.mrb[0].mxu0
        %v2936 = vpop.f32.mrb[0].mxu0
        %v2937 = vadd.f32 0.0, %v2936
        %v2938 = vpop.f32.mrb[0].mxu0
        %2939 = vdwg.mxu0
        %2940 = vrot.lane.b32.xlu0 %v799, 32
        %v2941 = vpop.permute.xlu0 %2940
        %2942 = vrot.lane.b32.xlu0 %v800, 32
        %v2943 = vpop.permute.xlu0 %2942
        %2944 = vrot.lane.b32.xlu0 %v801, 32
        %v2945 = vpop.permute.xlu0 %2944
        %2946 = vrot.lane.b32.xlu0 %v802, 32
        %v2947 = vpop.permute.xlu0 %2946
        %v2953 = vsel %vm982, %v2847, 0
        %v2956 = vsel %vm982, %v2848, 0
        %v2959 = vsel %vm982, %v2849, 0
        %v2962 = vsel %vm982, %v2850, 0
        %2964 = vmatprep.subr.bf16.mxu0 0
        %2965 = vmatpush1.bf16.msra.mxu0 %v2941
        %2966 = vmatprep.subr.bf16.mxu0 0
        %2967 = vmatpush1.bf16.msra.mxu0 %v2943
        %2968 = vmatprep.subr.bf16.mxu0 0
        %2969 = vmatpush1.bf16.msra.mxu0 %v2945
        %2970 = vmatprep.subr.bf16.mxu0 0
        %2971 = vmatpush1.bf16.msra.mxu0 %v2947
        %2972 = vmatprep.subr.bf16.mxu0 0
        %2973 = vmatpush1.bf16.msra.mxu0 0
        %2974 = vmatprep.subr.bf16.mxu0 0
        %2975 = vmatpush1.bf16.msra.mxu0 0
        %2976 = vmatprep.subr.bf16.mxu0 0
        %2977 = vmatpush1.bf16.msra.mxu0 0
        %2978 = vmatprep.subr.bf16.mxu0 0
        %2979 = vmatpush1.bf16.msra.mxu0 0
        %2980 = vmatprep.subr.bf16.mxu0 0
        %2981 = vmatpush1.bf16.msra.mxu0 0
        %2982 = vmatprep.subr.bf16.mxu0 0
        %2983 = vmatpush1.bf16.msra.mxu0 0
        %2984 = vmatprep.subr.bf16.mxu0 0
        %2985 = vmatpush1.bf16.msra.mxu0 0
        %2986 = vmatprep.subr.bf16.mxu0 0
        %2987 = vmatpush1.bf16.msra.mxu0 0
        %2988 = vmatprep.subr.bf16.mxu0 0
        %2989 = vmatpush1.bf16.msra.mxu0 0
        %2990 = vmatprep.subr.bf16.mxu0 0
        %2991 = vmatpush1.bf16.msra.mxu0 0
        %2992 = vmatprep.subr.bf16.mxu0 0
        %2993 = vmatpush1.bf16.msra.mxu0 0
        %2994 = vmatprep.subr.bf16.mxu0 0
        %2995 = vmatpush1.bf16.msra.mxu0 0
        %2996 = vmatprep.mubr.bf16.mxu0 0
        %2997 = vmatmul.mubr.bf16.gmra.mrb[0].mxu0 %v2953
        %v2998 = vpop.f32.mrb[0].mxu0
        %v2999 = vadd.f32 0.0, %v2998
        %v3000 = vpop.f32.mrb[0].mxu0
        %v3001 = vpop.f32.mrb[0].mxu0
        %v3002 = vadd.f32 0.0, %v3001
        %v3003 = vpop.f32.mrb[0].mxu0
        %3004 = vmatprep.mubr.bf16.mxu0 0
        %3005 = vmatmul.mubr.bf16.gmra.mrb[0].mxu0 %v2956
        %v3006 = vpop.f32.mrb[0].mxu0
        %v3007 = vadd.f32 0.0, %v3006
        %v3008 = vpop.f32.mrb[0].mxu0
        %v3009 = vpop.f32.mrb[0].mxu0
        %v3010 = vadd.f32 0.0, %v3009
        %v3011 = vpop.f32.mrb[0].mxu0
        %3012 = vmatprep.mubr.bf16.mxu0 0
        %3013 = vmatmul.mubr.bf16.gmra.mrb[0].mxu0 %v2959
        %v3014 = vpop.f32.mrb[0].mxu0
        %v3015 = vadd.f32 0.0, %v3014
        %v3016 = vpop.f32.mrb[0].mxu0
        %v3017 = vpop.f32.mrb[0].mxu0
        %v3018 = vadd.f32 0.0, %v3017
        %v3019 = vpop.f32.mrb[0].mxu0
        %3020 = vmatprep.mubr.bf16.mxu0 0
        %3021 = vmatmul.mubr.bf16.gmra.mrb[0].mxu0 %v2962
        %v3022 = vpop.f32.mrb[0].mxu0
        %v3023 = vadd.f32 0.0, %v3022
        %v3024 = vpop.f32.mrb[0].mxu0
        %v3025 = vpop.f32.mrb[0].mxu0
        %v3026 = vadd.f32 0.0, %v3025
        %v3027 = vpop.f32.mrb[0].mxu0
        %3028 = vdwg.mxu0
        %v3029 = vrcp.pop %v2797
        %v3030 = vrcp.pop %v2800
        %v3031 = vrcp.pop %v2803
        %v3032 = vrcp.pop %v2806
        %v3033 = vrcp.pop %v2809
        %v3034 = vrcp.pop %v2812
        %v3035 = vrcp.pop %v2815
        %v3036 = vrcp.pop %v2818
        %v3037 = vrcp.pop %v2821
        %v3038 = vrcp.pop %v2824
        %v3039 = vrcp.pop %v2827
        %v3040 = vrcp.pop %v2830
        %v3041 = vrcp.pop %v2833
        %v3042 = vrcp.pop %v2836
        %v3043 = vrcp.pop %v2839
        %v3044 = vrcp.pop %v2842
        %v3045 = vmul.f32 %v2910, %v3029
        %v3046 = vmul.f32 %v2913, %v3030
        %v3047 = vmul.f32 %v2918, %v3031
        %v3048 = vmul.f32 %v2921, %v3032
        %v3049 = vmul.f32 %v2926, %v3033
        %v3050 = vmul.f32 %v2929, %v3034
        %v3051 = vmul.f32 %v2934, %v3035
        %v3052 = vmul.f32 %v2937, %v3036
        %v3053 = vmul.f32 %v2999, %v3037
        %v3054 = vmul.f32 %v3002, %v3038
        %v3055 = vmul.f32 %v3007, %v3039
        %v3056 = vmul.f32 %v3010, %v3040
        %v3057 = vmul.f32 %v3015, %v3041
        %v3058 = vmul.f32 %v3018, %v3042
        %v3059 = vmul.f32 %v3023, %v3043
        %v3060 = vmul.f32 %v3026, %v3044
        %3077 = vrot.lane.b32.xlu0 %v1901, 32
        %v3078 = vpop.permute.xlu0 %3077
        %3079 = vrot.lane.b32.xlu0 %v1902, 32
        %v3080 = vpop.permute.xlu0 %3079
        %3081 = vrot.lane.b32.xlu0 %v1903, 32
        %v3082 = vpop.permute.xlu0 %3081
        %3083 = vrot.lane.b32.xlu0 %v1904, 32
        %v3084 = vpop.permute.xlu0 %3083
        %3085 = vrot.lane.b32.xlu0 %v1905, 32
        %v3086 = vpop.permute.xlu0 %3085
        %3087 = vrot.lane.b32.xlu0 %v1906, 32
        %v3088 = vpop.permute.xlu0 %3087
        %3089 = vrot.lane.b32.xlu0 %v1907, 32
        %v3090 = vpop.permute.xlu0 %3089
        %3091 = vrot.lane.b32.xlu0 %v1908, 32
        %v3092 = vpop.permute.xlu0 %3091
        %3093 = vrot.lane.b32.xlu0 %v1909, 32
        %v3094 = vpop.permute.xlu0 %3093
        %3095 = vrot.lane.b32.xlu0 %v1910, 32
        %v3096 = vpop.permute.xlu0 %3095
        %3097 = vrot.lane.b32.xlu0 %v1911, 32
        %v3098 = vpop.permute.xlu0 %3097
        %3099 = vrot.lane.b32.xlu0 %v1912, 32
        %v3100 = vpop.permute.xlu0 %3099
        %3101 = vrot.lane.b32.xlu0 %v1913, 32
        %v3102 = vpop.permute.xlu0 %3101
        %3103 = vrot.lane.b32.xlu0 %v1914, 32
        %v3104 = vpop.permute.xlu0 %3103
        %3105 = vrot.lane.b32.xlu0 %v1915, 32
        %v3106 = vpop.permute.xlu0 %3105
        %3107 = vrot.lane.b32.xlu0 %v1916, 32
        %v3108 = vpop.permute.xlu0 %3107
        %3141 = vrot.lane.b32.xlu0 %v2473, 64
        %v3142 = vpop.permute.xlu0 %3141
        %3143 = vrot.lane.b32.xlu0 %v2474, 64
        %v3144 = vpop.permute.xlu0 %3143
        %3145 = vrot.lane.b32.xlu0 %v2475, 64
        %v3146 = vpop.permute.xlu0 %3145
        %3147 = vrot.lane.b32.xlu0 %v2476, 64
        %v3148 = vpop.permute.xlu0 %3147
        %3149 = vrot.lane.b32.xlu0 %v2477, 64
        %v3150 = vpop.permute.xlu0 %3149
        %3151 = vrot.lane.b32.xlu0 %v2478, 64
        %v3152 = vpop.permute.xlu0 %3151
        %3153 = vrot.lane.b32.xlu0 %v2479, 64
        %v3154 = vpop.permute.xlu0 %3153
        %3155 = vrot.lane.b32.xlu0 %v2480, 64
        %v3156 = vpop.permute.xlu0 %3155
        %3157 = vrot.lane.b32.xlu0 %v2481, 64
        %v3158 = vpop.permute.xlu0 %3157
        %3159 = vrot.lane.b32.xlu0 %v2482, 64
        %v3160 = vpop.permute.xlu0 %3159
        %3161 = vrot.lane.b32.xlu0 %v2483, 64
        %v3162 = vpop.permute.xlu0 %3161
        %3163 = vrot.lane.b32.xlu0 %v2484, 64
        %v3164 = vpop.permute.xlu0 %3163
        %3165 = vrot.lane.b32.xlu0 %v2485, 64
        %v3166 = vpop.permute.xlu0 %3165
        %3167 = vrot.lane.b32.xlu0 %v2486, 64
        %v3168 = vpop.permute.xlu0 %3167
        %3169 = vrot.lane.b32.xlu0 %v2487, 64
        %v3170 = vpop.permute.xlu0 %3169
        %3171 = vrot.lane.b32.xlu0 %v2488, 64
        %v3172 = vpop.permute.xlu0 %3171
        %3205 = vrot.lane.b32.xlu0 %v3045, 96
        %v3206 = vpop.permute.xlu0 %3205
        %3207 = vrot.lane.b32.xlu0 %v3046, 96
        %v3208 = vpop.permute.xlu0 %3207
        %3209 = vrot.lane.b32.xlu0 %v3047, 96
        %v3210 = vpop.permute.xlu0 %3209
        %3211 = vrot.lane.b32.xlu0 %v3048, 96
        %v3212 = vpop.permute.xlu0 %3211
        %3213 = vrot.lane.b32.xlu0 %v3049, 96
        %v3214 = vpop.permute.xlu0 %3213
        %3215 = vrot.lane.b32.xlu0 %v3050, 96
        %v3216 = vpop.permute.xlu0 %3215
        %3217 = vrot.lane.b32.xlu0 %v3051, 96
        %v3218 = vpop.permute.xlu0 %3217
        %3219 = vrot.lane.b32.xlu0 %v3052, 96
        %v3220 = vpop.permute.xlu0 %3219
        %3221 = vrot.lane.b32.xlu0 %v3053, 96
        %v3222 = vpop.permute.xlu0 %3221
        %3223 = vrot.lane.b32.xlu0 %v3054, 96
        %v3224 = vpop.permute.xlu0 %3223
        %3225 = vrot.lane.b32.xlu0 %v3055, 96
        %v3226 = vpop.permute.xlu0 %3225
        %3227 = vrot.lane.b32.xlu0 %v3056, 96
        %v3228 = vpop.permute.xlu0 %3227
        %3229 = vrot.lane.b32.xlu0 %v3057, 96
        %v3230 = vpop.permute.xlu0 %3229
        %3231 = vrot.lane.b32.xlu0 %v3058, 96
        %v3232 = vpop.permute.xlu0 %3231
        %3233 = vrot.lane.b32.xlu0 %v3059, 96
        %v3234 = vpop.permute.xlu0 %3233
        %3235 = vrot.lane.b32.xlu0 %v3060, 96
        %v3236 = vpop.permute.xlu0 %3235
        %v3253 = vsel %vm803, %v1305, %v3078
        %v3254 = vsel %vm803, %v1306, %v3080
        %v3255 = vsel %vm803, %v1307, %v3082
        %v3256 = vsel %vm803, %v1308, %v3084
        %v3257 = vsel %vm803, %v1309, %v3086
        %v3258 = vsel %vm803, %v1310, %v3088
        %v3259 = vsel %vm803, %v1311, %v3090
        %v3260 = vsel %vm803, %v1312, %v3092
        %v3261 = vsel %vm803, %v1313, %v3094
        %v3262 = vsel %vm803, %v1314, %v3096
        %v3263 = vsel %vm803, %v1315, %v3098
        %v3264 = vsel %vm803, %v1316, %v3100
        %v3265 = vsel %vm803, %v1317, %v3102
        %v3266 = vsel %vm803, %v1318, %v3104
        %v3267 = vsel %vm803, %v1319, %v3106
        %v3268 = vsel %vm803, %v1320, %v3108
        %v3269 = vsel %vm982, %v3253, %v3142
        %v3270 = vsel %vm982, %v3254, %v3144
        %v3271 = vsel %vm982, %v3255, %v3146
        %v3272 = vsel %vm982, %v3256, %v3148
        %v3273 = vsel %vm982, %v3257, %v3150
        %v3274 = vsel %vm982, %v3258, %v3152
        %v3275 = vsel %vm982, %v3259, %v3154
        %v3276 = vsel %vm982, %v3260, %v3156
        %v3277 = vsel %vm982, %v3261, %v3158
        %v3278 = vsel %vm982, %v3262, %v3160
        %v3279 = vsel %vm982, %v3263, %v3162
        %v3280 = vsel %vm982, %v3264, %v3164
        %v3281 = vsel %vm982, %v3265, %v3166
        %v3282 = vsel %vm982, %v3266, %v3168
        %v3283 = vsel %vm982, %v3267, %v3170
        %v3284 = vsel %vm982, %v3268, %v3172
        %vm3285 = vcmask 785408
        %v3286 = vsel %vm3285, %v3269, %v3206
        %v3287 = vsel %vm3285, %v3270, %v3208
        %v3288 = vsel %vm3285, %v3271, %v3210
        %v3289 = vsel %vm3285, %v3272, %v3212
        %v3290 = vsel %vm3285, %v3273, %v3214
        %v3291 = vsel %vm3285, %v3274, %v3216
        %v3292 = vsel %vm3285, %v3275, %v3218
        %v3293 = vsel %vm3285, %v3276, %v3220
        %v3294 = vsel %vm3285, %v3277, %v3222
        %v3295 = vsel %vm3285, %v3278, %v3224
        %v3296 = vsel %vm3285, %v3279, %v3226
        %v3297 = vsel %vm3285, %v3280, %v3228
        %v3298 = vsel %vm3285, %v3281, %v3230
        %v3299 = vsel %vm3285, %v3282, %v3232
        %v3300 = vsel %vm3285, %v3283, %v3234
        %v3301 = vsel %vm3285, %v3284, %v3236
        %v3302 = vpack.c.bf16 %v3287, %v3286
        %v3303 = vpack.c.bf16 %v3289, %v3288
        %v3304 = vpack.c.bf16 %v3291, %v3290
        %v3305 = vpack.c.bf16 %v3293, %v3292
        %v3306 = vpack.c.bf16 %v3295, %v3294
        %v3307 = vpack.c.bf16 %v3297, %v3296
        %v3308 = vpack.c.bf16 %v3299, %v3298
        %v3309 = vpack.c.bf16 %v3301, %v3300
        %v3310 = vld [vmem:[#allocation7] sm:$0xf]
        %v3311 = vld [vmem:[#allocation7 + $0x4] sm:$0xf]
        %v3312 = vld [vmem:[#allocation7 + $0x8] sm:$0xf]
        %v3313 = vld [vmem:[#allocation7 + $0xc] sm:$0xf]
        %v3314 = vld [vmem:[#allocation7 + $0x10] sm:$0xf]
        %v3315 = vld [vmem:[#allocation7 + $0x14] sm:$0xf]
        %v3316 = vld [vmem:[#allocation7 + $0x18] sm:$0xf]
        %v3317 = vld [vmem:[#allocation7 + $0x1c] sm:$0xf]
        %v3318 = vld [vmem:[#allocation7 + $0x20] sm:$0xf]
        %v3319 = vld [vmem:[#allocation7 + $0x24] sm:$0xf]
        %v3320 = vld [vmem:[#allocation7 + $0x28] sm:$0xf]
        %v3321 = vld [vmem:[#allocation7 + $0x2c] sm:$0xf]
        %v3322 = vld [vmem:[#allocation7 + $0x30] sm:$0xf]
        %v3323 = vld [vmem:[#allocation7 + $0x34] sm:$0xf]
        %v3324 = vld [vmem:[#allocation7 + $0x38] sm:$0xf]
        %v3325 = vld [vmem:[#allocation7 + $0x3c] sm:$0xf]
        %v3326 = vld [vmem:[%s4] sm:$0x1]
        %v3328 = vlaneseq
        %v3329 = vshrl.u32 %v3328, 7
        %v3330 = vsub.s32 0, %v3329
        %v3331 = vrot.slane %v3326, %v3330
        %v3349 = vunpack.c.l.b16 %v3310
        %v3350 = vunpack.c.l.b16 %v3311
        %v3351 = vunpack.c.l.b16 %v3312
        %v3352 = vunpack.c.l.b16 %v3313
        %v3353 = vunpack.c.l.b16 %v3314
        %v3354 = vunpack.c.l.b16 %v3315
        %v3355 = vunpack.c.l.b16 %v3316
        %v3356 = vunpack.c.l.b16 %v3317
        %v3357 = vunpack.c.l.b16 %v3318
        %v3358 = vunpack.c.l.b16 %v3319
        %v3359 = vunpack.c.l.b16 %v3320
        %v3360 = vunpack.c.l.b16 %v3321
        %v3361 = vunpack.c.l.b16 %v3322
        %v3362 = vunpack.c.l.b16 %v3323
        %v3363 = vunpack.c.l.b16 %v3324
        %v3364 = vunpack.c.l.b16 %v3325
        %v3365 = vpack.c.b16 %v3350, %v3349
        %v3366 = vpack.c.b16 %v3352, %v3351
        %v3367 = vpack.c.b16 %v3354, %v3353
        %v3368 = vpack.c.b16 %v3356, %v3355
        %v3369 = vpack.c.b16 %v3358, %v3357
        %v3370 = vpack.c.b16 %v3360, %v3359
        %v3371 = vpack.c.b16 %v3362, %v3361
        %v3372 = vpack.c.b16 %v3364, %v3363
        %3381 = vmatprep.subr.bf16.mxu0 0
        %3382 = vmatpush1.bf16.msra.mxu0 %v3365
        %3383 = vmatprep.subr.bf16.mxu0 0
        %3384 = vmatpush1.bf16.msra.mxu0 %v3366
        %3385 = vmatprep.subr.bf16.mxu0 0
        %3386 = vmatpush1.bf16.msra.mxu0 %v3367
        %3387 = vmatprep.subr.bf16.mxu0 0
        %3388 = vmatpush1.bf16.msra.mxu0 %v3368
        %3389 = vmatprep.subr.bf16.mxu0 0
        %3390 = vmatpush1.bf16.msra.mxu0 %v3369
        %3391 = vmatprep.subr.bf16.mxu0 0
        %3392 = vmatpush1.bf16.msra.mxu0 %v3370
        %3393 = vmatprep.subr.bf16.mxu0 0
        %3394 = vmatpush1.bf16.msra.mxu0 %v3371
        %3395 = vmatprep.subr.bf16.mxu0 0
        %3396 = vmatpush1.bf16.msra.mxu0 %v3372
        %3397 = vmatprep.subr.bf16.mxu0 0
        %3398 = vmatpush1.bf16.msra.mxu0 0
        %3399 = vmatprep.subr.bf16.mxu0 0
        %3400 = vmatpush1.bf16.msra.mxu0 0
        %3401 = vmatprep.subr.bf16.mxu0 0
        %3402 = vmatpush1.bf16.msra.mxu0 0
        %3403 = vmatprep.subr.bf16.mxu0 0
        %3404 = vmatpush1.bf16.msra.mxu0 0
        %3405 = vmatprep.subr.bf16.mxu0 0
        %3406 = vmatpush1.bf16.msra.mxu0 0
        %3407 = vmatprep.subr.bf16.mxu0 0
        %3408 = vmatpush1.bf16.msra.mxu0 0
        %3409 = vmatprep.subr.bf16.mxu0 0
        %3410 = vmatpush1.bf16.msra.mxu0 0
        %3411 = vmatprep.subr.bf16.mxu0 0
        %3412 = vmatpush1.bf16.msra.mxu0 0
        %3413 = vmatprep.mubr.bf16.mxu0 0
        %3414 = vmatmul.mubr.bf16.gmra.mrb[0].mxu0 %v3302
        %v3415 = vpop.f32.mrb[0].mxu0
        %v3416 = vadd.f32 %v3331, %v3415
        %v3417 = vpop.f32.mrb[0].mxu0
        %v3418 = vpop.f32.mrb[0].mxu0
        %v3419 = vadd.f32 %v3331, %v3418
        %v3420 = vpop.f32.mrb[0].mxu0
        %3421 = vmatprep.mubr.bf16.mxu0 0
        %3422 = vmatmul.mubr.bf16.gmra.mrb[0].mxu0 %v3303
        %v3423 = vpop.f32.mrb[0].mxu0
        %v3424 = vadd.f32 %v3331, %v3423
        %v3425 = vpop.f32.mrb[0].mxu0
        %v3426 = vpop.f32.mrb[0].mxu0
        %v3427 = vadd.f32 %v3331, %v3426
        %v3428 = vpop.f32.mrb[0].mxu0
        %3429 = vmatprep.mubr.bf16.mxu0 0
        %3430 = vmatmul.mubr.bf16.gmra.mrb[0].mxu0 %v3304
        %v3431 = vpop.f32.mrb[0].mxu0
        %v3432 = vadd.f32 %v3331, %v3431
        %v3433 = vpop.f32.mrb[0].mxu0
        %v3434 = vpop.f32.mrb[0].mxu0
        %v3435 = vadd.f32 %v3331, %v3434
        %v3436 = vpop.f32.mrb[0].mxu0
        %3437 = vmatprep.mubr.bf16.mxu0 0
        %3438 = vmatmul.mubr.bf16.gmra.mrb[0].mxu0 %v3305
        %v3439 = vpop.f32.mrb[0].mxu0
        %v3440 = vadd.f32 %v3331, %v3439
        %v3441 = vpop.f32.mrb[0].mxu0
        %v3442 = vpop.f32.mrb[0].mxu0
        %v3443 = vadd.f32 %v3331, %v3442
        %v3444 = vpop.f32.mrb[0].mxu0
        %3445 = vmatprep.mubr.bf16.mxu0 0
        %3446 = vmatmul.mubr.bf16.gmra.mrb[0].mxu0 %v3306
        %v3447 = vpop.f32.mrb[0].mxu0
        %v3448 = vadd.f32 %v3331, %v3447
        %v3449 = vpop.f32.mrb[0].mxu0
        %v3450 = vpop.f32.mrb[0].mxu0
        %v3451 = vadd.f32 %v3331, %v3450
        %v3452 = vpop.f32.mrb[0].mxu0
        %3453 = vmatprep.mubr.bf16.mxu0 0
        %3454 = vmatmul.mubr.bf16.gmra.mrb[0].mxu0 %v3307
        %v3455 = vpop.f32.mrb[0].mxu0
        %v3456 = vadd.f32 %v3331, %v3455
        %v3457 = vpop.f32.mrb[0].mxu0
        %v3458 = vpop.f32.mrb[0].mxu0
        %v3459 = vadd.f32 %v3331, %v3458
        %v3460 = vpop.f32.mrb[0].mxu0
        %3461 = vmatprep.mubr.bf16.mxu0 0
        %3462 = vmatmul.mubr.bf16.gmra.mrb[0].mxu0 %v3308
        %v3463 = vpop.f32.mrb[0].mxu0
        %v3464 = vadd.f32 %v3331, %v3463
        %v3465 = vpop.f32.mrb[0].mxu0
        %v3466 = vpop.f32.mrb[0].mxu0
        %v3467 = vadd.f32 %v3331, %v3466
        %v3468 = vpop.f32.mrb[0].mxu0
        %3469 = vmatprep.mubr.bf16.mxu0 0
        %3470 = vmatmul.mubr.bf16.gmra.mrb[0].mxu0 %v3309
        %v3471 = vpop.f32.mrb[0].mxu0
        %v3472 = vadd.f32 %v3331, %v3471
        %v3473 = vpop.f32.mrb[0].mxu0
        %v3474 = vpop.f32.mrb[0].mxu0
        %v3475 = vadd.f32 %v3331, %v3474
        %v3476 = vpop.f32.mrb[0].mxu0
        %3477 = vdwg.mxu0
        %3478 = vst [vmem:[%s332] sm:$0xff] %v3416
        %3479 = vst [vmem:[%s332 + $0x8] sm:$0xff] %v3419
        %3480 = vst [vmem:[%s332 + $0x10] sm:$0xff] %v3424
        %3481 = vst [vmem:[%s332 + $0x18] sm:$0xff] %v3427
        %3482 = vst [vmem:[%s332 + $0x20] sm:$0xff] %v3432
        %3483 = vst [vmem:[%s332 + $0x28] sm:$0xff] %v3435
        %3484 = vst [vmem:[%s332 + $0x30] sm:$0xff] %v3440
        %3485 = vst [vmem:[%s332 + $0x38] sm:$0xff] %v3443
        %3486 = vst [vmem:[%s332 + $0x40] sm:$0xff] %v3448
        %3487 = vst [vmem:[%s332 + $0x48] sm:$0xff] %v3451
        %3488 = vst [vmem:[%s332 + $0x50] sm:$0xff] %v3456
        %3489 = vst [vmem:[%s332 + $0x58] sm:$0xff] %v3459
        %3490 = vst [vmem:[%s332 + $0x60] sm:$0xff] %v3464
        %3491 = vst [vmem:[%s332 + $0x68] sm:$0xff] %v3467
        %3492 = vst [vmem:[%s332 + $0x70] sm:$0xff] %v3472
        %3493 = vst [vmem:[%s332 + $0x78] sm:$0xff] %v3475
        %s3494 = sand.u32 %s180, 1
        %s3495 = scalar_lea.sflag [#allocation4], %s3494
        %s3496 = sand.u32 %s180, 1
        %s3497 = smul.addr %s3496, 128
        %s3498 = scalar_lea.vmem [#allocation10], %s3497
        // Predicated region
        $region61: #{tpu_custom_call.1} parent=43 // pred_check
          %p3499 = pneg %p190
        $region62: #{tpu_custom_call.1} parent=43 // pred_check_branch
          %3501 = sbr.rel (%p3499) target = $region64
        $region63: #{tpu_custom_call.1} parent=43 // pred_region
          %s3502 = smul.u32 2, %s30
          %s3504 = ssub.s32 2048, 2048
          %3505 = vsyncadd %s3495, %s3504
          %s3506 = smul.addr %s3502, 8
          %s3507 = smul.addr %s29, 32
          %s3508 = sadd.s32 %s3506, %s3507
          %s3509 = smul.addr %s3508, 128
          %s3510 = scalar_lea.hbm %s6, %s3509
          %s3511 = sshll.u32 %s3498, 4
          %s3512 = int_to_ptr.vmem [resolvable:$true] %s3511
          %3517 = dma.vmem_to_hbm [thread:$0]  %s3512, 2048, %s3510, %s3495, 128, 128, 8
        $region64: #{tpu_custom_call.1} parent=43 // pred_fallthru
          _
      $region44: #{tpu_custom_call.1} parent=5 // pred_fallthru
        _
      %p3518 = scmp.le.s32.totalorder 2, %s20
      // Predicated region
      $region65: #{tpu_custom_call.1} parent=5 // pred_check
        %p3519 = pneg %p3518
      $region66: #{tpu_custom_call.1} parent=5 // pred_check_branch
        %3521 = sbr.rel (%p3519) target = $region68
      $region67: #{tpu_custom_call.1} parent=5 // pred_region
        %s3522 = ssub.s32 %s20, 2
        // Predicated region
        $region69: #{tpu_custom_call.1} parent=67 // pred_check
          %p3523 = pneg %p196
        $region70: #{tpu_custom_call.1} parent=67 // pred_check_branch
          %3525 = sbr.rel (%p3523) target = $region72
        $region71: #{tpu_custom_call.1} parent=67 // pred_region
          %s3526 = sand.u32 %s181, 1
          %s3527 = scalar_lea.sflag [#allocation4], %s3526
          %s3528 = sand.u32 %s181, 1
          %s3529 = smul.addr %s3528, 128
          %s3530 = scalar_lea.vmem [#allocation10], %s3529
          %3531 = dma.done %s3527, 2048
        $region72: #{tpu_custom_call.1} parent=67 // pred_fallthru
          _
      $region68: #{tpu_custom_call.1} parent=5 // pred_fallthru
        _
    $region6: #{tpu_custom_call.1} parent=1 // loop_footer
      %s24 = sadd.s32 1, %s20
    $region7: #{tpu_custom_call.1} parent=1 // loop_footer_branch
      %19 = sbr.rel target = $region3
    $region8: #{tpu_custom_call.1} parent=1 // loop_exit
      _
    %3532 = vsyncpa [#allocation3], 1
    %s3533 = scalar_lea.sflag [#allocation3], 1
    %3534 = vsyncpa %s3533, 1
    %3535 = vsyncpa [#allocation6], 1
    %3536 = vsyncpa [#allocation9], 1
    %3537 = vsyncpa [#allocation4], 1
    %s3538 = scalar_lea.sflag [#allocation4], 1
    %3539 = vsyncpa %s3538, 1

</llo_original>
